<compile_context>
chip_gen: v7x
topology: tpu7x:2x2x1
jax: 0.10.0
libtpu: 0.0.40
codegen_flags: <defaults>
</compile_context>

<pallas_src>
import functools

import jax
import jax.numpy as jnp
from jax.experimental import pallas as pl
from jax.experimental.pallas import tpu as pltpu

LN_EPS = 1e-12  # DistilBERT LayerNorm eps


def _layernorm(x, g, b):
    mu = jnp.mean(x, axis=-1, keepdims=True)
    var = jnp.mean((x - mu) ** 2, axis=-1, keepdims=True)
    return (x - mu) * jax.lax.rsqrt(var + LN_EPS) * g + b


# ----------------------------------------------------------------------------
# Kernel 1: embedding LayerNorm (word_emb + pos_emb summed outside), tiled over
# token blocks so it pipelines and VMEM use is independent of B*S.
# ----------------------------------------------------------------------------
def embed_ln_kernel(x_ref, g_ref, b_ref, o_ref):
    o_ref[...] = _layernorm(
        x_ref[...].astype(jnp.float32), g_ref[...], b_ref[...]
    ).astype(o_ref.dtype)


def embed_layernorm(x2d, g, b, out_dtype=jnp.bfloat16, tm=512):
    N, H = x2d.shape
    tm = min(tm, N)
    return pl.pallas_call(
        embed_ln_kernel,
        out_shape=jax.ShapeDtypeStruct((N, H), out_dtype),
        grid_spec=pltpu.PrefetchScalarGridSpec(
            num_scalar_prefetch=0,
            grid=(pl.cdiv(N, tm),),
            in_specs=[pl.BlockSpec((tm, H), lambda i: (i, 0)),
                      pl.BlockSpec((1, H), lambda i: (0, 0)),
                      pl.BlockSpec((1, H), lambda i: (0, 0))],
            out_specs=pl.BlockSpec((tm, H), lambda i: (i, 0)),
        ),
        compiler_params=pltpu.CompilerParams(
            dimension_semantics=("parallel",)),
    )(x2d, g, b)


# ----------------------------------------------------------------------------
# Kernel 2: one full DistilBERT transformer layer
#   (MHA -> residual+LN -> FFN(GELU) -> residual+LN), one batch row per program.
# ----------------------------------------------------------------------------
def transformer_layer_kernel(x_ref, mask_ref,
                             wqkv_ref, bqkv_ref, wo_ref, bo_ref,
                             ln1g_ref, ln1b_ref,
                             w1_ref, b1_ref, w2_ref, b2_ref,
                             ln2g_ref, ln2b_ref,
                             o_ref, *, num_heads):
    _, S, H = x_ref.shape
    dH = H // num_heads
    scale = 1.0 / float(dH) ** 0.5

    x_bf = x_ref[0]                               # (S, H) bf16 — MXU operand
    x_f32 = x_bf.astype(jnp.float32)              # residual / LN path

    def linear(inp_bf, w_ref, b_ref):             # bf16 x bf16 -> f32 acc
        return (jnp.dot(inp_bf, w_ref[...],
                        preferred_element_type=jnp.float32)
                + b_ref[...].astype(jnp.float32))

    # Fused Q/K/V projection: one (S,H) x (H,3H) matmul, lane-aligned slices.
    qkv = linear(x_bf, wqkv_ref, bqkv_ref)        # (S, 3H) f32
    q = qkv[:, 0 * H:1 * H] * scale               # fold 1/sqrt(dH) into Q
    k = qkv[:, 1 * H:2 * H]
    v = qkv[:, 2 * H:3 * H]

    # head-batched layout (NH, S, dH)
    def to_heads(t_f32):
        t_bf = t_f32.astype(jnp.bfloat16)
        return jnp.stack(
            [t_bf[:, h * dH:(h + 1) * dH] for h in range(num_heads)], axis=0)

    qh, kh, vh = to_heads(q), to_heads(k), to_heads(v)

    # additive key mask: padded keys get -1e9 (matches masked_fill + softmax)
    mask_bias = (mask_ref[0].astype(jnp.float32) - 1.0) * 1e9       # (1, S)

    s = jnp.einsum('hqd,hkd->hqk', qh, kh,
                   preferred_element_type=jnp.float32) + mask_bias  # (NH,S,S)
    s = s - jnp.max(s, axis=-1, keepdims=True)
    p = jnp.exp(s)
    p = p * pl.reciprocal(jnp.sum(p, axis=-1, keepdims=True), approx=True)

    ctx = jnp.einsum('hqk,hkd->hqd', p.astype(jnp.bfloat16), vh,
                     preferred_element_type=jnp.float32)            # (NH,S,dH)
    # concatenated-heads output projection: ONE (S,H) x (H,H) matmul
    ctx_cat = jnp.concatenate([ctx[h] for h in range(num_heads)], axis=-1)
    attn = (jnp.dot(ctx_cat.astype(jnp.bfloat16), wo_ref[...],
                    preferred_element_type=jnp.float32)
            + bo_ref[...].astype(jnp.float32))

    x1 = _layernorm(x_f32 + attn, ln1g_ref[...], ln1b_ref[...])

    h1 = linear(x1.astype(jnp.bfloat16), w1_ref, b1_ref)
    # TODO(synk): DistilBERT uses exact (erf) GELU; tanh approximation kept for
    # robust Mosaic lowering (~1e-3 differences vs the PyTorch reference).
    h1 = jax.nn.gelu(h1, approximate=True)
    ffn = linear(h1.astype(jnp.bfloat16), w2_ref, b2_ref)

    y = _layernorm(x1 + ffn, ln2g_ref[...], ln2b_ref[...])
    o_ref[0] = y.astype(o_ref.dtype)


def transformer_layer(x, mask3, layer_params, num_heads):
    B, S, H = x.shape
    F = layer_params[6].shape[1]                  # w1: (H, F)
    dH = H // num_heads
    kernel = functools.partial(transformer_layer_kernel, num_heads=num_heads)

    def const_spec(p):                            # weights: resident in VMEM
        nd = p.ndim
        return pl.BlockSpec(p.shape, lambda b, _n=nd: (0,) * _n)

    in_specs = ([pl.BlockSpec((1, S, H), lambda b: (b, 0, 0)),
                 pl.BlockSpec((1, 1, S), lambda b: (b, 0, 0))]
                + [const_spec(p) for p in layer_params])

    # VMEM budget: resident bf16 weights + double-buffered activation tiles
    # + f32 intermediates (dominant: (S, 3H) qkv, (S, F) FFN hidden,
    #   (NH, S, S) scores)
    weight_bytes = sum(int(p.size) * p.dtype.itemsize for p in layer_params)
    interm_bytes = (10 * S * H + 2 * num_heads * S * S + 2 * S * F) * 4
    act_bytes = 2 * 2 * (S * H * 2 + S * 4)
    vmem_limit = int(min(max(weight_bytes + interm_bytes + act_bytes
                             + (8 << 20), 16 << 20), 48 << 20))

    flops = (2 * B * S * (4 * H * H + 2 * H * F)        # QKV, O, FFN matmuls
             + 4 * B * num_heads * S * S * dH)          # scores + context
    transcendentals = B * num_heads * S * S + B * S * F  # exp + gelu
    bytes_accessed = (weight_bytes + 2 * B * S * H * x.dtype.itemsize
                      + B * S * 4)

    return pl.pallas_call(
        kernel,
        out_shape=jax.ShapeDtypeStruct(x.shape, x.dtype),
        grid_spec=pltpu.PrefetchScalarGridSpec(
            num_scalar_prefetch=0,
            grid=(B,),
            in_specs=in_specs,
            out_specs=pl.BlockSpec((1, S, H), lambda b: (b, 0, 0)),
        ),
        compiler_params=pltpu.CompilerParams(
            dimension_semantics=("parallel",),
            vmem_limit_bytes=vmem_limit),
        input_output_aliases={0: 0},
        cost_estimate=pl.CostEstimate(
            flops=int(flops),
            transcendentals=int(transcendentals),
            bytes_accessed=int(bytes_accessed)),
    )(x, mask3, *layer_params)


# ----------------------------------------------------------------------------
# Parameter init (deterministic, synthetic — shapes follow DistilBERT structure)
# Matmul weights in bf16 (MXU operands); biases / LN params / embeddings in f32.
# Q/K/V weights are pre-fused into a single (H, 3H) matrix.
# ----------------------------------------------------------------------------
def init_params(key, vocab, max_pos, H, F, n_layers):
    n_rand = 2 + 4 * n_layers
    keys = iter(jax.random.split(key, n_rand))

    def nrm(shape, dtype, scale=0.02):
        return (scale * jax.random.normal(next(keys), shape)).astype(dtype)

    word_emb = nrm((vocab, H), jnp.float32)
    pos_emb = nrm((max_pos, H), jnp.float32)
    emb_g = jnp.ones((1, H), jnp.float32)
    emb_b = jnp.zeros((1, H), jnp.float32)

    layers = []
    for _ in range(n_layers):
        wqkv = nrm((H, 3 * H), jnp.bfloat16)          # fused [Wq | Wk | Wv]
        bqkv = jnp.zeros((1, 3 * H), jnp.float32)
        wo = nrm((H, H), jnp.bfloat16)
        bo = jnp.zeros((1, H), jnp.float32)
        ln1g, ln1b = jnp.ones((1, H), jnp.float32), jnp.zeros((1, H), jnp.float32)
        w1, b1 = nrm((H, F), jnp.bfloat16), jnp.zeros((1, F), jnp.float32)
        w2, b2 = nrm((F, H), jnp.bfloat16), jnp.zeros((1, H), jnp.float32)
        ln2g, ln2b = jnp.ones((1, H), jnp.float32), jnp.zeros((1, H), jnp.float32)
        layers.append((wqkv, bqkv, wo, bo, ln1g, ln1b,
                       w1, b1, w2, b2, ln2g, ln2b))
    return word_emb, pos_emb, emb_g, emb_b, layers


# ----------------------------------------------------------------------------
# Forward: embeddings -> L transformer layers -> last_hidden_state[:, 0, :]
# ----------------------------------------------------------------------------
@functools.partial(jax.jit, static_argnums=(3,))
def text_embedder_forward(input_ids, attention_mask, params, num_heads):
    # TODO(synk): DistilBertTokenizer (string -> ids) has no Pallas equivalent;
    # this forward consumes pre-tokenized int32 ids + float attention mask.
    word_emb, pos_emb, emb_g, emb_b, layers = params
    B, S = input_ids.shape
    H = word_emb.shape[1]

    # embedding gather is glue (plain JAX); LayerNorm + layers run in Pallas
    x = (word_emb[input_ids].astype(jnp.float32)
         + pos_emb[jnp.arange(S)][None, :, :].astype(jnp.float32))  # (B, S, H)
    x = embed_layernorm(x.reshape(B * S, H), emb_g, emb_b,
                        out_dtype=jnp.bfloat16).reshape(B, S, H)

    mask3 = attention_mask.astype(jnp.float32).reshape(B, 1, S)
    for lp in layers:
        x = transformer_layer(x, mask3, lp, num_heads)

    # == outputs.last_hidden_state[:, 0, :]  (CLS embedding)
    return x[:, 0, :].astype(jnp.float32)


if __name__ == "__main__":
    B, S = 2, 8                   # batch, seq (<= 77, per truncation max_length)
    H, F, NH, L = 128, 256, 4, 2  # H lane-dense (multiple of 128)
    VOCAB, MAXPOS = 100, 77

    key = jax.random.PRNGKey(0)
    k_params, k_ids = jax.random.split(key)

    params = init_params(k_params, VOCAB, MAXPOS, H, F, L)
    input_ids = jax.random.randint(k_ids, (B, S), 0, VOCAB, dtype=jnp.int32)
    # second sequence has two padding positions to exercise the attention mask
    attention_mask = jnp.ones((B, S), jnp.float32).at[1, 6:].set(0.0)

    out = text_embedder_forward(input_ids, attention_mask, params, NH)
    out = jax.block_until_ready(out)
    assert out.shape == (B, H) and out.dtype == jnp.float32
    assert bool(jnp.all(jnp.isfinite(out)))
    print("KERNEL_OK")
</pallas_src>

<mosaic_0001>
module attributes {stable_mosaic.version = 11 : i64} {
  func.func @embed_ln_kernel(%arg0: i32, %arg1: memref<16x128xf32, #tpu.memory_space<vmem>>, %arg2: memref<1x128xf32, #tpu.memory_space<vmem>>, %arg3: memref<1x128xf32, #tpu.memory_space<vmem>>, %arg4: memref<16x128xbf16, #tpu.memory_space<vmem>>) attributes {dimension_semantics = [#tpu.dimension_semantics<parallel>], iteration_bounds = array<i64: 1>, scalar_prefetch = 0 : i64, scratch_operands = 0 : i64, tpu.core_type = #tpu.core_type<tc>, window_params = [{transform_indices = @transform_0, window_bounds = array<i64: 16, 128>}, {pipeline_mode = #tpu.pipeline_mode<synchronous>, transform_indices = @transform_1, window_bounds = array<i64: 1, 128>}, {pipeline_mode = #tpu.pipeline_mode<synchronous>, transform_indices = @transform_2, window_bounds = array<i64: 1, 128>}, {transform_indices = @transform_3, window_bounds = array<i64: 16, 128>}]} {
    %c0 = arith.constant 0 : index
    %c0_0 = arith.constant 0 : index
    %0 = vector.load %arg1[%c0, %c0_0] : memref<16x128xf32, #tpu.memory_space<vmem>>, vector<16x128xf32>
    %c0_1 = arith.constant 0 : index
    %c0_2 = arith.constant 0 : index
    %1 = vector.load %arg2[%c0_1, %c0_2] : memref<1x128xf32, #tpu.memory_space<vmem>>, vector<1x128xf32>
    %c0_3 = arith.constant 0 : index
    %c0_4 = arith.constant 0 : index
    %2 = vector.load %arg3[%c0_3, %c0_4] : memref<1x128xf32, #tpu.memory_space<vmem>>, vector<1x128xf32>
    %cst = arith.constant dense<0.000000e+00> : vector<16xf32>
    %3 = vector.multi_reduction <add>, %0, %cst [1] : vector<16x128xf32> to vector<16xf32>
    %4 = vector.shape_cast %3 : vector<16xf32> to vector<16x1xf32>
    %cst_5 = arith.constant 1.280000e+02 : f32
    %5 = vector.broadcast %cst_5 : f32 to vector<16x1xf32>
    %6 = arith.divf %4, %5 : vector<16x1xf32>
    %7 = vector.broadcast %6 : vector<16x1xf32> to vector<16x128xf32>
    %8 = arith.subf %0, %7 : vector<16x128xf32>
    %9 = arith.mulf %8, %8 : vector<16x128xf32>
    %cst_6 = arith.constant dense<0.000000e+00> : vector<16xf32>
    %10 = vector.multi_reduction <add>, %9, %cst_6 [1] : vector<16x128xf32> to vector<16xf32>
    %11 = vector.shape_cast %10 : vector<16xf32> to vector<16x1xf32>
    %cst_7 = arith.constant 1.280000e+02 : f32
    %12 = vector.broadcast %cst_7 : f32 to vector<16x1xf32>
    %13 = arith.divf %11, %12 : vector<16x1xf32>
    %14 = vector.broadcast %6 : vector<16x1xf32> to vector<16x128xf32>
    %15 = arith.subf %0, %14 : vector<16x128xf32>
    %cst_8 = arith.constant 9.99999996E-13 : f32
    %16 = vector.broadcast %cst_8 : f32 to vector<16x1xf32>
    %17 = arith.addf %13, %16 : vector<16x1xf32>
    %18 = math.rsqrt %17 : vector<16x1xf32>
    %19 = vector.broadcast %18 : vector<16x1xf32> to vector<16x128xf32>
    %20 = arith.mulf %15, %19 : vector<16x128xf32>
    %21 = vector.broadcast %1 : vector<1x128xf32> to vector<16x128xf32>
    %22 = arith.mulf %20, %21 : vector<16x128xf32>
    %23 = vector.broadcast %2 : vector<1x128xf32> to vector<16x128xf32>
    %24 = arith.addf %22, %23 : vector<16x128xf32>
    %25 = arith.truncf %24 : vector<16x128xf32> to vector<16x128xbf16>
    %c0_9 = arith.constant 0 : index
    %c0_10 = arith.constant 0 : index
    %26 = vector.load %arg4[%c0_9, %c0_10] : memref<16x128xbf16, #tpu.memory_space<vmem>>, vector<16x128xbf16>
    tpu.vector_store %arg4[%c0_9, %c0_10], %25 {strides = array<i32>} : memref<16x128xbf16, #tpu.memory_space<vmem>>, vector<16x128xbf16>,
    return
  }
  func.func @transform_0(%arg0: i32) -> (i32, i32) {
    %c0_i32 = arith.constant 0 : i32
    %c0_i32_0 = arith.constant 0 : i32
    return %arg0, %c0_i32 : i32, i32
  }
  func.func @transform_1(%arg0: i32) -> (i32, i32) {
    %c0_i32 = arith.constant 0 : i32
    %c0_i32_0 = arith.constant 0 : i32
    %c0_i32_1 = arith.constant 0 : i32
    return %c0_i32, %c0_i32_0 : i32, i32
  }
  func.func @transform_2(%arg0: i32) -> (i32, i32) {
    %c0_i32 = arith.constant 0 : i32
    %c0_i32_0 = arith.constant 0 : i32
    %c0_i32_1 = arith.constant 0 : i32
    return %c0_i32, %c0_i32_0 : i32, i32
  }
  func.func @transform_3(%arg0: i32) -> (i32, i32) {
    %c0_i32 = arith.constant 0 : i32
    %c0_i32_0 = arith.constant 0 : i32
    return %arg0, %c0_i32 : i32, i32
  }
}

module attributes {stable_mosaic.version = 11 : i64} {
  func.func @transformer_layer_kernel(%arg0: i32, %arg1: memref<1x8x128xbf16, #tpu.memory_space<vmem>>, %arg2: memref<1x1x8xf32, #tpu.memory_space<vmem>>, %arg3: memref<128x384xbf16, #tpu.memory_space<vmem>>, %arg4: memref<1x384xf32, #tpu.memory_space<vmem>>, %arg5: memref<128x128xbf16, #tpu.memory_space<vmem>>, %arg6: memref<1x128xf32, #tpu.memory_space<vmem>>, %arg7: memref<1x128xf32, #tpu.memory_space<vmem>>, %arg8: memref<1x128xf32, #tpu.memory_space<vmem>>, %arg9: memref<128x256xbf16, #tpu.memory_space<vmem>>, %arg10: memref<1x256xf32, #tpu.memory_space<vmem>>, %arg11: memref<256x128xbf16, #tpu.memory_space<vmem>>, %arg12: memref<1x128xf32, #tpu.memory_space<vmem>>, %arg13: memref<1x128xf32, #tpu.memory_space<vmem>>, %arg14: memref<1x128xf32, #tpu.memory_space<vmem>>, %arg15: memref<1x8x128xbf16, #tpu.memory_space<vmem>>) attributes {dimension_semantics = [#tpu.dimension_semantics<parallel>], iteration_bounds = array<i64: 2>, scalar_prefetch = 0 : i64, scratch_operands = 0 : i64, tpu.core_type = #tpu.core_type<tc>, window_params = [{transform_indices = @transform_0, window_bounds = array<i64: 1, 8, 128>}, {transform_indices = @transform_1, window_bounds = array<i64: 1, 1, 8>}, {pipeline_mode = #tpu.pipeline_mode<synchronous>, transform_indices = @transform_2, window_bounds = array<i64: 128, 384>}, {pipeline_mode = #tpu.pipeline_mode<synchronous>, transform_indices = @transform_3, window_bounds = array<i64: 1, 384>}, {pipeline_mode = #tpu.pipeline_mode<synchronous>, transform_indices = @transform_4, window_bounds = array<i64: 128, 128>}, {pipeline_mode = #tpu.pipeline_mode<synchronous>, transform_indices = @transform_5, window_bounds = array<i64: 1, 128>}, {pipeline_mode = #tpu.pipeline_mode<synchronous>, transform_indices = @transform_6, window_bounds = array<i64: 1, 128>}, {pipeline_mode = #tpu.pipeline_mode<synchronous>, transform_indices = @transform_7, window_bounds = array<i64: 1, 128>}, {pipeline_mode = #tpu.pipeline_mode<synchronous>, transform_indices = @transform_8, window_bounds = array<i64: 128, 256>}, {pipeline_mode = #tpu.pipeline_mode<synchronous>, transform_indices = @transform_9, window_bounds = array<i64: 1, 256>}, {pipeline_mode = #tpu.pipeline_mode<synchronous>, transform_indices = @transform_10, window_bounds = array<i64: 256, 128>}, {pipeline_mode = #tpu.pipeline_mode<synchronous>, transform_indices = @transform_11, window_bounds = array<i64: 1, 128>}, {pipeline_mode = #tpu.pipeline_mode<synchronous>, transform_indices = @transform_12, window_bounds = array<i64: 1, 128>}, {pipeline_mode = #tpu.pipeline_mode<synchronous>, transform_indices = @transform_13, window_bounds = array<i64: 1, 128>}, {transform_indices = @transform_14, window_bounds = array<i64: 1, 8, 128>}]} {
    %c0 = arith.constant 0 : index
    %c0_0 = arith.constant 0 : index
    %c0_1 = arith.constant 0 : index
    %0 = vector.load %arg1[%c0, %c0_0, %c0_1] : memref<1x8x128xbf16, #tpu.memory_space<vmem>>, vector<1x8x128xbf16>
    %1 = vector.shape_cast %0 : vector<1x8x128xbf16> to vector<8x128xbf16>
    %2 = arith.extf %1 : vector<8x128xbf16> to vector<8x128xf32>
    %c0_2 = arith.constant 0 : index
    %c0_3 = arith.constant 0 : index
    %3 = vector.load %arg3[%c0_2, %c0_3] : memref<128x384xbf16, #tpu.memory_space<vmem>>, vector<128x384xbf16>
    %cst = arith.constant dense<0.000000e+00> : vector<8x384xf32>
    %4 = tpu.matmul %1, %3, %cst {dimension_numbers = #tpu.dot_dimension_numbers<[1], [0], [0], [1], [0, 0, 1, 1], [], []>} : vector<8x128xbf16>, vector<128x384xbf16>, vector<8x384xf32> -> vector<8x384xf32>
    %c0_4 = arith.constant 0 : index
    %c0_5 = arith.constant 0 : index
    %5 = vector.load %arg4[%c0_4, %c0_5] : memref<1x384xf32, #tpu.memory_space<vmem>>, vector<1x384xf32>
    %6 = vector.broadcast %5 : vector<1x384xf32> to vector<8x384xf32>
    %7 = arith.addf %4, %6 : vector<8x384xf32>
    %8 = vector.extract_strided_slice %7 {offsets = [0, 0], sizes = [8, 128], strides = [1, 1]} : vector<8x384xf32> to vector<8x128xf32>
    %cst_6 = arith.constant 0.176776692 : f32
    %9 = vector.broadcast %cst_6 : f32 to vector<8x128xf32>
    %10 = arith.mulf %8, %9 : vector<8x128xf32>
    %11 = vector.extract_strided_slice %7 {offsets = [0, 128], sizes = [8, 128], strides = [1, 1]} : vector<8x384xf32> to vector<8x128xf32>
    %12 = vector.extract_strided_slice %7 {offsets = [0, 256], sizes = [8, 128], strides = [1, 1]} : vector<8x384xf32> to vector<8x128xf32>
    %13 = arith.truncf %10 : vector<8x128xf32> to vector<8x128xbf16>
    %14 = vector.extract_strided_slice %13 {offsets = [0, 0], sizes = [8, 32], strides = [1, 1]} : vector<8x128xbf16> to vector<8x32xbf16>
    %15 = vector.extract_strided_slice %13 {offsets = [0, 32], sizes = [8, 32], strides = [1, 1]} : vector<8x128xbf16> to vector<8x32xbf16>
    %16 = vector.extract_strided_slice %13 {offsets = [0, 64], sizes = [8, 32], strides = [1, 1]} : vector<8x128xbf16> to vector<8x32xbf16>
    %17 = vector.extract_strided_slice %13 {offsets = [0, 96], sizes = [8, 32], strides = [1, 1]} : vector<8x128xbf16> to vector<8x32xbf16>
    %18 = vector.shape_cast %14 : vector<8x32xbf16> to vector<1x8x32xbf16>
    %19 = vector.shape_cast %15 : vector<8x32xbf16> to vector<1x8x32xbf16>
    %20 = vector.shape_cast %16 : vector<8x32xbf16> to vector<1x8x32xbf16>
    %21 = vector.shape_cast %17 : vector<8x32xbf16> to vector<1x8x32xbf16>
    %22 = tpu.concatenate %18, %19, %20, %21 in 0 : vector<1x8x32xbf16>, vector<1x8x32xbf16>, vector<1x8x32xbf16>, vector<1x8x32xbf16> -> vector<4x8x32xbf16>
    %23 = arith.truncf %11 : vector<8x128xf32> to vector<8x128xbf16>
    %24 = vector.extract_strided_slice %23 {offsets = [0, 0], sizes = [8, 32], strides = [1, 1]} : vector<8x128xbf16> to vector<8x32xbf16>
    %25 = vector.extract_strided_slice %23 {offsets = [0, 32], sizes = [8, 32], strides = [1, 1]} : vector<8x128xbf16> to vector<8x32xbf16>
    %26 = vector.extract_strided_slice %23 {offsets = [0, 64], sizes = [8, 32], strides = [1, 1]} : vector<8x128xbf16> to vector<8x32xbf16>
    %27 = vector.extract_strided_slice %23 {offsets = [0, 96], sizes = [8, 32], strides = [1, 1]} : vector<8x128xbf16> to vector<8x32xbf16>
    %28 = vector.shape_cast %24 : vector<8x32xbf16> to vector<1x8x32xbf16>
    %29 = vector.shape_cast %25 : vector<8x32xbf16> to vector<1x8x32xbf16>
    %30 = vector.shape_cast %26 : vector<8x32xbf16> to vector<1x8x32xbf16>
    %31 = vector.shape_cast %27 : vector<8x32xbf16> to vector<1x8x32xbf16>
    %32 = tpu.concatenate %28, %29, %30, %31 in 0 : vector<1x8x32xbf16>, vector<1x8x32xbf16>, vector<1x8x32xbf16>, vector<1x8x32xbf16> -> vector<4x8x32xbf16>
    %33 = arith.truncf %12 : vector<8x128xf32> to vector<8x128xbf16>
    %34 = vector.extract_strided_slice %33 {offsets = [0, 0], sizes = [8, 32], strides = [1, 1]} : vector<8x128xbf16> to vector<8x32xbf16>
    %35 = vector.extract_strided_slice %33 {offsets = [0, 32], sizes = [8, 32], strides = [1, 1]} : vector<8x128xbf16> to vector<8x32xbf16>
    %36 = vector.extract_strided_slice %33 {offsets = [0, 64], sizes = [8, 32], strides = [1, 1]} : vector<8x128xbf16> to vector<8x32xbf16>
    %37 = vector.extract_strided_slice %33 {offsets = [0, 96], sizes = [8, 32], strides = [1, 1]} : vector<8x128xbf16> to vector<8x32xbf16>
    %38 = vector.shape_cast %34 : vector<8x32xbf16> to vector<1x8x32xbf16>
    %39 = vector.shape_cast %35 : vector<8x32xbf16> to vector<1x8x32xbf16>
    %40 = vector.shape_cast %36 : vector<8x32xbf16> to vector<1x8x32xbf16>
    %41 = vector.shape_cast %37 : vector<8x32xbf16> to vector<1x8x32xbf16>
    %42 = tpu.concatenate %38, %39, %40, %41 in 0 : vector<1x8x32xbf16>, vector<1x8x32xbf16>, vector<1x8x32xbf16>, vector<1x8x32xbf16> -> vector<4x8x32xbf16>
    %c0_7 = arith.constant 0 : index
    %c0_8 = arith.constant 0 : index
    %c0_9 = arith.constant 0 : index
    %43 = vector.load %arg2[%c0_7, %c0_8, %c0_9] : memref<1x1x8xf32, #tpu.memory_space<vmem>>, vector<1x1x8xf32>
    %44 = vector.shape_cast %43 : vector<1x1x8xf32> to vector<1x8xf32>
    %cst_10 = arith.constant 1.000000e+00 : f32
    %45 = vector.broadcast %cst_10 : f32 to vector<1x8xf32>
    %46 = arith.subf %44, %45 : vector<1x8xf32>
    %cst_11 = arith.constant 1.000000e+09 : f32
    %47 = vector.broadcast %cst_11 : f32 to vector<1x8xf32>
    %48 = arith.mulf %46, %47 : vector<1x8xf32>
    "tpu.trace_start"() <{level = 10 : i32, message = "hqd,hkd->hqk"}> : () -> ()
    %cst_12 = arith.constant dense<0.000000e+00> : vector<4x8x8xf32>
    %49 = tpu.matmul %22, %32, %cst_12 {dimension_numbers = #tpu.dot_dimension_numbers<[2], [2], [1], [1], [0, 0, 0, 1, 1, 1], [0], [0]>} : vector<4x8x32xbf16>, vector<4x8x32xbf16>, vector<4x8x8xf32> -> vector<4x8x8xf32>
    "tpu.trace_stop"() : () -> ()
    %50 = vector.shape_cast %48 : vector<1x8xf32> to vector<1x1x8xf32>
    %51 = vector.broadcast %50 : vector<1x1x8xf32> to vector<4x8x8xf32>
    %52 = arith.addf %49, %51 : vector<4x8x8xf32>
    %cst_13 = arith.constant dense<0xFF800000> : vector<4x8xf32>
    %53 = vector.multi_reduction <maximumf>, %52, %cst_13 [2] : vector<4x8x8xf32> to vector<4x8xf32>
    %54 = vector.shape_cast %53 : vector<4x8xf32> to vector<4x8x1xf32>
    %55 = vector.broadcast %54 : vector<4x8x1xf32> to vector<4x8x8xf32>
    %56 = arith.subf %52, %55 : vector<4x8x8xf32>
    %57 = math.exp %56 : vector<4x8x8xf32>
    %cst_14 = arith.constant dense<0.000000e+00> : vector<4x8xf32>
    %58 = vector.multi_reduction <add>, %57, %cst_14 [2] : vector<4x8x8xf32> to vector<4x8xf32>
    %59 = vector.shape_cast %58 : vector<4x8xf32> to vector<4x8x1xf32>
    %60 = tpu.reciprocal %59 {approx = true} : vector<4x8x1xf32> -> vector<4x8x1xf32>
    %61 = vector.broadcast %60 : vector<4x8x1xf32> to vector<4x8x8xf32>
    %62 = arith.mulf %57, %61 : vector<4x8x8xf32>
    %63 = arith.truncf %62 : vector<4x8x8xf32> to vector<4x8x8xbf16>
    "tpu.trace_start"() <{level = 10 : i32, message = "hqk,hkd->hqd"}> : () -> ()
    %cst_15 = arith.constant dense<0.000000e+00> : vector<4x8x32xf32>
    %64 = tpu.matmul %63, %42, %cst_15 {dimension_numbers = #tpu.dot_dimension_numbers<[2], [1], [1], [2], [0, 0, 0, 1, 1, 2], [0], [0]>} : vector<4x8x8xbf16>, vector<4x8x32xbf16>, vector<4x8x32xf32> -> vector<4x8x32xf32>
    "tpu.trace_stop"() : () -> ()
    %65 = vector.extract_strided_slice %64 {offsets = [0, 0, 0], sizes = [1, 8, 32], strides = [1, 1, 1]} : vector<4x8x32xf32> to vector<1x8x32xf32>
    %66 = vector.shape_cast %65 : vector<1x8x32xf32> to vector<8x32xf32>
    %67 = vector.extract_strided_slice %64 {offsets = [1, 0, 0], sizes = [1, 8, 32], strides = [1, 1, 1]} : vector<4x8x32xf32> to vector<1x8x32xf32>
    %68 = vector.shape_cast %67 : vector<1x8x32xf32> to vector<8x32xf32>
    %69 = vector.extract_strided_slice %64 {offsets = [2, 0, 0], sizes = [1, 8, 32], strides = [1, 1, 1]} : vector<4x8x32xf32> to vector<1x8x32xf32>
    %70 = vector.shape_cast %69 : vector<1x8x32xf32> to vector<8x32xf32>
    %71 = vector.extract_strided_slice %64 {offsets = [3, 0, 0], sizes = [1, 8, 32], strides = [1, 1, 1]} : vector<4x8x32xf32> to vector<1x8x32xf32>
    %72 = vector.shape_cast %71 : vector<1x8x32xf32> to vector<8x32xf32>
    %73 = tpu.concatenate %66, %68, %70, %72 in 1 : vector<8x32xf32>, vector<8x32xf32>, vector<8x32xf32>, vector<8x32xf32> -> vector<8x128xf32>
    %74 = arith.truncf %73 : vector<8x128xf32> to vector<8x128xbf16>
    %c0_16 = arith.constant 0 : index
    %c0_17 = arith.constant 0 : index
    %75 = vector.load %arg5[%c0_16, %c0_17] : memref<128x128xbf16, #tpu.memory_space<vmem>>, vector<128x128xbf16>
    %cst_18 = arith.constant dense<0.000000e+00> : vector<8x128xf32>
    %76 = tpu.matmul %74, %75, %cst_18 {dimension_numbers = #tpu.dot_dimension_numbers<[1], [0], [0], [1], [0, 0, 1, 1], [], []>} : vector<8x128xbf16>, vector<128x128xbf16>, vector<8x128xf32> -> vector<8x128xf32>
    %c0_19 = arith.constant 0 : index
    %c0_20 = arith.constant 0 : index
    %77 = vector.load %arg6[%c0_19, %c0_20] : memref<1x128xf32, #tpu.memory_space<vmem>>, vector<1x128xf32>
    %78 = vector.broadcast %77 : vector<1x128xf32> to vector<8x128xf32>
    %79 = arith.addf %76, %78 : vector<8x128xf32>
    %80 = arith.addf %2, %79 : vector<8x128xf32>
    %c0_21 = arith.constant 0 : index
    %c0_22 = arith.constant 0 : index
    %81 = vector.load %arg7[%c0_21, %c0_22] : memref<1x128xf32, #tpu.memory_space<vmem>>, vector<1x128xf32>
    %c0_23 = arith.constant 0 : index
    %c0_24 = arith.constant 0 : index
    %82 = vector.load %arg8[%c0_23, %c0_24] : memref<1x128xf32, #tpu.memory_space<vmem>>, vector<1x128xf32>
    %cst_25 = arith.constant dense<0.000000e+00> : vector<8xf32>
    %83 = vector.multi_reduction <add>, %80, %cst_25 [1] : vector<8x128xf32> to vector<8xf32>
    %84 = vector.shape_cast %83 : vector<8xf32> to vector<8x1xf32>
    %cst_26 = arith.constant 1.280000e+02 : f32
    %85 = vector.broadcast %cst_26 : f32 to vector<8x1xf32>
    %86 = arith.divf %84, %85 : vector<8x1xf32>
    %87 = vector.broadcast %86 : vector<8x1xf32> to vector<8x128xf32>
    %88 = arith.subf %80, %87 : vector<8x128xf32>
    %89 = arith.mulf %88, %88 : vector<8x128xf32>
    %cst_27 = arith.constant dense<0.000000e+00> : vector<8xf32>
    %90 = vector.multi_reduction <add>, %89, %cst_27 [1] : vector<8x128xf32> to vector<8xf32>
    %91 = vector.shape_cast %90 : vector<8xf32> to vector<8x1xf32>
    %cst_28 = arith.constant 1.280000e+02 : f32
    %92 = vector.broadcast %cst_28 : f32 to vector<8x1xf32>
    %93 = arith.divf %91, %92 : vector<8x1xf32>
    %94 = vector.broadcast %86 : vector<8x1xf32> to vector<8x128xf32>
    %95 = arith.subf %80, %94 : vector<8x128xf32>
    %cst_29 = arith.constant 9.99999996E-13 : f32
    %96 = vector.broadcast %cst_29 : f32 to vector<8x1xf32>
    %97 = arith.addf %93, %96 : vector<8x1xf32>
    %98 = math.rsqrt %97 : vector<8x1xf32>
    %99 = vector.broadcast %98 : vector<8x1xf32> to vector<8x128xf32>
    %100 = arith.mulf %95, %99 : vector<8x128xf32>
    %101 = vector.broadcast %81 : vector<1x128xf32> to vector<8x128xf32>
    %102 = arith.mulf %100, %101 : vector<8x128xf32>
    %103 = vector.broadcast %82 : vector<1x128xf32> to vector<8x128xf32>
    %104 = arith.addf %102, %103 : vector<8x128xf32>
    %105 = arith.truncf %104 : vector<8x128xf32> to vector<8x128xbf16>
    %c0_30 = arith.constant 0 : index
    %c0_31 = arith.constant 0 : index
    %106 = vector.load %arg9[%c0_30, %c0_31] : memref<128x256xbf16, #tpu.memory_space<vmem>>, vector<128x256xbf16>
    %cst_32 = arith.constant dense<0.000000e+00> : vector<8x256xf32>
    %107 = tpu.matmul %105, %106, %cst_32 {dimension_numbers = #tpu.dot_dimension_numbers<[1], [0], [0], [1], [0, 0, 1, 1], [], []>} : vector<8x128xbf16>, vector<128x256xbf16>, vector<8x256xf32> -> vector<8x256xf32>
    %c0_33 = arith.constant 0 : index
    %c0_34 = arith.constant 0 : index
    %108 = vector.load %arg10[%c0_33, %c0_34] : memref<1x256xf32, #tpu.memory_space<vmem>>, vector<1x256xf32>
    %109 = vector.broadcast %108 : vector<1x256xf32> to vector<8x256xf32>
    %110 = arith.addf %107, %109 : vector<8x256xf32>
    %111 = arith.mulf %110, %110 : vector<8x256xf32>
    %112 = arith.mulf %110, %111 : vector<8x256xf32>
    %cst_35 = arith.constant 4.471500e-02 : f32
    %113 = vector.broadcast %cst_35 : f32 to vector<8x256xf32>
    %114 = arith.mulf %113, %112 : vector<8x256xf32>
    %115 = arith.addf %110, %114 : vector<8x256xf32>
    %cst_36 = arith.constant 0.797884583 : f32
    %116 = vector.broadcast %cst_36 : f32 to vector<8x256xf32>
    %117 = arith.mulf %116, %115 : vector<8x256xf32>
    %118 = math.tanh %117 : vector<8x256xf32>
    %cst_37 = arith.constant 1.000000e+00 : f32
    %119 = vector.broadcast %cst_37 : f32 to vector<8x256xf32>
    %120 = arith.addf %119, %118 : vector<8x256xf32>
    %cst_38 = arith.constant 5.000000e-01 : f32
    %121 = vector.broadcast %cst_38 : f32 to vector<8x256xf32>
    %122 = arith.mulf %121, %120 : vector<8x256xf32>
    %123 = arith.mulf %110, %122 : vector<8x256xf32>
    %124 = arith.truncf %123 : vector<8x256xf32> to vector<8x256xbf16>
    %c0_39 = arith.constant 0 : index
    %c0_40 = arith.constant 0 : index
    %125 = vector.load %arg11[%c0_39, %c0_40] : memref<256x128xbf16, #tpu.memory_space<vmem>>, vector<256x128xbf16>
    %cst_41 = arith.constant dense<0.000000e+00> : vector<8x128xf32>
    %126 = tpu.matmul %124, %125, %cst_41 {dimension_numbers = #tpu.dot_dimension_numbers<[1], [0], [0], [1], [0, 0, 1, 1], [], []>} : vector<8x256xbf16>, vector<256x128xbf16>, vector<8x128xf32> -> vector<8x128xf32>
    %c0_42 = arith.constant 0 : index
    %c0_43 = arith.constant 0 : index
    %127 = vector.load %arg12[%c0_42, %c0_43] : memref<1x128xf32, #tpu.memory_space<vmem>>, vector<1x128xf32>
    %128 = vector.broadcast %127 : vector<1x128xf32> to vector<8x128xf32>
    %129 = arith.addf %126, %128 : vector<8x128xf32>
    %130 = arith.addf %104, %129 : vector<8x128xf32>
    %c0_44 = arith.constant 0 : index
    %c0_45 = arith.constant 0 : index
    %131 = vector.load %arg13[%c0_44, %c0_45] : memref<1x128xf32, #tpu.memory_space<vmem>>, vector<1x128xf32>
    %c0_46 = arith.constant 0 : index
    %c0_47 = arith.constant 0 : index
    %132 = vector.load %arg14[%c0_46, %c0_47] : memref<1x128xf32, #tpu.memory_space<vmem>>, vector<1x128xf32>
    %cst_48 = arith.constant dense<0.000000e+00> : vector<8xf32>
    %133 = vector.multi_reduction <add>, %130, %cst_48 [1] : vector<8x128xf32> to vector<8xf32>
    %134 = vector.shape_cast %133 : vector<8xf32> to vector<8x1xf32>
    %cst_49 = arith.constant 1.280000e+02 : f32
    %135 = vector.broadcast %cst_49 : f32 to vector<8x1xf32>
    %136 = arith.divf %134, %135 : vector<8x1xf32>
    %137 = vector.broadcast %136 : vector<8x1xf32> to vector<8x128xf32>
    %138 = arith.subf %130, %137 : vector<8x128xf32>
    %139 = arith.mulf %138, %138 : vector<8x128xf32>
    %cst_50 = arith.constant dense<0.000000e+00> : vector<8xf32>
    %140 = vector.multi_reduction <add>, %139, %cst_50 [1] : vector<8x128xf32> to vector<8xf32>
    %141 = vector.shape_cast %140 : vector<8xf32> to vector<8x1xf32>
    %cst_51 = arith.constant 1.280000e+02 : f32
    %142 = vector.broadcast %cst_51 : f32 to vector<8x1xf32>
    %143 = arith.divf %141, %142 : vector<8x1xf32>
    %144 = vector.broadcast %136 : vector<8x1xf32> to vector<8x128xf32>
    %145 = arith.subf %130, %144 : vector<8x128xf32>
    %cst_52 = arith.constant 9.99999996E-13 : f32
    %146 = vector.broadcast %cst_52 : f32 to vector<8x1xf32>
    %147 = arith.addf %143, %146 : vector<8x1xf32>
    %148 = math.rsqrt %147 : vector<8x1xf32>
    %149 = vector.broadcast %148 : vector<8x1xf32> to vector<8x128xf32>
    %150 = arith.mulf %145, %149 : vector<8x128xf32>
    %151 = vector.broadcast %131 : vector<1x128xf32> to vector<8x128xf32>
    %152 = arith.mulf %150, %151 : vector<8x128xf32>
    %153 = vector.broadcast %132 : vector<1x128xf32> to vector<8x128xf32>
    %154 = arith.addf %152, %153 : vector<8x128xf32>
    %155 = arith.truncf %154 : vector<8x128xf32> to vector<8x128xbf16>
    %c0_53 = arith.constant 0 : index
    %c0_54 = arith.constant 0 : index
    %c0_55 = arith.constant 0 : index
    %156 = vector.load %arg15[%c0_53, %c0_54, %c0_55] : memref<1x8x128xbf16, #tpu.memory_space<vmem>>, vector<1x8x128xbf16>
    %157 = vector.shape_cast %156 : vector<1x8x128xbf16> to vector<8x128xbf16>
    %158 = vector.shape_cast %155 : vector<8x128xbf16> to vector<1x8x128xbf16>
    tpu.vector_store %arg15[%c0_53, %c0_54, %c0_55], %158 {strides = array<i32>} : memref<1x8x128xbf16, #tpu.memory_space<vmem>>, vector<1x8x128xbf16>,
    return
  }
  func.func @transform_0(%arg0: i32) -> (i32, i32, i32) {
    %c0_i32 = arith.constant 0 : i32
    %c0_i32_0 = arith.constant 0 : i32
    %c0_i32_1 = arith.constant 0 : i32
    return %arg0, %c0_i32, %c0_i32_0 : i32, i32, i32
  }
  func.func @transform_1(%arg0: i32) -> (i32, i32, i32) {
    %c0_i32 = arith.constant 0 : i32
    %c0_i32_0 = arith.constant 0 : i32
    %c0_i32_1 = arith.constant 0 : i32
    return %arg0, %c0_i32, %c0_i32_0 : i32, i32, i32
  }
  func.func @transform_2(%arg0: i32) -> (i32, i32) {
    %c0_i32 = arith.constant 0 : i32
    %c0_i32_0 = arith.constant 0 : i32
    %c0_i32_1 = arith.constant 0 : i32
    return %c0_i32, %c0_i32_0 : i32, i32
  }
  func.func @transform_3(%arg0: i32) -> (i32, i32) {
    %c0_i32 = arith.constant 0 : i32
    %c0_i32_0 = arith.constant 0 : i32
    %c0_i32_1 = arith.constant 0 : i32
    return %c0_i32, %c0_i32_0 : i32, i32
  }
  func.func @transform_4(%arg0: i32) -> (i32, i32) {
    %c0_i32 = arith.constant 0 : i32
    %c0_i32_0 = arith.constant 0 : i32
    %c0_i32_1 = arith.constant 0 : i32
    return %c0_i32, %c0_i32_0 : i32, i32
  }
  func.func @transform_5(%arg0: i32) -> (i32, i32) {
    %c0_i32 = arith.constant 0 : i32
    %c0_i32_0 = arith.constant 0 : i32
    %c0_i32_1 = arith.constant 0 : i32
    return %c0_i32, %c0_i32_0 : i32, i32
  }
  func.func @transform_6(%arg0: i32) -> (i32, i32) {
    %c0_i32 = arith.constant 0 : i32
    %c0_i32_0 = arith.constant 0 : i32
    %c0_i32_1 = arith.constant 0 : i32
    return %c0_i32, %c0_i32_0 : i32, i32
  }
  func.func @transform_7(%arg0: i32) -> (i32, i32) {
    %c0_i32 = arith.constant 0 : i32
    %c0_i32_0 = arith.constant 0 : i32
    %c0_i32_1 = arith.constant 0 : i32
    return %c0_i32, %c0_i32_0 : i32, i32
  }
  func.func @transform_8(%arg0: i32) -> (i32, i32) {
    %c0_i32 = arith.constant 0 : i32
    %c0_i32_0 = arith.constant 0 : i32
    %c0_i32_1 = arith.constant 0 : i32
    return %c0_i32, %c0_i32_0 : i32, i32
  }
  func.func @transform_9(%arg0: i32) -> (i32, i32) {
    %c0_i32 = arith.constant 0 : i32
    %c0_i32_0 = arith.constant 0 : i32
    %c0_i32_1 = arith.constant 0 : i32
    return %c0_i32, %c0_i32_0 : i32, i32
  }
  func.func @transform_10(%arg0: i32) -> (i32, i32) {
    %c0_i32 = arith.constant 0 : i32
    %c0_i32_0 = arith.constant 0 : i32
    %c0_i32_1 = arith.constant 0 : i32
    return %c0_i32, %c0_i32_0 : i32, i32
  }
  func.func @transform_11(%arg0: i32) -> (i32, i32) {
    %c0_i32 = arith.constant 0 : i32
    %c0_i32_0 = arith.constant 0 : i32
    %c0_i32_1 = arith.constant 0 : i32
    return %c0_i32, %c0_i32_0 : i32, i32
  }
  func.func @transform_12(%arg0: i32) -> (i32, i32) {
    %c0_i32 = arith.constant 0 : i32
    %c0_i32_0 = arith.constant 0 : i32
    %c0_i32_1 = arith.constant 0 : i32
    return %c0_i32, %c0_i32_0 : i32, i32
  }
  func.func @transform_13(%arg0: i32) -> (i32, i32) {
    %c0_i32 = arith.constant 0 : i32
    %c0_i32_0 = arith.constant 0 : i32
    %c0_i32_1 = arith.constant 0 : i32
    return %c0_i32, %c0_i32_0 : i32, i32
  }
  func.func @transform_14(%arg0: i32) -> (i32, i32, i32) {
    %c0_i32 = arith.constant 0 : i32
    %c0_i32_0 = arith.constant 0 : i32
    %c0_i32_1 = arith.constant 0 : i32
    return %arg0, %c0_i32, %c0_i32_0 : i32, i32, i32
  }
}

module attributes {stable_mosaic.version = 11 : i64} {
  func.func @transformer_layer_kernel(%arg0: i32, %arg1: memref<1x8x128xbf16, #tpu.memory_space<vmem>>, %arg2: memref<1x1x8xf32, #tpu.memory_space<vmem>>, %arg3: memref<128x384xbf16, #tpu.memory_space<vmem>>, %arg4: memref<1x384xf32, #tpu.memory_space<vmem>>, %arg5: memref<128x128xbf16, #tpu.memory_space<vmem>>, %arg6: memref<1x128xf32, #tpu.memory_space<vmem>>, %arg7: memref<1x128xf32, #tpu.memory_space<vmem>>, %arg8: memref<1x128xf32, #tpu.memory_space<vmem>>, %arg9: memref<128x256xbf16, #tpu.memory_space<vmem>>, %arg10: memref<1x256xf32, #tpu.memory_space<vmem>>, %arg11: memref<256x128xbf16, #tpu.memory_space<vmem>>, %arg12: memref<1x128xf32, #tpu.memory_space<vmem>>, %arg13: memref<1x128xf32, #tpu.memory_space<vmem>>, %arg14: memref<1x128xf32, #tpu.memory_space<vmem>>, %arg15: memref<1x8x128xbf16, #tpu.memory_space<vmem>>) attributes {dimension_semantics = [#tpu.dimension_semantics<parallel>], iteration_bounds = array<i64: 2>, scalar_prefetch = 0 : i64, scratch_operands = 0 : i64, tpu.core_type = #tpu.core_type<tc>, window_params = [{transform_indices = @transform_0, window_bounds = array<i64: 1, 8, 128>}, {transform_indices = @transform_1, window_bounds = array<i64: 1, 1, 8>}, {pipeline_mode = #tpu.pipeline_mode<synchronous>, transform_indices = @transform_2, window_bounds = array<i64: 128, 384>}, {pipeline_mode = #tpu.pipeline_mode<synchronous>, transform_indices = @transform_3, window_bounds = array<i64: 1, 384>}, {pipeline_mode = #tpu.pipeline_mode<synchronous>, transform_indices = @transform_4, window_bounds = array<i64: 128, 128>}, {pipeline_mode = #tpu.pipeline_mode<synchronous>, transform_indices = @transform_5, window_bounds = array<i64: 1, 128>}, {pipeline_mode = #tpu.pipeline_mode<synchronous>, transform_indices = @transform_6, window_bounds = array<i64: 1, 128>}, {pipeline_mode = #tpu.pipeline_mode<synchronous>, transform_indices = @transform_7, window_bounds = array<i64: 1, 128>}, {pipeline_mode = #tpu.pipeline_mode<synchronous>, transform_indices = @transform_8, window_bounds = array<i64: 128, 256>}, {pipeline_mode = #tpu.pipeline_mode<synchronous>, transform_indices = @transform_9, window_bounds = array<i64: 1, 256>}, {pipeline_mode = #tpu.pipeline_mode<synchronous>, transform_indices = @transform_10, window_bounds = array<i64: 256, 128>}, {pipeline_mode = #tpu.pipeline_mode<synchronous>, transform_indices = @transform_11, window_bounds = array<i64: 1, 128>}, {pipeline_mode = #tpu.pipeline_mode<synchronous>, transform_indices = @transform_12, window_bounds = array<i64: 1, 128>}, {pipeline_mode = #tpu.pipeline_mode<synchronous>, transform_indices = @transform_13, window_bounds = array<i64: 1, 128>}, {transform_indices = @transform_14, window_bounds = array<i64: 1, 8, 128>}]} {
    %c0 = arith.constant 0 : index
    %c0_0 = arith.constant 0 : index
    %c0_1 = arith.constant 0 : index
    %0 = vector.load %arg1[%c0, %c0_0, %c0_1] : memref<1x8x128xbf16, #tpu.memory_space<vmem>>, vector<1x8x128xbf16>
    %1 = vector.shape_cast %0 : vector<1x8x128xbf16> to vector<8x128xbf16>
    %2 = arith.extf %1 : vector<8x128xbf16> to vector<8x128xf32>
    %c0_2 = arith.constant 0 : index
    %c0_3 = arith.constant 0 : index
    %3 = vector.load %arg3[%c0_2, %c0_3] : memref<128x384xbf16, #tpu.memory_space<vmem>>, vector<128x384xbf16>
    %cst = arith.constant dense<0.000000e+00> : vector<8x384xf32>
    %4 = tpu.matmul %1, %3, %cst {dimension_numbers = #tpu.dot_dimension_numbers<[1], [0], [0], [1], [0, 0, 1, 1], [], []>} : vector<8x128xbf16>, vector<128x384xbf16>, vector<8x384xf32> -> vector<8x384xf32>
    %c0_4 = arith.constant 0 : index
    %c0_5 = arith.constant 0 : index
    %5 = vector.load %arg4[%c0_4, %c0_5] : memref<1x384xf32, #tpu.memory_space<vmem>>, vector<1x384xf32>
    %6 = vector.broadcast %5 : vector<1x384xf32> to vector<8x384xf32>
    %7 = arith.addf %4, %6 : vector<8x384xf32>
    %8 = vector.extract_strided_slice %7 {offsets = [0, 0], sizes = [8, 128], strides = [1, 1]} : vector<8x384xf32> to vector<8x128xf32>
    %cst_6 = arith.constant 0.176776692 : f32
    %9 = vector.broadcast %cst_6 : f32 to vector<8x128xf32>
    %10 = arith.mulf %8, %9 : vector<8x128xf32>
    %11 = vector.extract_strided_slice %7 {offsets = [0, 128], sizes = [8, 128], strides = [1, 1]} : vector<8x384xf32> to vector<8x128xf32>
    %12 = vector.extract_strided_slice %7 {offsets = [0, 256], sizes = [8, 128], strides = [1, 1]} : vector<8x384xf32> to vector<8x128xf32>
    %13 = arith.truncf %10 : vector<8x128xf32> to vector<8x128xbf16>
    %14 = vector.extract_strided_slice %13 {offsets = [0, 0], sizes = [8, 32], strides = [1, 1]} : vector<8x128xbf16> to vector<8x32xbf16>
    %15 = vector.extract_strided_slice %13 {offsets = [0, 32], sizes = [8, 32], strides = [1, 1]} : vector<8x128xbf16> to vector<8x32xbf16>
    %16 = vector.extract_strided_slice %13 {offsets = [0, 64], sizes = [8, 32], strides = [1, 1]} : vector<8x128xbf16> to vector<8x32xbf16>
    %17 = vector.extract_strided_slice %13 {offsets = [0, 96], sizes = [8, 32], strides = [1, 1]} : vector<8x128xbf16> to vector<8x32xbf16>
    %18 = vector.shape_cast %14 : vector<8x32xbf16> to vector<1x8x32xbf16>
    %19 = vector.shape_cast %15 : vector<8x32xbf16> to vector<1x8x32xbf16>
    %20 = vector.shape_cast %16 : vector<8x32xbf16> to vector<1x8x32xbf16>
    %21 = vector.shape_cast %17 : vector<8x32xbf16> to vector<1x8x32xbf16>
    %22 = tpu.concatenate %18, %19, %20, %21 in 0 : vector<1x8x32xbf16>, vector<1x8x32xbf16>, vector<1x8x32xbf16>, vector<1x8x32xbf16> -> vector<4x8x32xbf16>
    %23 = arith.truncf %11 : vector<8x128xf32> to vector<8x128xbf16>
    %24 = vector.extract_strided_slice %23 {offsets = [0, 0], sizes = [8, 32], strides = [1, 1]} : vector<8x128xbf16> to vector<8x32xbf16>
    %25 = vector.extract_strided_slice %23 {offsets = [0, 32], sizes = [8, 32], strides = [1, 1]} : vector<8x128xbf16> to vector<8x32xbf16>
    %26 = vector.extract_strided_slice %23 {offsets = [0, 64], sizes = [8, 32], strides = [1, 1]} : vector<8x128xbf16> to vector<8x32xbf16>
    %27 = vector.extract_strided_slice %23 {offsets = [0, 96], sizes = [8, 32], strides = [1, 1]} : vector<8x128xbf16> to vector<8x32xbf16>
    %28 = vector.shape_cast %24 : vector<8x32xbf16> to vector<1x8x32xbf16>
    %29 = vector.shape_cast %25 : vector<8x32xbf16> to vector<1x8x32xbf16>
    %30 = vector.shape_cast %26 : vector<8x32xbf16> to vector<1x8x32xbf16>
    %31 = vector.shape_cast %27 : vector<8x32xbf16> to vector<1x8x32xbf16>
    %32 = tpu.concatenate %28, %29, %30, %31 in 0 : vector<1x8x32xbf16>, vector<1x8x32xbf16>, vector<1x8x32xbf16>, vector<1x8x32xbf16> -> vector<4x8x32xbf16>
    %33 = arith.truncf %12 : vector<8x128xf32> to vector<8x128xbf16>
    %34 = vector.extract_strided_slice %33 {offsets = [0, 0], sizes = [8, 32], strides = [1, 1]} : vector<8x128xbf16> to vector<8x32xbf16>
    %35 = vector.extract_strided_slice %33 {offsets = [0, 32], sizes = [8, 32], strides = [1, 1]} : vector<8x128xbf16> to vector<8x32xbf16>
    %36 = vector.extract_strided_slice %33 {offsets = [0, 64], sizes = [8, 32], strides = [1, 1]} : vector<8x128xbf16> to vector<8x32xbf16>
    %37 = vector.extract_strided_slice %33 {offsets = [0, 96], sizes = [8, 32], strides = [1, 1]} : vector<8x128xbf16> to vector<8x32xbf16>
    %38 = vector.shape_cast %34 : vector<8x32xbf16> to vector<1x8x32xbf16>
    %39 = vector.shape_cast %35 : vector<8x32xbf16> to vector<1x8x32xbf16>
    %40 = vector.shape_cast %36 : vector<8x32xbf16> to vector<1x8x32xbf16>
    %41 = vector.shape_cast %37 : vector<8x32xbf16> to vector<1x8x32xbf16>
    %42 = tpu.concatenate %38, %39, %40, %41 in 0 : vector<1x8x32xbf16>, vector<1x8x32xbf16>, vector<1x8x32xbf16>, vector<1x8x32xbf16> -> vector<4x8x32xbf16>
    %c0_7 = arith.constant 0 : index
    %c0_8 = arith.constant 0 : index
    %c0_9 = arith.constant 0 : index
    %43 = vector.load %arg2[%c0_7, %c0_8, %c0_9] : memref<1x1x8xf32, #tpu.memory_space<vmem>>, vector<1x1x8xf32>
    %44 = vector.shape_cast %43 : vector<1x1x8xf32> to vector<1x8xf32>
    %cst_10 = arith.constant 1.000000e+00 : f32
    %45 = vector.broadcast %cst_10 : f32 to vector<1x8xf32>
    %46 = arith.subf %44, %45 : vector<1x8xf32>
    %cst_11 = arith.constant 1.000000e+09 : f32
    %47 = vector.broadcast %cst_11 : f32 to vector<1x8xf32>
    %48 = arith.mulf %46, %47 : vector<1x8xf32>
    "tpu.trace_start"() <{level = 10 : i32, message = "hqd,hkd->hqk"}> : () -> ()
    %cst_12 = arith.constant dense<0.000000e+00> : vector<4x8x8xf32>
    %49 = tpu.matmul %22, %32, %cst_12 {dimension_numbers = #tpu.dot_dimension_numbers<[2], [2], [1], [1], [0, 0, 0, 1, 1, 1], [0], [0]>} : vector<4x8x32xbf16>, vector<4x8x32xbf16>, vector<4x8x8xf32> -> vector<4x8x8xf32>
    "tpu.trace_stop"() : () -> ()
    %50 = vector.shape_cast %48 : vector<1x8xf32> to vector<1x1x8xf32>
    %51 = vector.broadcast %50 : vector<1x1x8xf32> to vector<4x8x8xf32>
    %52 = arith.addf %49, %51 : vector<4x8x8xf32>
    %cst_13 = arith.constant dense<0xFF800000> : vector<4x8xf32>
    %53 = vector.multi_reduction <maximumf>, %52, %cst_13 [2] : vector<4x8x8xf32> to vector<4x8xf32>
    %54 = vector.shape_cast %53 : vector<4x8xf32> to vector<4x8x1xf32>
    %55 = vector.broadcast %54 : vector<4x8x1xf32> to vector<4x8x8xf32>
    %56 = arith.subf %52, %55 : vector<4x8x8xf32>
    %57 = math.exp %56 : vector<4x8x8xf32>
    %cst_14 = arith.constant dense<0.000000e+00> : vector<4x8xf32>
    %58 = vector.multi_reduction <add>, %57, %cst_14 [2] : vector<4x8x8xf32> to vector<4x8xf32>
    %59 = vector.shape_cast %58 : vector<4x8xf32> to vector<4x8x1xf32>
    %60 = tpu.reciprocal %59 {approx = true} : vector<4x8x1xf32> -> vector<4x8x1xf32>
    %61 = vector.broadcast %60 : vector<4x8x1xf32> to vector<4x8x8xf32>
    %62 = arith.mulf %57, %61 : vector<4x8x8xf32>
    %63 = arith.truncf %62 : vector<4x8x8xf32> to vector<4x8x8xbf16>
    "tpu.trace_start"() <{level = 10 : i32, message = "hqk,hkd->hqd"}> : () -> ()
    %cst_15 = arith.constant dense<0.000000e+00> : vector<4x8x32xf32>
    %64 = tpu.matmul %63, %42, %cst_15 {dimension_numbers = #tpu.dot_dimension_numbers<[2], [1], [1], [2], [0, 0, 0, 1, 1, 2], [0], [0]>} : vector<4x8x8xbf16>, vector<4x8x32xbf16>, vector<4x8x32xf32> -> vector<4x8x32xf32>
    "tpu.trace_stop"() : () -> ()
    %65 = vector.extract_strided_slice %64 {offsets = [0, 0, 0], sizes = [1, 8, 32], strides = [1, 1, 1]} : vector<4x8x32xf32> to vector<1x8x32xf32>
    %66 = vector.shape_cast %65 : vector<1x8x32xf32> to vector<8x32xf32>
    %67 = vector.extract_strided_slice %64 {offsets = [1, 0, 0], sizes = [1, 8, 32], strides = [1, 1, 1]} : vector<4x8x32xf32> to vector<1x8x32xf32>
    %68 = vector.shape_cast %67 : vector<1x8x32xf32> to vector<8x32xf32>
    %69 = vector.extract_strided_slice %64 {offsets = [2, 0, 0], sizes = [1, 8, 32], strides = [1, 1, 1]} : vector<4x8x32xf32> to vector<1x8x32xf32>
    %70 = vector.shape_cast %69 : vector<1x8x32xf32> to vector<8x32xf32>
    %71 = vector.extract_strided_slice %64 {offsets = [3, 0, 0], sizes = [1, 8, 32], strides = [1, 1, 1]} : vector<4x8x32xf32> to vector<1x8x32xf32>
    %72 = vector.shape_cast %71 : vector<1x8x32xf32> to vector<8x32xf32>
    %73 = tpu.concatenate %66, %68, %70, %72 in 1 : vector<8x32xf32>, vector<8x32xf32>, vector<8x32xf32>, vector<8x32xf32> -> vector<8x128xf32>
    %74 = arith.truncf %73 : vector<8x128xf32> to vector<8x128xbf16>
    %c0_16 = arith.constant 0 : index
    %c0_17 = arith.constant 0 : index
    %75 = vector.load %arg5[%c0_16, %c0_17] : memref<128x128xbf16, #tpu.memory_space<vmem>>, vector<128x128xbf16>
    %cst_18 = arith.constant dense<0.000000e+00> : vector<8x128xf32>
    %76 = tpu.matmul %74, %75, %cst_18 {dimension_numbers = #tpu.dot_dimension_numbers<[1], [0], [0], [1], [0, 0, 1, 1], [], []>} : vector<8x128xbf16>, vector<128x128xbf16>, vector<8x128xf32> -> vector<8x128xf32>
    %c0_19 = arith.constant 0 : index
    %c0_20 = arith.constant 0 : index
    %77 = vector.load %arg6[%c0_19, %c0_20] : memref<1x128xf32, #tpu.memory_space<vmem>>, vector<1x128xf32>
    %78 = vector.broadcast %77 : vector<1x128xf32> to vector<8x128xf32>
    %79 = arith.addf %76, %78 : vector<8x128xf32>
    %80 = arith.addf %2, %79 : vector<8x128xf32>
    %c0_21 = arith.constant 0 : index
    %c0_22 = arith.constant 0 : index
    %81 = vector.load %arg7[%c0_21, %c0_22] : memref<1x128xf32, #tpu.memory_space<vmem>>, vector<1x128xf32>
    %c0_23 = arith.constant 0 : index
    %c0_24 = arith.constant 0 : index
    %82 = vector.load %arg8[%c0_23, %c0_24] : memref<1x128xf32, #tpu.memory_space<vmem>>, vector<1x128xf32>
    %cst_25 = arith.constant dense<0.000000e+00> : vector<8xf32>
    %83 = vector.multi_reduction <add>, %80, %cst_25 [1] : vector<8x128xf32> to vector<8xf32>
    %84 = vector.shape_cast %83 : vector<8xf32> to vector<8x1xf32>
    %cst_26 = arith.constant 1.280000e+02 : f32
    %85 = vector.broadcast %cst_26 : f32 to vector<8x1xf32>
    %86 = arith.divf %84, %85 : vector<8x1xf32>
    %87 = vector.broadcast %86 : vector<8x1xf32> to vector<8x128xf32>
    %88 = arith.subf %80, %87 : vector<8x128xf32>
    %89 = arith.mulf %88, %88 : vector<8x128xf32>
    %cst_27 = arith.constant dense<0.000000e+00> : vector<8xf32>
    %90 = vector.multi_reduction <add>, %89, %cst_27 [1] : vector<8x128xf32> to vector<8xf32>
    %91 = vector.shape_cast %90 : vector<8xf32> to vector<8x1xf32>
    %cst_28 = arith.constant 1.280000e+02 : f32
    %92 = vector.broadcast %cst_28 : f32 to vector<8x1xf32>
    %93 = arith.divf %91, %92 : vector<8x1xf32>
    %94 = vector.broadcast %86 : vector<8x1xf32> to vector<8x128xf32>
    %95 = arith.subf %80, %94 : vector<8x128xf32>
    %cst_29 = arith.constant 9.99999996E-13 : f32
    %96 = vector.broadcast %cst_29 : f32 to vector<8x1xf32>
    %97 = arith.addf %93, %96 : vector<8x1xf32>
    %98 = math.rsqrt %97 : vector<8x1xf32>
    %99 = vector.broadcast %98 : vector<8x1xf32> to vector<8x128xf32>
    %100 = arith.mulf %95, %99 : vector<8x128xf32>
    %101 = vector.broadcast %81 : vector<1x128xf32> to vector<8x128xf32>
    %102 = arith.mulf %100, %101 : vector<8x128xf32>
    %103 = vector.broadcast %82 : vector<1x128xf32> to vector<8x128xf32>
    %104 = arith.addf %102, %103 : vector<8x128xf32>
    %105 = arith.truncf %104 : vector<8x128xf32> to vector<8x128xbf16>
    %c0_30 = arith.constant 0 : index
    %c0_31 = arith.constant 0 : index
    %106 = vector.load %arg9[%c0_30, %c0_31] : memref<128x256xbf16, #tpu.memory_space<vmem>>, vector<128x256xbf16>
    %cst_32 = arith.constant dense<0.000000e+00> : vector<8x256xf32>
    %107 = tpu.matmul %105, %106, %cst_32 {dimension_numbers = #tpu.dot_dimension_numbers<[1], [0], [0], [1], [0, 0, 1, 1], [], []>} : vector<8x128xbf16>, vector<128x256xbf16>, vector<8x256xf32> -> vector<8x256xf32>
    %c0_33 = arith.constant 0 : index
    %c0_34 = arith.constant 0 : index
    %108 = vector.load %arg10[%c0_33, %c0_34] : memref<1x256xf32, #tpu.memory_space<vmem>>, vector<1x256xf32>
    %109 = vector.broadcast %108 : vector<1x256xf32> to vector<8x256xf32>
    %110 = arith.addf %107, %109 : vector<8x256xf32>
    %111 = arith.mulf %110, %110 : vector<8x256xf32>
    %112 = arith.mulf %110, %111 : vector<8x256xf32>
    %cst_35 = arith.constant 4.471500e-02 : f32
    %113 = vector.broadcast %cst_35 : f32 to vector<8x256xf32>
    %114 = arith.mulf %113, %112 : vector<8x256xf32>
    %115 = arith.addf %110, %114 : vector<8x256xf32>
    %cst_36 = arith.constant 0.797884583 : f32
    %116 = vector.broadcast %cst_36 : f32 to vector<8x256xf32>
    %117 = arith.mulf %116, %115 : vector<8x256xf32>
    %118 = math.tanh %117 : vector<8x256xf32>
    %cst_37 = arith.constant 1.000000e+00 : f32
    %119 = vector.broadcast %cst_37 : f32 to vector<8x256xf32>
    %120 = arith.addf %119, %118 : vector<8x256xf32>
    %cst_38 = arith.constant 5.000000e-01 : f32
    %121 = vector.broadcast %cst_38 : f32 to vector<8x256xf32>
    %122 = arith.mulf %121, %120 : vector<8x256xf32>
    %123 = arith.mulf %110, %122 : vector<8x256xf32>
    %124 = arith.truncf %123 : vector<8x256xf32> to vector<8x256xbf16>
    %c0_39 = arith.constant 0 : index
    %c0_40 = arith.constant 0 : index
    %125 = vector.load %arg11[%c0_39, %c0_40] : memref<256x128xbf16, #tpu.memory_space<vmem>>, vector<256x128xbf16>
    %cst_41 = arith.constant dense<0.000000e+00> : vector<8x128xf32>
    %126 = tpu.matmul %124, %125, %cst_41 {dimension_numbers = #tpu.dot_dimension_numbers<[1], [0], [0], [1], [0, 0, 1, 1], [], []>} : vector<8x256xbf16>, vector<256x128xbf16>, vector<8x128xf32> -> vector<8x128xf32>
    %c0_42 = arith.constant 0 : index
    %c0_43 = arith.constant 0 : index
    %127 = vector.load %arg12[%c0_42, %c0_43] : memref<1x128xf32, #tpu.memory_space<vmem>>, vector<1x128xf32>
    %128 = vector.broadcast %127 : vector<1x128xf32> to vector<8x128xf32>
    %129 = arith.addf %126, %128 : vector<8x128xf32>
    %130 = arith.addf %104, %129 : vector<8x128xf32>
    %c0_44 = arith.constant 0 : index
    %c0_45 = arith.constant 0 : index
    %131 = vector.load %arg13[%c0_44, %c0_45] : memref<1x128xf32, #tpu.memory_space<vmem>>, vector<1x128xf32>
    %c0_46 = arith.constant 0 : index
    %c0_47 = arith.constant 0 : index
    %132 = vector.load %arg14[%c0_46, %c0_47] : memref<1x128xf32, #tpu.memory_space<vmem>>, vector<1x128xf32>
    %cst_48 = arith.constant dense<0.000000e+00> : vector<8xf32>
    %133 = vector.multi_reduction <add>, %130, %cst_48 [1] : vector<8x128xf32> to vector<8xf32>
    %134 = vector.shape_cast %133 : vector<8xf32> to vector<8x1xf32>
    %cst_49 = arith.constant 1.280000e+02 : f32
    %135 = vector.broadcast %cst_49 : f32 to vector<8x1xf32>
    %136 = arith.divf %134, %135 : vector<8x1xf32>
    %137 = vector.broadcast %136 : vector<8x1xf32> to vector<8x128xf32>
    %138 = arith.subf %130, %137 : vector<8x128xf32>
    %139 = arith.mulf %138, %138 : vector<8x128xf32>
    %cst_50 = arith.constant dense<0.000000e+00> : vector<8xf32>
    %140 = vector.multi_reduction <add>, %139, %cst_50 [1] : vector<8x128xf32> to vector<8xf32>
    %141 = vector.shape_cast %140 : vector<8xf32> to vector<8x1xf32>
    %cst_51 = arith.constant 1.280000e+02 : f32
    %142 = vector.broadcast %cst_51 : f32 to vector<8x1xf32>
    %143 = arith.divf %141, %142 : vector<8x1xf32>
    %144 = vector.broadcast %136 : vector<8x1xf32> to vector<8x128xf32>
    %145 = arith.subf %130, %144 : vector<8x128xf32>
    %cst_52 = arith.constant 9.99999996E-13 : f32
    %146 = vector.broadcast %cst_52 : f32 to vector<8x1xf32>
    %147 = arith.addf %143, %146 : vector<8x1xf32>
    %148 = math.rsqrt %147 : vector<8x1xf32>
    %149 = vector.broadcast %148 : vector<8x1xf32> to vector<8x128xf32>
    %150 = arith.mulf %145, %149 : vector<8x128xf32>
    %151 = vector.broadcast %131 : vector<1x128xf32> to vector<8x128xf32>
    %152 = arith.mulf %150, %151 : vector<8x128xf32>
    %153 = vector.broadcast %132 : vector<1x128xf32> to vector<8x128xf32>
    %154 = arith.addf %152, %153 : vector<8x128xf32>
    %155 = arith.truncf %154 : vector<8x128xf32> to vector<8x128xbf16>
    %c0_53 = arith.constant 0 : index
    %c0_54 = arith.constant 0 : index
    %c0_55 = arith.constant 0 : index
    %156 = vector.load %arg15[%c0_53, %c0_54, %c0_55] : memref<1x8x128xbf16, #tpu.memory_space<vmem>>, vector<1x8x128xbf16>
    %157 = vector.shape_cast %156 : vector<1x8x128xbf16> to vector<8x128xbf16>
    %158 = vector.shape_cast %155 : vector<8x128xbf16> to vector<1x8x128xbf16>
    tpu.vector_store %arg15[%c0_53, %c0_54, %c0_55], %158 {strides = array<i32>} : memref<1x8x128xbf16, #tpu.memory_space<vmem>>, vector<1x8x128xbf16>,
    return
  }
  func.func @transform_0(%arg0: i32) -> (i32, i32, i32) {
    %c0_i32 = arith.constant 0 : i32
    %c0_i32_0 = arith.constant 0 : i32
    %c0_i32_1 = arith.constant 0 : i32
    return %arg0, %c0_i32, %c0_i32_0 : i32, i32, i32
  }
  func.func @transform_1(%arg0: i32) -> (i32, i32, i32) {
    %c0_i32 = arith.constant 0 : i32
    %c0_i32_0 = arith.constant 0 : i32
    %c0_i32_1 = arith.constant 0 : i32
    return %arg0, %c0_i32, %c0_i32_0 : i32, i32, i32
  }
  func.func @transform_2(%arg0: i32) -> (i32, i32) {
    %c0_i32 = arith.constant 0 : i32
    %c0_i32_0 = arith.constant 0 : i32
    %c0_i32_1 = arith.constant 0 : i32
    return %c0_i32, %c0_i32_0 : i32, i32
  }
  func.func @transform_3(%arg0: i32) -> (i32, i32) {
    %c0_i32 = arith.constant 0 : i32
    %c0_i32_0 = arith.constant 0 : i32
    %c0_i32_1 = arith.constant 0 : i32
    return %c0_i32, %c0_i32_0 : i32, i32
  }
  func.func @transform_4(%arg0: i32) -> (i32, i32) {
    %c0_i32 = arith.constant 0 : i32
    %c0_i32_0 = arith.constant 0 : i32
    %c0_i32_1 = arith.constant 0 : i32
    return %c0_i32, %c0_i32_0 : i32, i32
  }
  func.func @transform_5(%arg0: i32) -> (i32, i32) {
    %c0_i32 = arith.constant 0 : i32
    %c0_i32_0 = arith.constant 0 : i32
    %c0_i32_1 = arith.constant 0 : i32
    return %c0_i32, %c0_i32_0 : i32, i32
  }
  func.func @transform_6(%arg0: i32) -> (i32, i32) {
    %c0_i32 = arith.constant 0 : i32
    %c0_i32_0 = arith.constant 0 : i32
    %c0_i32_1 = arith.constant 0 : i32
    return %c0_i32, %c0_i32_0 : i32, i32
  }
  func.func @transform_7(%arg0: i32) -> (i32, i32) {
    %c0_i32 = arith.constant 0 : i32
    %c0_i32_0 = arith.constant 0 : i32
    %c0_i32_1 = arith.constant 0 : i32
    return %c0_i32, %c0_i32_0 : i32, i32
  }
  func.func @transform_8(%arg0: i32) -> (i32, i32) {
    %c0_i32 = arith.constant 0 : i32
    %c0_i32_0 = arith.constant 0 : i32
    %c0_i32_1 = arith.constant 0 : i32
    return %c0_i32, %c0_i32_0 : i32, i32
  }
  func.func @transform_9(%arg0: i32) -> (i32, i32) {
    %c0_i32 = arith.constant 0 : i32
    %c0_i32_0 = arith.constant 0 : i32
    %c0_i32_1 = arith.constant 0 : i32
    return %c0_i32, %c0_i32_0 : i32, i32
  }
  func.func @transform_10(%arg0: i32) -> (i32, i32) {
    %c0_i32 = arith.constant 0 : i32
    %c0_i32_0 = arith.constant 0 : i32
    %c0_i32_1 = arith.constant 0 : i32
    return %c0_i32, %c0_i32_0 : i32, i32
  }
  func.func @transform_11(%arg0: i32) -> (i32, i32) {
    %c0_i32 = arith.constant 0 : i32
    %c0_i32_0 = arith.constant 0 : i32
    %c0_i32_1 = arith.constant 0 : i32
    return %c0_i32, %c0_i32_0 : i32, i32
  }
  func.func @transform_12(%arg0: i32) -> (i32, i32) {
    %c0_i32 = arith.constant 0 : i32
    %c0_i32_0 = arith.constant 0 : i32
    %c0_i32_1 = arith.constant 0 : i32
    return %c0_i32, %c0_i32_0 : i32, i32
  }
  func.func @transform_13(%arg0: i32) -> (i32, i32) {
    %c0_i32 = arith.constant 0 : i32
    %c0_i32_0 = arith.constant 0 : i32
    %c0_i32_1 = arith.constant 0 : i32
    return %c0_i32, %c0_i32_0 : i32, i32
  }
  func.func @transform_14(%arg0: i32) -> (i32, i32, i32) {
    %c0_i32 = arith.constant 0 : i32
    %c0_i32_0 = arith.constant 0 : i32
    %c0_i32_1 = arith.constant 0 : i32
    return %arg0, %c0_i32, %c0_i32_0 : i32, i32, i32
  }
}

</mosaic_0001>

<llo_original>
// kernel: text_embedder_forward.3
$region0: #{text_embedder_forward.3}
  #allocation0 [shape = 'u32[]', space=smem, size = 0x4, offset = 0x4, fixed_abs, tag = 'smem constant byte address 0x4 - core index']
  #allocation1 [shape = 'u32[144,128]{1,0:T(1,128)}', space=vmem, size = 0x12000, scoped, tag = 'internal scratch']
  %s0 = inlined_call_operand.vmem [shape: f32[16,128], index: 0, kind: input, shape index: {}]
  %s1 = inlined_call_operand.vmem [shape: f32[1,128], index: 1, kind: input, shape index: {}]
  %s2 = inlined_call_operand.vmem [shape: f32[1,128], index: 2, kind: input, shape index: {}]
  %s3 = inlined_call_operand.vmem [shape: bf16[16,128], index: 3, kind: output, shape index: {}]
  %s4 = sld [smem:[#allocation0]]
  $region22: #{text_embedder_forward.3} parent=0
    _
  %s6 = ssub.s32 1, %s4
  %s7 = scalar_select 0, %s6, %s4
  // Predicated region
  $region2: #{text_embedder_forward.3} parent=0 // pred_check
    _
  $region3: #{text_embedder_forward.3} parent=0 // pred_check_branch
    %9 = sbr.rel (0) target = $region5
  $region4: #{text_embedder_forward.3} parent=0 // pred_region
    _
  $region5: #{text_embedder_forward.3} parent=0 // pred_fallthru
    _
  // Predicated region
  $region6: #{text_embedder_forward.3} parent=0 // pred_check
    _
  $region7: #{text_embedder_forward.3} parent=0 // pred_check_branch
    %11 = sbr.rel (0) target = $region9
  $region8: #{text_embedder_forward.3} parent=0 // pred_region
    _
  $region9: #{text_embedder_forward.3} parent=0 // pred_fallthru
    _
  // Predicated region
  $region10: #{text_embedder_forward.3} parent=0 // pred_check
    _
  $region11: #{text_embedder_forward.3} parent=0 // pred_check_branch
    %13 = sbr.rel (0) target = $region13
  $region12: #{text_embedder_forward.3} parent=0 // pred_region
    _
  $region13: #{text_embedder_forward.3} parent=0 // pred_fallthru
    _
  %v14 = vld [vmem:[%s0] sm:$0xff]
  %v15 = vld [vmem:[%s0 + $0x8] sm:$0xff]
  %v16 = vld [vmem:[%s1] sm:$0x1]
  %v17 = vld [vmem:[%s2] sm:$0x1]
  %18 = vadd.xlane.f32.xlu0 %v14
  %v19 = vpop.xlane.xlu0 %18
  %20 = vadd.xlane.f32.xlu0 %v15
  %v21 = vpop.xlane.xlu0 %20
  %v22 = vrcp.pop 128.0
  %v23 = vmul.f32 %v19, %v22
  %v24 = vmul.f32 %v21, %v22
  %v25 = vsub.f32 %v14, %v23
  %v26 = vsub.f32 %v15, %v24
  %v27 = vmul.f32 %v25, %v25
  %v28 = vmul.f32 %v26, %v26
  %29 = vadd.xlane.f32.xlu0 %v27
  %v30 = vpop.xlane.xlu0 %29
  %31 = vadd.xlane.f32.xlu0 %v28
  %v32 = vpop.xlane.xlu0 %31
  %v33 = vmul.f32 %v30, %v22
  %v34 = vmul.f32 %v32, %v22
  %v35 = vadd.f32 %v33, 1e-12
  %v36 = vadd.f32 %v34, 1e-12
  %v37 = vrsqrt.pop %v35
  %v38 = vrsqrt.pop %v36
  %v39 = vmul.f32 %v25, %v37
  %v40 = vmul.f32 %v26, %v38
  %v42 = vlaneseq
  %v43 = vshrl.u32 %v42, 7
  %v44 = vsub.s32 0, %v43
  %v45 = vrot.slane %v16, %v44
  %v47 = vmul.f32 %v39, %v45
  %v48 = vmul.f32 %v40, %v45
  %v50 = vlaneseq
  %v51 = vshrl.u32 %v50, 7
  %v52 = vsub.s32 0, %v51
  %v53 = vrot.slane %v17, %v52
  %v55 = vadd.f32 %v47, %v53
  %v56 = vadd.f32 %v48, %v53
  %v57 = vpack.c.bf16 %v56, %v55
  %v59 = vunpack.c.l.b16 %v57
  %v60 = vunpack.c.h.b16 %v57
  %v61 = vpack.c.b16 %v59, %v59
  %v62 = vpack.c.b16 %v60, %v60
  %65 = vst [vmem:[%s3] sm:$0xf] %v61
  %66 = vst [vmem:[%s3 + $0x4] sm:$0xf] %v62
  // Predicated region
  $region14: #{text_embedder_forward.3} parent=0 // pred_check
    _
  $region15: #{text_embedder_forward.3} parent=0 // pred_check_branch
    %68 = sbr.rel (0) target = $region17
  $region16: #{text_embedder_forward.3} parent=0 // pred_region
    _
  $region17: #{text_embedder_forward.3} parent=0 // pred_fallthru
    _
  // Predicated region
  $region18: #{text_embedder_forward.3} parent=0 // pred_check
    _
  $region19: #{text_embedder_forward.3} parent=0 // pred_check_branch
    %70 = sbr.rel (0) target = $region21
  $region20: #{text_embedder_forward.3} parent=0 // pred_region
    _
  $region21: #{text_embedder_forward.3} parent=0 // pred_fallthru
    _

// kernel: text_embedder_forward.5
$region0: #{text_embedder_forward.5}
  #allocation0 [shape = 'u32[]', space=smem, size = 0x4, offset = 0x4, fixed_abs, tag = 'smem constant byte address 0x4 - core index']
  #allocation1 [shape = 'u32[144,128]{1,0:T(1,128)}', space=vmem, size = 0x12000, scoped, tag = 'internal scratch']
  %s0 = inlined_call_operand.vmem [shape: bf16[2,8,128], index: 0, kind: input, shape index: {}, may-alias: {0,14}]
  %s1 = inlined_call_operand.vmem [shape: f32[2,1,8], index: 1, kind: input, shape index: {}]
  %s2 = inlined_call_operand.vmem [shape: bf16[128,384], index: 2, kind: input, shape index: {}]
  %s3 = inlined_call_operand.vmem [shape: f32[1,384], index: 3, kind: input, shape index: {}]
  %s4 = inlined_call_operand.vmem [shape: bf16[128,128], index: 4, kind: input, shape index: {}]
  %s5 = inlined_call_operand.vmem [shape: f32[1,128], index: 5, kind: input, shape index: {}]
  %s6 = inlined_call_operand.vmem [shape: f32[1,128], index: 6, kind: input, shape index: {}]
  %s7 = inlined_call_operand.vmem [shape: f32[1,128], index: 7, kind: input, shape index: {}]
  %s8 = inlined_call_operand.vmem [shape: bf16[128,256], index: 8, kind: input, shape index: {}]
  %s9 = inlined_call_operand.vmem [shape: f32[1,256], index: 9, kind: input, shape index: {}]
  %s10 = inlined_call_operand.vmem [shape: bf16[256,128], index: 10, kind: input, shape index: {}]
  %s11 = inlined_call_operand.vmem [shape: f32[1,128], index: 11, kind: input, shape index: {}]
  %s12 = inlined_call_operand.vmem [shape: f32[1,128], index: 12, kind: input, shape index: {}]
  %s13 = inlined_call_operand.vmem [shape: f32[1,128], index: 13, kind: input, shape index: {}]
  %s14 = inlined_call_operand.vmem [shape: bf16[2,8,128], index: 14, kind: output, shape index: {}, may-alias: {0,14}]
  %s15 = sld [smem:[#allocation0]]
  $region89: #{text_embedder_forward.5} parent=0
    _
  %s17 = ssub.s32 1, %s15
  %s18 = scalar_select 0, %s17, %s15
  loop: start=0, step=1, limit=4
  $region2: #{text_embedder_forward.5} parent=0 // loop_pre_header
    _
  $region3: #{text_embedder_forward.5} parent=0 // loop_header
    %s20 = sphi 0, %s24
    %p21 = scmp.ge.s32.totalorder %s20, 4
    %s30 = sphi 0, %s32
    %s33 = sphi 0, %s30
    %s34 = sphi 0, %s33
    %s50 = sphi 0, %s34
    %s56 = sphi 0, %s58
    %s59 = sphi 0, %s56
    %s60 = sphi 0, %s59
    %s76 = sphi 0, %s60
    %s80 = sphi 0, %s80
    %s82 = sphi 0, %s80
    %s83 = sphi 0, %s82
    %s97 = sphi 0, %s83
    %s101 = sphi 0, %s101
    %s103 = sphi 0, %s101
    %s104 = sphi 0, %s103
    %s118 = sphi 0, %s104
    %s122 = sphi 0, %s122
    %s124 = sphi 0, %s122
    %s125 = sphi 0, %s124
    %s139 = sphi 0, %s125
    %s143 = sphi 0, %s143
    %s145 = sphi 0, %s143
    %s146 = sphi 0, %s145
    %s160 = sphi 0, %s146
    %s164 = sphi 0, %s164
    %s166 = sphi 0, %s164
    %s167 = sphi 0, %s166
    %s181 = sphi 0, %s167
    %s185 = sphi 0, %s185
    %s187 = sphi 0, %s185
    %s188 = sphi 0, %s187
    %s202 = sphi 0, %s188
    %s206 = sphi 0, %s206
    %s208 = sphi 0, %s206
    %s209 = sphi 0, %s208
    %s223 = sphi 0, %s209
    %s227 = sphi 0, %s227
    %s229 = sphi 0, %s227
    %s230 = sphi 0, %s229
    %s244 = sphi 0, %s230
    %s248 = sphi 0, %s248
    %s250 = sphi 0, %s248
    %s251 = sphi 0, %s250
    %s265 = sphi 0, %s251
    %s269 = sphi 0, %s269
    %s271 = sphi 0, %s269
    %s272 = sphi 0, %s271
    %s286 = sphi 0, %s272
    %s290 = sphi 0, %s290
    %s292 = sphi 0, %s290
    %s293 = sphi 0, %s292
    %s307 = sphi 0, %s293
    %s311 = sphi 0, %s311
    %s313 = sphi 0, %s311
    %s314 = sphi 0, %s313
    %s328 = sphi 0, %s314
    %s334 = sphi 0, %s336
    %s337 = sphi 0, %s334
    %s338 = sphi 0, %s337
    %s354 = sphi 0, %s338
  $region4: #{text_embedder_forward.5} parent=0 // loop_header_branch
    %23 = sbr.rel (%p21) target = $region8
  $region5: #{text_embedder_forward.5} parent=0 // loop_body
    %s25 = ssub.s32 %s20, 1
    %s26 = ssub.s32 %s20, 2
    %s27 = sadd.s32 %s20, 1
    %s28 = ssub.s32 %s20, %s27
    %p29 = scmp.eq.s32.totalorder %s28, 0
    %s31 = sadd.s32 %s30, 1
    %s32 = scalar_select %p29, %s30, %s31
    %p35 = pneg %p29
    %p36 = scmp.eq.s32.totalorder %s20, 1
    %p37 = por %p35, %p36
    %p38 = scmp.ne.s32.totalorder %s30, %s33
    %p39 = scmp.eq.s32.totalorder %s20, 0
    %p40 = por %p38, %p39
    %p41 = scmp.ne.s32.totalorder %s30, %s33
    %p42 = scmp.eq.s32.totalorder %s25, 1
    %p43 = por %p41, %p42
    %p44 = scmp.ne.s32.totalorder %s33, %s34
    %p45 = scmp.eq.s32.totalorder %s25, 0
    %p46 = por %p44, %p45
    %p47 = scmp.ne.s32.totalorder %s33, %s34
    %p48 = scmp.eq.s32.totalorder %s26, 1
    %p49 = por %p47, %p48
    %p51 = scmp.ne.s32.totalorder %s34, %s50
    %p52 = scmp.eq.s32.totalorder %s26, 0
    %p53 = por %p51, %p52
    %s54 = ssub.s32 %s20, %s27
    %p55 = scmp.eq.s32.totalorder %s54, 0
    %s57 = sadd.s32 %s56, 1
    %s58 = scalar_select %p55, %s56, %s57
    %p61 = pneg %p55
    %p62 = scmp.eq.s32.totalorder %s20, 1
    %p63 = por %p61, %p62
    %p64 = scmp.ne.s32.totalorder %s56, %s59
    %p65 = scmp.eq.s32.totalorder %s20, 0
    %p66 = por %p64, %p65
    %p67 = scmp.ne.s32.totalorder %s56, %s59
    %p68 = scmp.eq.s32.totalorder %s25, 1
    %p69 = por %p67, %p68
    %p70 = scmp.ne.s32.totalorder %s59, %s60
    %p71 = scmp.eq.s32.totalorder %s25, 0
    %p72 = por %p70, %p71
    %p73 = scmp.ne.s32.totalorder %s59, %s60
    %p74 = scmp.eq.s32.totalorder %s26, 1
    %p75 = por %p73, %p74
    %p77 = scmp.ne.s32.totalorder %s60, %s76
    %p78 = scmp.eq.s32.totalorder %s26, 0
    %p79 = por %p77, %p78
    %s81 = sadd.s32 %s80, 1
    %p84 = scmp.eq.s32.totalorder %s20, 1
    %p85 = scmp.ne.s32.totalorder %s80, %s82
    %p86 = scmp.eq.s32.totalorder %s20, 0
    %p87 = por %p85, %p86
    %p88 = scmp.ne.s32.totalorder %s80, %s82
    %p89 = scmp.eq.s32.totalorder %s25, 1
    %p90 = por %p88, %p89
    %p91 = scmp.ne.s32.totalorder %s82, %s83
    %p92 = scmp.eq.s32.totalorder %s25, 0
    %p93 = por %p91, %p92
    %p94 = scmp.ne.s32.totalorder %s82, %s83
    %p95 = scmp.eq.s32.totalorder %s26, 1
    %p96 = por %p94, %p95
    %p98 = scmp.ne.s32.totalorder %s83, %s97
    %p99 = scmp.eq.s32.totalorder %s26, 0
    %p100 = por %p98, %p99
    %s102 = sadd.s32 %s101, 1
    %p105 = scmp.eq.s32.totalorder %s20, 1
    %p106 = scmp.ne.s32.totalorder %s101, %s103
    %p107 = scmp.eq.s32.totalorder %s20, 0
    %p108 = por %p106, %p107
    %p109 = scmp.ne.s32.totalorder %s101, %s103
    %p110 = scmp.eq.s32.totalorder %s25, 1
    %p111 = por %p109, %p110
    %p112 = scmp.ne.s32.totalorder %s103, %s104
    %p113 = scmp.eq.s32.totalorder %s25, 0
    %p114 = por %p112, %p113
    %p115 = scmp.ne.s32.totalorder %s103, %s104
    %p116 = scmp.eq.s32.totalorder %s26, 1
    %p117 = por %p115, %p116
    %p119 = scmp.ne.s32.totalorder %s104, %s118
    %p120 = scmp.eq.s32.totalorder %s26, 0
    %p121 = por %p119, %p120
    %s123 = sadd.s32 %s122, 1
    %p126 = scmp.eq.s32.totalorder %s20, 1
    %p127 = scmp.ne.s32.totalorder %s122, %s124
    %p128 = scmp.eq.s32.totalorder %s20, 0
    %p129 = por %p127, %p128
    %p130 = scmp.ne.s32.totalorder %s122, %s124
    %p131 = scmp.eq.s32.totalorder %s25, 1
    %p132 = por %p130, %p131
    %p133 = scmp.ne.s32.totalorder %s124, %s125
    %p134 = scmp.eq.s32.totalorder %s25, 0
    %p135 = por %p133, %p134
    %p136 = scmp.ne.s32.totalorder %s124, %s125
    %p137 = scmp.eq.s32.totalorder %s26, 1
    %p138 = por %p136, %p137
    %p140 = scmp.ne.s32.totalorder %s125, %s139
    %p141 = scmp.eq.s32.totalorder %s26, 0
    %p142 = por %p140, %p141
    %s144 = sadd.s32 %s143, 1
    %p147 = scmp.eq.s32.totalorder %s20, 1
    %p148 = scmp.ne.s32.totalorder %s143, %s145
    %p149 = scmp.eq.s32.totalorder %s20, 0
    %p150 = por %p148, %p149
    %p151 = scmp.ne.s32.totalorder %s143, %s145
    %p152 = scmp.eq.s32.totalorder %s25, 1
    %p153 = por %p151, %p152
    %p154 = scmp.ne.s32.totalorder %s145, %s146
    %p155 = scmp.eq.s32.totalorder %s25, 0
    %p156 = por %p154, %p155
    %p157 = scmp.ne.s32.totalorder %s145, %s146
    %p158 = scmp.eq.s32.totalorder %s26, 1
    %p159 = por %p157, %p158
    %p161 = scmp.ne.s32.totalorder %s146, %s160
    %p162 = scmp.eq.s32.totalorder %s26, 0
    %p163 = por %p161, %p162
    %s165 = sadd.s32 %s164, 1
    %p168 = scmp.eq.s32.totalorder %s20, 1
    %p169 = scmp.ne.s32.totalorder %s164, %s166
    %p170 = scmp.eq.s32.totalorder %s20, 0
    %p171 = por %p169, %p170
    %p172 = scmp.ne.s32.totalorder %s164, %s166
    %p173 = scmp.eq.s32.totalorder %s25, 1
    %p174 = por %p172, %p173
    %p175 = scmp.ne.s32.totalorder %s166, %s167
    %p176 = scmp.eq.s32.totalorder %s25, 0
    %p177 = por %p175, %p176
    %p178 = scmp.ne.s32.totalorder %s166, %s167
    %p179 = scmp.eq.s32.totalorder %s26, 1
    %p180 = por %p178, %p179
    %p182 = scmp.ne.s32.totalorder %s167, %s181
    %p183 = scmp.eq.s32.totalorder %s26, 0
    %p184 = por %p182, %p183
    %s186 = sadd.s32 %s185, 1
    %p189 = scmp.eq.s32.totalorder %s20, 1
    %p190 = scmp.ne.s32.totalorder %s185, %s187
    %p191 = scmp.eq.s32.totalorder %s20, 0
    %p192 = por %p190, %p191
    %p193 = scmp.ne.s32.totalorder %s185, %s187
    %p194 = scmp.eq.s32.totalorder %s25, 1
    %p195 = por %p193, %p194
    %p196 = scmp.ne.s32.totalorder %s187, %s188
    %p197 = scmp.eq.s32.totalorder %s25, 0
    %p198 = por %p196, %p197
    %p199 = scmp.ne.s32.totalorder %s187, %s188
    %p200 = scmp.eq.s32.totalorder %s26, 1
    %p201 = por %p199, %p200
    %p203 = scmp.ne.s32.totalorder %s188, %s202
    %p204 = scmp.eq.s32.totalorder %s26, 0
    %p205 = por %p203, %p204
    %s207 = sadd.s32 %s206, 1
    %p210 = scmp.eq.s32.totalorder %s20, 1
    %p211 = scmp.ne.s32.totalorder %s206, %s208
    %p212 = scmp.eq.s32.totalorder %s20, 0
    %p213 = por %p211, %p212
    %p214 = scmp.ne.s32.totalorder %s206, %s208
    %p215 = scmp.eq.s32.totalorder %s25, 1
    %p216 = por %p214, %p215
    %p217 = scmp.ne.s32.totalorder %s208, %s209
    %p218 = scmp.eq.s32.totalorder %s25, 0
    %p219 = por %p217, %p218
    %p220 = scmp.ne.s32.totalorder %s208, %s209
    %p221 = scmp.eq.s32.totalorder %s26, 1
    %p222 = por %p220, %p221
    %p224 = scmp.ne.s32.totalorder %s209, %s223
    %p225 = scmp.eq.s32.totalorder %s26, 0
    %p226 = por %p224, %p225
    %s228 = sadd.s32 %s227, 1
    %p231 = scmp.eq.s32.totalorder %s20, 1
    %p232 = scmp.ne.s32.totalorder %s227, %s229
    %p233 = scmp.eq.s32.totalorder %s20, 0
    %p234 = por %p232, %p233
    %p235 = scmp.ne.s32.totalorder %s227, %s229
    %p236 = scmp.eq.s32.totalorder %s25, 1
    %p237 = por %p235, %p236
    %p238 = scmp.ne.s32.totalorder %s229, %s230
    %p239 = scmp.eq.s32.totalorder %s25, 0
    %p240 = por %p238, %p239
    %p241 = scmp.ne.s32.totalorder %s229, %s230
    %p242 = scmp.eq.s32.totalorder %s26, 1
    %p243 = por %p241, %p242
    %p245 = scmp.ne.s32.totalorder %s230, %s244
    %p246 = scmp.eq.s32.totalorder %s26, 0
    %p247 = por %p245, %p246
    %s249 = sadd.s32 %s248, 1
    %p252 = scmp.eq.s32.totalorder %s20, 1
    %p253 = scmp.ne.s32.totalorder %s248, %s250
    %p254 = scmp.eq.s32.totalorder %s20, 0
    %p255 = por %p253, %p254
    %p256 = scmp.ne.s32.totalorder %s248, %s250
    %p257 = scmp.eq.s32.totalorder %s25, 1
    %p258 = por %p256, %p257
    %p259 = scmp.ne.s32.totalorder %s250, %s251
    %p260 = scmp.eq.s32.totalorder %s25, 0
    %p261 = por %p259, %p260
    %p262 = scmp.ne.s32.totalorder %s250, %s251
    %p263 = scmp.eq.s32.totalorder %s26, 1
    %p264 = por %p262, %p263
    %p266 = scmp.ne.s32.totalorder %s251, %s265
    %p267 = scmp.eq.s32.totalorder %s26, 0
    %p268 = por %p266, %p267
    %s270 = sadd.s32 %s269, 1
    %p273 = scmp.eq.s32.totalorder %s20, 1
    %p274 = scmp.ne.s32.totalorder %s269, %s271
    %p275 = scmp.eq.s32.totalorder %s20, 0
    %p276 = por %p274, %p275
    %p277 = scmp.ne.s32.totalorder %s269, %s271
    %p278 = scmp.eq.s32.totalorder %s25, 1
    %p279 = por %p277, %p278
    %p280 = scmp.ne.s32.totalorder %s271, %s272
    %p281 = scmp.eq.s32.totalorder %s25, 0
    %p282 = por %p280, %p281
    %p283 = scmp.ne.s32.totalorder %s271, %s272
    %p284 = scmp.eq.s32.totalorder %s26, 1
    %p285 = por %p283, %p284
    %p287 = scmp.ne.s32.totalorder %s272, %s286
    %p288 = scmp.eq.s32.totalorder %s26, 0
    %p289 = por %p287, %p288
    %s291 = sadd.s32 %s290, 1
    %p294 = scmp.eq.s32.totalorder %s20, 1
    %p295 = scmp.ne.s32.totalorder %s290, %s292
    %p296 = scmp.eq.s32.totalorder %s20, 0
    %p297 = por %p295, %p296
    %p298 = scmp.ne.s32.totalorder %s290, %s292
    %p299 = scmp.eq.s32.totalorder %s25, 1
    %p300 = por %p298, %p299
    %p301 = scmp.ne.s32.totalorder %s292, %s293
    %p302 = scmp.eq.s32.totalorder %s25, 0
    %p303 = por %p301, %p302
    %p304 = scmp.ne.s32.totalorder %s292, %s293
    %p305 = scmp.eq.s32.totalorder %s26, 1
    %p306 = por %p304, %p305
    %p308 = scmp.ne.s32.totalorder %s293, %s307
    %p309 = scmp.eq.s32.totalorder %s26, 0
    %p310 = por %p308, %p309
    %s312 = sadd.s32 %s311, 1
    %p315 = scmp.eq.s32.totalorder %s20, 1
    %p316 = scmp.ne.s32.totalorder %s311, %s313
    %p317 = scmp.eq.s32.totalorder %s20, 0
    %p318 = por %p316, %p317
    %p319 = scmp.ne.s32.totalorder %s311, %s313
    %p320 = scmp.eq.s32.totalorder %s25, 1
    %p321 = por %p319, %p320
    %p322 = scmp.ne.s32.totalorder %s313, %s314
    %p323 = scmp.eq.s32.totalorder %s25, 0
    %p324 = por %p322, %p323
    %p325 = scmp.ne.s32.totalorder %s313, %s314
    %p326 = scmp.eq.s32.totalorder %s26, 1
    %p327 = por %p325, %p326
    %p329 = scmp.ne.s32.totalorder %s314, %s328
    %p330 = scmp.eq.s32.totalorder %s26, 0
    %p331 = por %p329, %p330
    %s332 = ssub.s32 %s20, %s27
    %p333 = scmp.eq.s32.totalorder %s332, 0
    %s335 = sadd.s32 %s334, 1
    %s336 = scalar_select %p333, %s334, %s335
    %p339 = pneg %p333
    %p340 = scmp.eq.s32.totalorder %s20, 1
    %p341 = por %p339, %p340
    %p342 = scmp.ne.s32.totalorder %s334, %s337
    %p343 = scmp.eq.s32.totalorder %s20, 0
    %p344 = por %p342, %p343
    %p345 = scmp.ne.s32.totalorder %s334, %s337
    %p346 = scmp.eq.s32.totalorder %s25, 1
    %p347 = por %p345, %p346
    %p348 = scmp.ne.s32.totalorder %s337, %s338
    %p349 = scmp.eq.s32.totalorder %s25, 0
    %p350 = por %p348, %p349
    %p351 = scmp.ne.s32.totalorder %s337, %s338
    %p352 = scmp.eq.s32.totalorder %s26, 1
    %p353 = por %p351, %p352
    %p355 = scmp.ne.s32.totalorder %s338, %s354
    %p356 = scmp.eq.s32.totalorder %s26, 0
    %p357 = por %p355, %p356
    %p358 = scmp.le.s32.totalorder 1, %s20
    %p359 = scmp.lt.s32.totalorder %s20, 3
    %p360 = pnand %p358, %p359
    %p361 = pneg %p360
    // Predicated region
    $region9: #{text_embedder_forward.5} parent=5 // pred_check
      _
    $region10: #{text_embedder_forward.5} parent=5 // pred_check_branch
      %363 = sbr.rel (%p360) target = $region12
    $region11: #{text_embedder_forward.5} parent=5 // pred_region
      %s364 = ssub.s32 %s20, 1
      // Predicated region
      $region13: #{text_embedder_forward.5} parent=11 // pred_check
        %p365 = pneg %p93
      $region14: #{text_embedder_forward.5} parent=11 // pred_check_branch
        %367 = sbr.rel (%p365) target = $region16
      $region15: #{text_embedder_forward.5} parent=11 // pred_region
        _
      $region16: #{text_embedder_forward.5} parent=11 // pred_fallthru
        _
      // Predicated region
      $region17: #{text_embedder_forward.5} parent=11 // pred_check
        %p368 = pneg %p114
      $region18: #{text_embedder_forward.5} parent=11 // pred_check_branch
        %370 = sbr.rel (%p368) target = $region20
      $region19: #{text_embedder_forward.5} parent=11 // pred_region
        _
      $region20: #{text_embedder_forward.5} parent=11 // pred_fallthru
        _
      // Predicated region
      $region21: #{text_embedder_forward.5} parent=11 // pred_check
        %p371 = pneg %p135
      $region22: #{text_embedder_forward.5} parent=11 // pred_check_branch
        %373 = sbr.rel (%p371) target = $region24
      $region23: #{text_embedder_forward.5} parent=11 // pred_region
        _
      $region24: #{text_embedder_forward.5} parent=11 // pred_fallthru
        _
      // Predicated region
      $region25: #{text_embedder_forward.5} parent=11 // pred_check
        %p374 = pneg %p156
      $region26: #{text_embedder_forward.5} parent=11 // pred_check_branch
        %376 = sbr.rel (%p374) target = $region28
      $region27: #{text_embedder_forward.5} parent=11 // pred_region
        _
      $region28: #{text_embedder_forward.5} parent=11 // pred_fallthru
        _
      // Predicated region
      $region29: #{text_embedder_forward.5} parent=11 // pred_check
        %p377 = pneg %p177
      $region30: #{text_embedder_forward.5} parent=11 // pred_check_branch
        %379 = sbr.rel (%p377) target = $region32
      $region31: #{text_embedder_forward.5} parent=11 // pred_region
        _
      $region32: #{text_embedder_forward.5} parent=11 // pred_fallthru
        _
      // Predicated region
      $region33: #{text_embedder_forward.5} parent=11 // pred_check
        %p380 = pneg %p198
      $region34: #{text_embedder_forward.5} parent=11 // pred_check_branch
        %382 = sbr.rel (%p380) target = $region36
      $region35: #{text_embedder_forward.5} parent=11 // pred_region
        _
      $region36: #{text_embedder_forward.5} parent=11 // pred_fallthru
        _
      // Predicated region
      $region37: #{text_embedder_forward.5} parent=11 // pred_check
        %p383 = pneg %p219
      $region38: #{text_embedder_forward.5} parent=11 // pred_check_branch
        %385 = sbr.rel (%p383) target = $region40
      $region39: #{text_embedder_forward.5} parent=11 // pred_region
        _
      $region40: #{text_embedder_forward.5} parent=11 // pred_fallthru
        _
      // Predicated region
      $region41: #{text_embedder_forward.5} parent=11 // pred_check
        %p386 = pneg %p240
      $region42: #{text_embedder_forward.5} parent=11 // pred_check_branch
        %388 = sbr.rel (%p386) target = $region44
      $region43: #{text_embedder_forward.5} parent=11 // pred_region
        _
      $region44: #{text_embedder_forward.5} parent=11 // pred_fallthru
        _
      // Predicated region
      $region45: #{text_embedder_forward.5} parent=11 // pred_check
        %p389 = pneg %p261
      $region46: #{text_embedder_forward.5} parent=11 // pred_check_branch
        %391 = sbr.rel (%p389) target = $region48
      $region47: #{text_embedder_forward.5} parent=11 // pred_region
        _
      $region48: #{text_embedder_forward.5} parent=11 // pred_fallthru
        _
      // Predicated region
      $region49: #{text_embedder_forward.5} parent=11 // pred_check
        %p392 = pneg %p282
      $region50: #{text_embedder_forward.5} parent=11 // pred_check_branch
        %394 = sbr.rel (%p392) target = $region52
      $region51: #{text_embedder_forward.5} parent=11 // pred_region
        _
      $region52: #{text_embedder_forward.5} parent=11 // pred_fallthru
        _
      // Predicated region
      $region53: #{text_embedder_forward.5} parent=11 // pred_check
        %p395 = pneg %p303
      $region54: #{text_embedder_forward.5} parent=11 // pred_check_branch
        %397 = sbr.rel (%p395) target = $region56
      $region55: #{text_embedder_forward.5} parent=11 // pred_region
        _
      $region56: #{text_embedder_forward.5} parent=11 // pred_fallthru
        _
      // Predicated region
      $region57: #{text_embedder_forward.5} parent=11 // pred_check
        %p398 = pneg %p324
      $region58: #{text_embedder_forward.5} parent=11 // pred_check_branch
        %400 = sbr.rel (%p398) target = $region60
      $region59: #{text_embedder_forward.5} parent=11 // pred_region
        _
      $region60: #{text_embedder_forward.5} parent=11 // pred_fallthru
        _
    $region12: #{text_embedder_forward.5} parent=5 // pred_fallthru
      _
    %p401 = scmp.lt.s32.totalorder %s20, 2
    // Predicated region
    $region61: #{text_embedder_forward.5} parent=5 // pred_check
      %p402 = pneg %p401
    $region62: #{text_embedder_forward.5} parent=5 // pred_check_branch
      %404 = sbr.rel (%p402) target = $region64
    $region63: #{text_embedder_forward.5} parent=5 // pred_region
      // Predicated region
      $region65: #{text_embedder_forward.5} parent=63 // pred_check
        %p405 = pneg %p40
      $region66: #{text_embedder_forward.5} parent=63 // pred_check_branch
        %407 = sbr.rel (%p405) target = $region68
      $region67: #{text_embedder_forward.5} parent=63 // pred_region
        %p408 = scmp.lt.s32.totalorder %s20, 1
        %s409 = scalar_select %p408, %s20, 1
        %s410 = smul.addr %s409, 4
        %s411 = scalar_lea.vmem %s0, %s410
      $region68: #{text_embedder_forward.5} parent=63 // pred_fallthru
        _
      // Predicated region
      $region69: #{text_embedder_forward.5} parent=63 // pred_check
        %p412 = pneg %p66
      $region70: #{text_embedder_forward.5} parent=63 // pred_check_branch
        %414 = sbr.rel (%p412) target = $region72
      $region71: #{text_embedder_forward.5} parent=63 // pred_region
        %p415 = scmp.lt.s32.totalorder %s20, 1
        %s416 = scalar_select %p415, %s20, 1
        %s417 = scalar_lea.vmem %s1, %s416
      $region72: #{text_embedder_forward.5} parent=63 // pred_fallthru
        _
    $region64: #{text_embedder_forward.5} parent=5 // pred_fallthru
      _
    %p418 = scmp.le.s32.totalorder 1, %s20
    %p419 = scmp.lt.s32.totalorder %s20, 3
    %p420 = pnand %p418, %p419
    %p421 = pneg %p420
    // Predicated region
    $region73: #{text_embedder_forward.5} parent=5 // pred_check
      _
    $region74: #{text_embedder_forward.5} parent=5 // pred_check_branch
      %423 = sbr.rel (%p420) target = $region76
    $region75: #{text_embedder_forward.5} parent=5 // pred_region
      %s424 = ssub.s32 %s20, 1
      %p425 = scmp.lt.s32.totalorder %s25, 1
      %s426 = scalar_select %p425, %s25, 1
      %s427 = smul.addr %s426, 4
      %s428 = scalar_lea.vmem %s0, %s427
      %p429 = pneg %p46
      %p430 = pneg %p43
      %p431 = scmp.lt.s32.totalorder %s25, 1
      %s432 = scalar_select %p431, %s25, 1
      %s433 = scalar_lea.vmem %s1, %s432
      %p434 = pneg %p72
      %p435 = pneg %p69
      %p436 = pneg %p93
      %p437 = pneg %p90
      %p438 = pneg %p114
      %p439 = pneg %p111
      %p440 = pneg %p135
      %p441 = pneg %p132
      %p442 = pneg %p156
      %p443 = pneg %p153
      %p444 = pneg %p177
      %p445 = pneg %p174
      %p446 = pneg %p198
      %p447 = pneg %p195
      %p448 = pneg %p219
      %p449 = pneg %p216
      %p450 = pneg %p240
      %p451 = pneg %p237
      %p452 = pneg %p261
      %p453 = pneg %p258
      %p454 = pneg %p282
      %p455 = pneg %p279
      %p456 = pneg %p303
      %p457 = pneg %p300
      %p458 = pneg %p324
      %p459 = pneg %p321
      %p460 = pneg %p350
      %p461 = pneg %p347
      %p462 = scmp.lt.s32.totalorder %s25, 1
      %s463 = scalar_select %p462, %s25, 1
      %s464 = smul.addr %s463, 4
      %s465 = scalar_lea.vmem %s14, %s464
      %p466 = scmp.lt.s32.totalorder %s25, 1
      %s467 = scalar_select %p466, %s25, 1
      %s468 = smul.addr %s467, 4
      %s469 = scalar_lea.vmem %s0, %s468
      %p470 = scmp.lt.s32.totalorder %s25, 1
      %s471 = scalar_select %p470, %s25, 1
      %s472 = scalar_lea.vmem %s1, %s471
      %p473 = scmp.lt.s32.totalorder %s25, 1
      %s474 = scalar_select %p473, %s25, 1
      %s475 = smul.addr %s474, 4
      %s476 = scalar_lea.vmem %s14, %s475
      %v478 = vld [vmem:[%s469] sm:$0xf]
      %v479 = vunpack.c.l.bf16 %v478
      %v480 = vld [vmem:[%s2] sm:$0xff]
      %v481 = vld [vmem:[%s2 + $0x8] sm:$0xf]
      %v482 = vld [vmem:[%s2 + $0xc] sm:$0xff]
      %v483 = vld [vmem:[%s2 + $0x14] sm:$0xf]
      %v484 = vld [vmem:[%s2 + $0x18] sm:$0xff]
      %v485 = vld [vmem:[%s2 + $0x20] sm:$0xf]
      %v486 = vld [vmem:[%s2 + $0x24] sm:$0xff]
      %v487 = vld [vmem:[%s2 + $0x2c] sm:$0xf]
      %v488 = vld [vmem:[%s2 + $0x30] sm:$0xff]
      %v489 = vld [vmem:[%s2 + $0x38] sm:$0xf]
      %v490 = vld [vmem:[%s2 + $0x3c] sm:$0xff]
      %v491 = vld [vmem:[%s2 + $0x44] sm:$0xf]
      %v492 = vld [vmem:[%s2 + $0x48] sm:$0xff]
      %v493 = vld [vmem:[%s2 + $0x50] sm:$0xf]
      %v494 = vld [vmem:[%s2 + $0x54] sm:$0xff]
      %v495 = vld [vmem:[%s2 + $0x5c] sm:$0xf]
      %v496 = vld [vmem:[%s2 + $0x60] sm:$0xff]
      %v497 = vld [vmem:[%s2 + $0x68] sm:$0xf]
      %v498 = vld [vmem:[%s2 + $0x6c] sm:$0xff]
      %v499 = vld [vmem:[%s2 + $0x74] sm:$0xf]
      %v500 = vld [vmem:[%s2 + $0x78] sm:$0xff]
      %v501 = vld [vmem:[%s2 + $0x80] sm:$0xf]
      %v502 = vld [vmem:[%s2 + $0x84] sm:$0xff]
      %v503 = vld [vmem:[%s2 + $0x8c] sm:$0xf]
      %v504 = vld [vmem:[%s2 + $0x90] sm:$0xff]
      %v505 = vld [vmem:[%s2 + $0x98] sm:$0xf]
      %v506 = vld [vmem:[%s2 + $0x9c] sm:$0xff]
      %v507 = vld [vmem:[%s2 + $0xa4] sm:$0xf]
      %v508 = vld [vmem:[%s2 + $0xa8] sm:$0xff]
      %v509 = vld [vmem:[%s2 + $0xb0] sm:$0xf]
      %v510 = vld [vmem:[%s2 + $0xb4] sm:$0xff]
      %v511 = vld [vmem:[%s2 + $0xbc] sm:$0xf]
      %v512 = vld [vmem:[%s3] sm:$0x7]
      %v514 = vlaneseq
      %v515 = vshrl.u32 %v514, 7
      %v516 = vsub.s32 0, %v515
      %v517 = vrot.slane %v512, %v516
      %v518 = vlaneseq
      %v519 = vshrl.u32 %v518, 7
      %v520 = vsub.s32 1, %v519
      %v521 = vrot.slane %v512, %v520
      %v522 = vlaneseq
      %v523 = vshrl.u32 %v522, 7
      %v524 = vsub.s32 2, %v523
      %v525 = vrot.slane %v512, %v524
      %v561 = vunpack.c.l.b16 %v480
      %v562 = vunpack.c.h.b16 %v480
      %v563 = vunpack.c.l.b16 %v481
      %v564 = vunpack.c.l.b16 %v482
      %v565 = vunpack.c.h.b16 %v482
      %v566 = vunpack.c.l.b16 %v483
      %v567 = vunpack.c.l.b16 %v484
      %v568 = vunpack.c.h.b16 %v484
      %v569 = vunpack.c.l.b16 %v485
      %v570 = vunpack.c.l.b16 %v486
      %v571 = vunpack.c.h.b16 %v486
      %v572 = vunpack.c.l.b16 %v487
      %v573 = vunpack.c.l.b16 %v488
      %v574 = vunpack.c.h.b16 %v488
      %v575 = vunpack.c.l.b16 %v489
      %v576 = vunpack.c.l.b16 %v490
      %v577 = vunpack.c.h.b16 %v490
      %v578 = vunpack.c.l.b16 %v491
      %v579 = vunpack.c.l.b16 %v492
      %v580 = vunpack.c.h.b16 %v492
      %v581 = vunpack.c.l.b16 %v493
      %v582 = vunpack.c.l.b16 %v494
      %v583 = vunpack.c.h.b16 %v494
      %v584 = vunpack.c.l.b16 %v495
      %v585 = vunpack.c.l.b16 %v496
      %v586 = vunpack.c.h.b16 %v496
      %v587 = vunpack.c.l.b16 %v497
      %v588 = vunpack.c.l.b16 %v498
      %v589 = vunpack.c.h.b16 %v498
      %v590 = vunpack.c.l.b16 %v499
      %v591 = vunpack.c.l.b16 %v500
      %v592 = vunpack.c.h.b16 %v500
      %v593 = vunpack.c.l.b16 %v501
      %v594 = vunpack.c.l.b16 %v502
      %v595 = vunpack.c.h.b16 %v502
      %v596 = vunpack.c.l.b16 %v503
      %v597 = vunpack.c.l.b16 %v504
      %v598 = vunpack.c.h.b16 %v504
      %v599 = vunpack.c.l.b16 %v505
      %v600 = vunpack.c.l.b16 %v506
      %v601 = vunpack.c.h.b16 %v506
      %v602 = vunpack.c.l.b16 %v507
      %v603 = vunpack.c.l.b16 %v508
      %v604 = vunpack.c.h.b16 %v508
      %v605 = vunpack.c.l.b16 %v509
      %v606 = vunpack.c.l.b16 %v510
      %v607 = vunpack.c.h.b16 %v510
      %v608 = vunpack.c.l.b16 %v511
      %v609 = vpack.c.b16 %v564, %v561
      %v610 = vpack.c.b16 %v565, %v562
      %v611 = vpack.c.b16 %v566, %v563
      %v612 = vpack.c.b16 %v570, %v567
      %v613 = vpack.c.b16 %v571, %v568
      %v614 = vpack.c.b16 %v572, %v569
      %v615 = vpack.c.b16 %v576, %v573
      %v616 = vpack.c.b16 %v577, %v574
      %v617 = vpack.c.b16 %v578, %v575
      %v618 = vpack.c.b16 %v582, %v579
      %v619 = vpack.c.b16 %v583, %v580
      %v620 = vpack.c.b16 %v584, %v581
      %v621 = vpack.c.b16 %v588, %v585
      %v622 = vpack.c.b16 %v589, %v586
      %v623 = vpack.c.b16 %v590, %v587
      %v624 = vpack.c.b16 %v594, %v591
      %v625 = vpack.c.b16 %v595, %v592
      %v626 = vpack.c.b16 %v596, %v593
      %v627 = vpack.c.b16 %v600, %v597
      %v628 = vpack.c.b16 %v601, %v598
      %v629 = vpack.c.b16 %v602, %v599
      %v630 = vpack.c.b16 %v606, %v603
      %v631 = vpack.c.b16 %v607, %v604
      %v632 = vpack.c.b16 %v608, %v605
      %657 = vmatprep.subr.bf16.mxu0 %v610
      %658 = vmatpush1.bf16.msra.mxu0 %v609
      %659 = vmatprep.subr.bf16.mxu0 %v613
      %660 = vmatpush1.bf16.msra.mxu0 %v612
      %661 = vmatprep.subr.bf16.mxu0 %v616
      %662 = vmatpush1.bf16.msra.mxu0 %v615
      %663 = vmatprep.subr.bf16.mxu0 %v619
      %664 = vmatpush1.bf16.msra.mxu0 %v618
      %665 = vmatprep.subr.bf16.mxu0 %v622
      %666 = vmatpush1.bf16.msra.mxu0 %v621
      %667 = vmatprep.subr.bf16.mxu0 %v625
      %668 = vmatpush1.bf16.msra.mxu0 %v624
      %669 = vmatprep.subr.bf16.mxu0 %v628
      %670 = vmatpush1.bf16.msra.mxu0 %v627
      %671 = vmatprep.subr.bf16.mxu0 %v631
      %672 = vmatpush1.bf16.msra.mxu0 %v630
      %673 = vmatprep.subr.bf16.mxu0 0
      %674 = vmatpush1.bf16.msra.mxu0 0
      %675 = vmatprep.subr.bf16.mxu0 0
      %676 = vmatpush1.bf16.msra.mxu0 0
      %677 = vmatprep.subr.bf16.mxu0 0
      %678 = vmatpush1.bf16.msra.mxu0 0
      %679 = vmatprep.subr.bf16.mxu0 0
      %680 = vmatpush1.bf16.msra.mxu0 0
      %681 = vmatprep.subr.bf16.mxu0 0
      %682 = vmatpush1.bf16.msra.mxu0 0
      %683 = vmatprep.subr.bf16.mxu0 0
      %684 = vmatpush1.bf16.msra.mxu0 0
      %685 = vmatprep.subr.bf16.mxu0 0
      %686 = vmatpush1.bf16.msra.mxu0 0
      %687 = vmatprep.subr.bf16.mxu0 0
      %688 = vmatpush1.bf16.msra.mxu0 0
      %689 = vmatprep.mubr.bf16.mxu0 0
      %690 = vmatmul.mubr.bf16.gmra.mrb[0].mxu0 %v478
      %v691 = vpop.f32.mrb[0].mxu0
      %v692 = vadd.f32 %v517, %v691
      %v693 = vpop.f32.mrb[0].mxu0
      %v694 = vadd.f32 %v521, %v693
      %v695 = vpop.f32.mrb[0].mxu0
      %v696 = vpop.f32.mrb[0].mxu0
      %697 = vdwg.mxu0
      %698 = vmatprep.subr.bf16.mxu0 0
      %699 = vmatpush1.bf16.msra.mxu0 %v611
      %700 = vmatprep.subr.bf16.mxu0 0
      %701 = vmatpush1.bf16.msra.mxu0 %v614
      %702 = vmatprep.subr.bf16.mxu0 0
      %703 = vmatpush1.bf16.msra.mxu0 %v617
      %704 = vmatprep.subr.bf16.mxu0 0
      %705 = vmatpush1.bf16.msra.mxu0 %v620
      %706 = vmatprep.subr.bf16.mxu0 0
      %707 = vmatpush1.bf16.msra.mxu0 %v623
      %708 = vmatprep.subr.bf16.mxu0 0
      %709 = vmatpush1.bf16.msra.mxu0 %v626
      %710 = vmatprep.subr.bf16.mxu0 0
      %711 = vmatpush1.bf16.msra.mxu0 %v629
      %712 = vmatprep.subr.bf16.mxu0 0
      %713 = vmatpush1.bf16.msra.mxu0 %v632
      %714 = vmatprep.subr.bf16.mxu0 0
      %715 = vmatpush1.bf16.msra.mxu0 0
      %716 = vmatprep.subr.bf16.mxu0 0
      %717 = vmatpush1.bf16.msra.mxu0 0
      %718 = vmatprep.subr.bf16.mxu0 0
      %719 = vmatpush1.bf16.msra.mxu0 0
      %720 = vmatprep.subr.bf16.mxu0 0
      %721 = vmatpush1.bf16.msra.mxu0 0
      %722 = vmatprep.subr.bf16.mxu0 0
      %723 = vmatpush1.bf16.msra.mxu0 0
      %724 = vmatprep.subr.bf16.mxu0 0
      %725 = vmatpush1.bf16.msra.mxu0 0
      %726 = vmatprep.subr.bf16.mxu0 0
      %727 = vmatpush1.bf16.msra.mxu0 0
      %728 = vmatprep.subr.bf16.mxu0 0
      %729 = vmatpush1.bf16.msra.mxu0 0
      %730 = vmatprep.mubr.bf16.mxu0 0
      %731 = vmatmul.mubr.bf16.gmra.mrb[0].mxu0 %v478
      %v732 = vpop.f32.mrb[0].mxu0
      %v733 = vadd.f32 %v525, %v732
      %v734 = vpop.f32.mrb[0].mxu0
      %v735 = vpop.f32.mrb[0].mxu0
      %v736 = vpop.f32.mrb[0].mxu0
      %737 = vdwg.mxu0
      %v738 = vmul.f32 %v692, 0.17677669
      %v739 = vpack.c.bf16 %v738, %v738
      %741 = vrot.lane.b32.xlu0 %v739, 96
      %v742 = vpop.permute.xlu0 %741
      %743 = vrot.lane.b32.xlu0 %v739, 64
      %v744 = vpop.permute.xlu0 %743
      %745 = vrot.lane.b32.xlu0 %v739, 32
      %v746 = vpop.permute.xlu0 %745
      %v747 = vpack.c.bf16 %v694, %v694
      %749 = vrot.lane.b32.xlu0 %v747, 96
      %v750 = vpop.permute.xlu0 %749
      %751 = vrot.lane.b32.xlu0 %v747, 64
      %v752 = vpop.permute.xlu0 %751
      %753 = vrot.lane.b32.xlu0 %v747, 32
      %v754 = vpop.permute.xlu0 %753
      %v755 = vpack.c.bf16 %v733, %v733
      %757 = vrot.lane.b32.xlu0 %v755, 96
      %v758 = vpop.permute.xlu0 %757
      %759 = vrot.lane.b32.xlu0 %v755, 64
      %v760 = vpop.permute.xlu0 %759
      %761 = vrot.lane.b32.xlu0 %v755, 32
      %v762 = vpop.permute.xlu0 %761
      %v763 = vld [vmem:[%s472] sm:$0x1]
      %v764 = vsub.f32 %v763, 1.0
      %v765 = vmul.f32 %v764, 1e+09
      %v767 = vlaneseq
      %v768 = vshrl.u32 %v767, 7
      %v769 = vsub.s32 0, %v768
      %v770 = vrot.slane %v765, %v769
      %vm772 = vcmask 261120
      %v774 = vsel %vm772, %v739, 0
      %v777 = vsel %vm772, %v747, 0
      %779 = vmatprep.subr.bf16.mxu0 0
      %780 = vmatpush1.bf16.xpose.msra.mxu0 %v777
      %781 = vmatprep.subr.bf16.mxu0 0
      %782 = vmatpush1.bf16.xpose.msra.mxu0 0
      %783 = vmatprep.subr.bf16.mxu0 0
      %784 = vmatpush1.bf16.xpose.msra.mxu0 0
      %785 = vmatprep.subr.bf16.mxu0 0
      %786 = vmatpush1.bf16.xpose.msra.mxu0 0
      %787 = vmatprep.subr.bf16.mxu0 0
      %788 = vmatpush1.bf16.xpose.msra.mxu0 0
      %789 = vmatprep.subr.bf16.mxu0 0
      %790 = vmatpush1.bf16.xpose.msra.mxu0 0
      %791 = vmatprep.subr.bf16.mxu0 0
      %792 = vmatpush1.bf16.xpose.msra.mxu0 0
      %793 = vmatprep.subr.bf16.mxu0 0
      %794 = vmatpush1.bf16.xpose.msra.mxu0 0
      %795 = vmatprep.subr.bf16.mxu0 0
      %796 = vmatpush1.bf16.xpose.msra.mxu0 0
      %797 = vmatprep.subr.bf16.mxu0 0
      %798 = vmatpush1.bf16.xpose.msra.mxu0 0
      %799 = vmatprep.subr.bf16.mxu0 0
      %800 = vmatpush1.bf16.xpose.msra.mxu0 0
      %801 = vmatprep.subr.bf16.mxu0 0
      %802 = vmatpush1.bf16.xpose.msra.mxu0 0
      %803 = vmatprep.subr.bf16.mxu0 0
      %804 = vmatpush1.bf16.xpose.msra.mxu0 0
      %805 = vmatprep.subr.bf16.mxu0 0
      %806 = vmatpush1.bf16.xpose.msra.mxu0 0
      %807 = vmatprep.subr.bf16.mxu0 0
      %808 = vmatpush1.bf16.xpose.msra.mxu0 0
      %809 = vmatprep.subr.bf16.mxu0 0
      %810 = vmatpush1.bf16.xpose.msra.mxu0 0
      %811 = vmatprep.mubr.bf16.mxu0 0
      %812 = vmatmul.mubr.bf16.gmra.mrb[0].mxu0 %v774
      %v813 = vpop.f32.mrb[0].mxu0
      %v814 = vadd.f32 %v770, %v813
      %v815 = vpop.f32.mrb[0].mxu0
      %v816 = vpop.f32.mrb[0].mxu0
      %v817 = vpop.f32.mrb[0].mxu0
      %818 = vdwg.mxu0
      %v820 = vsel %vm772, %v742, 0
      %v823 = vsel %vm772, %v750, 0
      %825 = vmatprep.subr.bf16.mxu0 0
      %826 = vmatpush1.bf16.xpose.msra.mxu0 %v823
      %827 = vmatprep.subr.bf16.mxu0 0
      %828 = vmatpush1.bf16.xpose.msra.mxu0 0
      %829 = vmatprep.subr.bf16.mxu0 0
      %830 = vmatpush1.bf16.xpose.msra.mxu0 0
      %831 = vmatprep.subr.bf16.mxu0 0
      %832 = vmatpush1.bf16.xpose.msra.mxu0 0
      %833 = vmatprep.subr.bf16.mxu0 0
      %834 = vmatpush1.bf16.xpose.msra.mxu0 0
      %835 = vmatprep.subr.bf16.mxu0 0
      %836 = vmatpush1.bf16.xpose.msra.mxu0 0
      %837 = vmatprep.subr.bf16.mxu0 0
      %838 = vmatpush1.bf16.xpose.msra.mxu0 0
      %839 = vmatprep.subr.bf16.mxu0 0
      %840 = vmatpush1.bf16.xpose.msra.mxu0 0
      %841 = vmatprep.subr.bf16.mxu0 0
      %842 = vmatpush1.bf16.xpose.msra.mxu0 0
      %843 = vmatprep.subr.bf16.mxu0 0
      %844 = vmatpush1.bf16.xpose.msra.mxu0 0
      %845 = vmatprep.subr.bf16.mxu0 0
      %846 = vmatpush1.bf16.xpose.msra.mxu0 0
      %847 = vmatprep.subr.bf16.mxu0 0
      %848 = vmatpush1.bf16.xpose.msra.mxu0 0
      %849 = vmatprep.subr.bf16.mxu0 0
      %850 = vmatpush1.bf16.xpose.msra.mxu0 0
      %851 = vmatprep.subr.bf16.mxu0 0
      %852 = vmatpush1.bf16.xpose.msra.mxu0 0
      %853 = vmatprep.subr.bf16.mxu0 0
      %854 = vmatpush1.bf16.xpose.msra.mxu0 0
      %855 = vmatprep.subr.bf16.mxu0 0
      %856 = vmatpush1.bf16.xpose.msra.mxu0 0
      %857 = vmatprep.mubr.bf16.mxu0 0
      %858 = vmatmul.mubr.bf16.gmra.mrb[0].mxu0 %v820
      %v859 = vpop.f32.mrb[0].mxu0
      %v860 = vadd.f32 %v770, %v859
      %v861 = vpop.f32.mrb[0].mxu0
      %v862 = vpop.f32.mrb[0].mxu0
      %v863 = vpop.f32.mrb[0].mxu0
      %864 = vdwg.mxu0
      %v866 = vsel %vm772, %v744, 0
      %v869 = vsel %vm772, %v752, 0
      %871 = vmatprep.subr.bf16.mxu0 0
      %872 = vmatpush1.bf16.xpose.msra.mxu0 %v869
      %873 = vmatprep.subr.bf16.mxu0 0
      %874 = vmatpush1.bf16.xpose.msra.mxu0 0
      %875 = vmatprep.subr.bf16.mxu0 0
      %876 = vmatpush1.bf16.xpose.msra.mxu0 0
      %877 = vmatprep.subr.bf16.mxu0 0
      %878 = vmatpush1.bf16.xpose.msra.mxu0 0
      %879 = vmatprep.subr.bf16.mxu0 0
      %880 = vmatpush1.bf16.xpose.msra.mxu0 0
      %881 = vmatprep.subr.bf16.mxu0 0
      %882 = vmatpush1.bf16.xpose.msra.mxu0 0
      %883 = vmatprep.subr.bf16.mxu0 0
      %884 = vmatpush1.bf16.xpose.msra.mxu0 0
      %885 = vmatprep.subr.bf16.mxu0 0
      %886 = vmatpush1.bf16.xpose.msra.mxu0 0
      %887 = vmatprep.subr.bf16.mxu0 0
      %888 = vmatpush1.bf16.xpose.msra.mxu0 0
      %889 = vmatprep.subr.bf16.mxu0 0
      %890 = vmatpush1.bf16.xpose.msra.mxu0 0
      %891 = vmatprep.subr.bf16.mxu0 0
      %892 = vmatpush1.bf16.xpose.msra.mxu0 0
      %893 = vmatprep.subr.bf16.mxu0 0
      %894 = vmatpush1.bf16.xpose.msra.mxu0 0
      %895 = vmatprep.subr.bf16.mxu0 0
      %896 = vmatpush1.bf16.xpose.msra.mxu0 0
      %897 = vmatprep.subr.bf16.mxu0 0
      %898 = vmatpush1.bf16.xpose.msra.mxu0 0
      %899 = vmatprep.subr.bf16.mxu0 0
      %900 = vmatpush1.bf16.xpose.msra.mxu0 0
      %901 = vmatprep.subr.bf16.mxu0 0
      %902 = vmatpush1.bf16.xpose.msra.mxu0 0
      %903 = vmatprep.mubr.bf16.mxu0 0
      %904 = vmatmul.mubr.bf16.gmra.mrb[0].mxu0 %v866
      %v905 = vpop.f32.mrb[0].mxu0
      %v906 = vadd.f32 %v770, %v905
      %v907 = vpop.f32.mrb[0].mxu0
      %v908 = vpop.f32.mrb[0].mxu0
      %v909 = vpop.f32.mrb[0].mxu0
      %910 = vdwg.mxu0
      %v912 = vsel %vm772, %v746, 0
      %v915 = vsel %vm772, %v754, 0
      %917 = vmatprep.subr.bf16.mxu0 0
      %918 = vmatpush1.bf16.xpose.msra.mxu0 %v915
      %919 = vmatprep.subr.bf16.mxu0 0
      %920 = vmatpush1.bf16.xpose.msra.mxu0 0
      %921 = vmatprep.subr.bf16.mxu0 0
      %922 = vmatpush1.bf16.xpose.msra.mxu0 0
      %923 = vmatprep.subr.bf16.mxu0 0
      %924 = vmatpush1.bf16.xpose.msra.mxu0 0
      %925 = vmatprep.subr.bf16.mxu0 0
      %926 = vmatpush1.bf16.xpose.msra.mxu0 0
      %927 = vmatprep.subr.bf16.mxu0 0
      %928 = vmatpush1.bf16.xpose.msra.mxu0 0
      %929 = vmatprep.subr.bf16.mxu0 0
      %930 = vmatpush1.bf16.xpose.msra.mxu0 0
      %931 = vmatprep.subr.bf16.mxu0 0
      %932 = vmatpush1.bf16.xpose.msra.mxu0 0
      %933 = vmatprep.subr.bf16.mxu0 0
      %934 = vmatpush1.bf16.xpose.msra.mxu0 0
      %935 = vmatprep.subr.bf16.mxu0 0
      %936 = vmatpush1.bf16.xpose.msra.mxu0 0
      %937 = vmatprep.subr.bf16.mxu0 0
      %938 = vmatpush1.bf16.xpose.msra.mxu0 0
      %939 = vmatprep.subr.bf16.mxu0 0
      %940 = vmatpush1.bf16.xpose.msra.mxu0 0
      %941 = vmatprep.subr.bf16.mxu0 0
      %942 = vmatpush1.bf16.xpose.msra.mxu0 0
      %943 = vmatprep.subr.bf16.mxu0 0
      %944 = vmatpush1.bf16.xpose.msra.mxu0 0
      %945 = vmatprep.subr.bf16.mxu0 0
      %946 = vmatpush1.bf16.xpose.msra.mxu0 0
      %947 = vmatprep.subr.bf16.mxu0 0
      %948 = vmatpush1.bf16.xpose.msra.mxu0 0
      %949 = vmatprep.mubr.bf16.mxu0 0
      %950 = vmatmul.mubr.bf16.gmra.mrb[0].mxu0 %v912
      %v951 = vpop.f32.mrb[0].mxu0
      %v952 = vadd.f32 %v770, %v951
      %v953 = vpop.f32.mrb[0].mxu0
      %v954 = vpop.f32.mrb[0].mxu0
      %v955 = vpop.f32.mrb[0].mxu0
      %956 = vdwg.mxu0
      %vm957 = vcmask 64512
      %v958 = vsel %vm957, %v814, -inf
      %959 = vmax.xlane.f32.xlu0 %v958
      %v960 = vpop.xlane.xlu0 %959
      %v961 = vsel %vm957, %v860, -inf
      %962 = vmax.xlane.f32.xlu0 %v961
      %v963 = vpop.xlane.xlu0 %962
      %v964 = vsel %vm957, %v906, -inf
      %965 = vmax.xlane.f32.xlu0 %v964
      %v966 = vpop.xlane.xlu0 %965
      %v967 = vsel %vm957, %v952, -inf
      %968 = vmax.xlane.f32.xlu0 %v967
      %v969 = vpop.xlane.xlu0 %968
      %v970 = vsub.f32 %v814, %v960
      %v971 = vsub.f32 %v860, %v963
      %v972 = vsub.f32 %v906, %v966
      %v973 = vsub.f32 %v952, %v969
      %v974 = vmul.f32 %v970, 1.442695
      %v975 = vpow.pop %v974
      %v976 = vmul.f32 %v971, 1.442695
      %v977 = vpow.pop %v976
      %v978 = vmul.f32 %v972, 1.442695
      %v979 = vpow.pop %v978
      %v980 = vmul.f32 %v973, 1.442695
      %v981 = vpow.pop %v980
      %v982 = vsel %vm957, %v975, 0.0
      %983 = vadd.xlane.f32.xlu0 %v982
      %v984 = vpop.xlane.xlu0 %983
      %v985 = vsel %vm957, %v977, 0.0
      %986 = vadd.xlane.f32.xlu0 %v985
      %v987 = vpop.xlane.xlu0 %986
      %v988 = vsel %vm957, %v979, 0.0
      %989 = vadd.xlane.f32.xlu0 %v988
      %v990 = vpop.xlane.xlu0 %989
      %v991 = vsel %vm957, %v981, 0.0
      %992 = vadd.xlane.f32.xlu0 %v991
      %v993 = vpop.xlane.xlu0 %992
      %v994 = vrcp.pop %v984
      %v995 = vrcp.pop %v987
      %v996 = vrcp.pop %v990
      %v997 = vrcp.pop %v993
      %v998 = vmul.f32 %v975, %v994
      %v999 = vmul.f32 %v977, %v995
      %v1000 = vmul.f32 %v979, %v996
      %v1001 = vmul.f32 %v981, %v997
      %v1002 = vpack.c.bf16 %v998, %v998
      %v1003 = vpack.c.bf16 %v999, %v999
      %v1004 = vpack.c.bf16 %v1000, %v1000
      %v1005 = vpack.c.bf16 %v1001, %v1001
      %v1007 = vsel %vm957, %v1002, 0
      %vm1009 = vcmask 1043456
      %v1011 = vsel %vm1009, %v755, 0
      %1013 = vmatprep.subr.bf16.mxu0 0
      %1014 = vmatpush1.bf16.msra.mxu0 %v1011
      %1015 = vmatprep.subr.bf16.mxu0 0
      %1016 = vmatpush1.bf16.msra.mxu0 0
      %1017 = vmatprep.subr.bf16.mxu0 0
      %1018 = vmatpush1.bf16.msra.mxu0 0
      %1019 = vmatprep.subr.bf16.mxu0 0
      %1020 = vmatpush1.bf16.msra.mxu0 0
      %1021 = vmatprep.subr.bf16.mxu0 0
      %1022 = vmatpush1.bf16.msra.mxu0 0
      %1023 = vmatprep.subr.bf16.mxu0 0
      %1024 = vmatpush1.bf16.msra.mxu0 0
      %1025 = vmatprep.subr.bf16.mxu0 0
      %1026 = vmatpush1.bf16.msra.mxu0 0
      %1027 = vmatprep.subr.bf16.mxu0 0
      %1028 = vmatpush1.bf16.msra.mxu0 0
      %1029 = vmatprep.subr.bf16.mxu0 0
      %1030 = vmatpush1.bf16.msra.mxu0 0
      %1031 = vmatprep.subr.bf16.mxu0 0
      %1032 = vmatpush1.bf16.msra.mxu0 0
      %1033 = vmatprep.subr.bf16.mxu0 0
      %1034 = vmatpush1.bf16.msra.mxu0 0
      %1035 = vmatprep.subr.bf16.mxu0 0
      %1036 = vmatpush1.bf16.msra.mxu0 0
      %1037 = vmatprep.subr.bf16.mxu0 0
      %1038 = vmatpush1.bf16.msra.mxu0 0
      %1039 = vmatprep.subr.bf16.mxu0 0
      %1040 = vmatpush1.bf16.msra.mxu0 0
      %1041 = vmatprep.subr.bf16.mxu0 0
      %1042 = vmatpush1.bf16.msra.mxu0 0
      %1043 = vmatprep.subr.bf16.mxu0 0
      %1044 = vmatpush1.bf16.msra.mxu0 0
      %1045 = vmatprep.mubr.bf16.mxu0 0
      %1046 = vmatmul.mubr.bf16.gmra.mrb[0].mxu0 %v1007
      %v1047 = vpop.f32.mrb[0].mxu0
      %v1048 = vadd.f32 0.0, %v1047
      %v1049 = vpop.f32.mrb[0].mxu0
      %v1050 = vpop.f32.mrb[0].mxu0
      %v1051 = vpop.f32.mrb[0].mxu0
      %1052 = vdwg.mxu0
      %v1054 = vsel %vm957, %v1003, 0
      %v1057 = vsel %vm1009, %v758, 0
      %1059 = vmatprep.subr.bf16.mxu0 0
      %1060 = vmatpush1.bf16.msra.mxu0 %v1057
      %1061 = vmatprep.subr.bf16.mxu0 0
      %1062 = vmatpush1.bf16.msra.mxu0 0
      %1063 = vmatprep.subr.bf16.mxu0 0
      %1064 = vmatpush1.bf16.msra.mxu0 0
      %1065 = vmatprep.subr.bf16.mxu0 0
      %1066 = vmatpush1.bf16.msra.mxu0 0
      %1067 = vmatprep.subr.bf16.mxu0 0
      %1068 = vmatpush1.bf16.msra.mxu0 0
      %1069 = vmatprep.subr.bf16.mxu0 0
      %1070 = vmatpush1.bf16.msra.mxu0 0
      %1071 = vmatprep.subr.bf16.mxu0 0
      %1072 = vmatpush1.bf16.msra.mxu0 0
      %1073 = vmatprep.subr.bf16.mxu0 0
      %1074 = vmatpush1.bf16.msra.mxu0 0
      %1075 = vmatprep.subr.bf16.mxu0 0
      %1076 = vmatpush1.bf16.msra.mxu0 0
      %1077 = vmatprep.subr.bf16.mxu0 0
      %1078 = vmatpush1.bf16.msra.mxu0 0
      %1079 = vmatprep.subr.bf16.mxu0 0
      %1080 = vmatpush1.bf16.msra.mxu0 0
      %1081 = vmatprep.subr.bf16.mxu0 0
      %1082 = vmatpush1.bf16.msra.mxu0 0
      %1083 = vmatprep.subr.bf16.mxu0 0
      %1084 = vmatpush1.bf16.msra.mxu0 0
      %1085 = vmatprep.subr.bf16.mxu0 0
      %1086 = vmatpush1.bf16.msra.mxu0 0
      %1087 = vmatprep.subr.bf16.mxu0 0
      %1088 = vmatpush1.bf16.msra.mxu0 0
      %1089 = vmatprep.subr.bf16.mxu0 0
      %1090 = vmatpush1.bf16.msra.mxu0 0
      %1091 = vmatprep.mubr.bf16.mxu0 0
      %1092 = vmatmul.mubr.bf16.gmra.mrb[0].mxu0 %v1054
      %v1093 = vpop.f32.mrb[0].mxu0
      %v1094 = vadd.f32 0.0, %v1093
      %v1095 = vpop.f32.mrb[0].mxu0
      %v1096 = vpop.f32.mrb[0].mxu0
      %v1097 = vpop.f32.mrb[0].mxu0
      %1098 = vdwg.mxu0
      %v1100 = vsel %vm957, %v1004, 0
      %v1103 = vsel %vm1009, %v760, 0
      %1105 = vmatprep.subr.bf16.mxu0 0
      %1106 = vmatpush1.bf16.msra.mxu0 %v1103
      %1107 = vmatprep.subr.bf16.mxu0 0
      %1108 = vmatpush1.bf16.msra.mxu0 0
      %1109 = vmatprep.subr.bf16.mxu0 0
      %1110 = vmatpush1.bf16.msra.mxu0 0
      %1111 = vmatprep.subr.bf16.mxu0 0
      %1112 = vmatpush1.bf16.msra.mxu0 0
      %1113 = vmatprep.subr.bf16.mxu0 0
      %1114 = vmatpush1.bf16.msra.mxu0 0
      %1115 = vmatprep.subr.bf16.mxu0 0
      %1116 = vmatpush1.bf16.msra.mxu0 0
      %1117 = vmatprep.subr.bf16.mxu0 0
      %1118 = vmatpush1.bf16.msra.mxu0 0
      %1119 = vmatprep.subr.bf16.mxu0 0
      %1120 = vmatpush1.bf16.msra.mxu0 0
      %1121 = vmatprep.subr.bf16.mxu0 0
      %1122 = vmatpush1.bf16.msra.mxu0 0
      %1123 = vmatprep.subr.bf16.mxu0 0
      %1124 = vmatpush1.bf16.msra.mxu0 0
      %1125 = vmatprep.subr.bf16.mxu0 0
      %1126 = vmatpush1.bf16.msra.mxu0 0
      %1127 = vmatprep.subr.bf16.mxu0 0
      %1128 = vmatpush1.bf16.msra.mxu0 0
      %1129 = vmatprep.subr.bf16.mxu0 0
      %1130 = vmatpush1.bf16.msra.mxu0 0
      %1131 = vmatprep.subr.bf16.mxu0 0
      %1132 = vmatpush1.bf16.msra.mxu0 0
      %1133 = vmatprep.subr.bf16.mxu0 0
      %1134 = vmatpush1.bf16.msra.mxu0 0
      %1135 = vmatprep.subr.bf16.mxu0 0
      %1136 = vmatpush1.bf16.msra.mxu0 0
      %1137 = vmatprep.mubr.bf16.mxu0 0
      %1138 = vmatmul.mubr.bf16.gmra.mrb[0].mxu0 %v1100
      %v1139 = vpop.f32.mrb[0].mxu0
      %v1140 = vadd.f32 0.0, %v1139
      %v1141 = vpop.f32.mrb[0].mxu0
      %v1142 = vpop.f32.mrb[0].mxu0
      %v1143 = vpop.f32.mrb[0].mxu0
      %1144 = vdwg.mxu0
      %v1146 = vsel %vm957, %v1005, 0
      %v1149 = vsel %vm1009, %v762, 0
      %1151 = vmatprep.subr.bf16.mxu0 0
      %1152 = vmatpush1.bf16.msra.mxu0 %v1149
      %1153 = vmatprep.subr.bf16.mxu0 0
      %1154 = vmatpush1.bf16.msra.mxu0 0
      %1155 = vmatprep.subr.bf16.mxu0 0
      %1156 = vmatpush1.bf16.msra.mxu0 0
      %1157 = vmatprep.subr.bf16.mxu0 0
      %1158 = vmatpush1.bf16.msra.mxu0 0
      %1159 = vmatprep.subr.bf16.mxu0 0
      %1160 = vmatpush1.bf16.msra.mxu0 0
      %1161 = vmatprep.subr.bf16.mxu0 0
      %1162 = vmatpush1.bf16.msra.mxu0 0
      %1163 = vmatprep.subr.bf16.mxu0 0
      %1164 = vmatpush1.bf16.msra.mxu0 0
      %1165 = vmatprep.subr.bf16.mxu0 0
      %1166 = vmatpush1.bf16.msra.mxu0 0
      %1167 = vmatprep.subr.bf16.mxu0 0
      %1168 = vmatpush1.bf16.msra.mxu0 0
      %1169 = vmatprep.subr.bf16.mxu0 0
      %1170 = vmatpush1.bf16.msra.mxu0 0
      %1171 = vmatprep.subr.bf16.mxu0 0
      %1172 = vmatpush1.bf16.msra.mxu0 0
      %1173 = vmatprep.subr.bf16.mxu0 0
      %1174 = vmatpush1.bf16.msra.mxu0 0
      %1175 = vmatprep.subr.bf16.mxu0 0
      %1176 = vmatpush1.bf16.msra.mxu0 0
      %1177 = vmatprep.subr.bf16.mxu0 0
      %1178 = vmatpush1.bf16.msra.mxu0 0
      %1179 = vmatprep.subr.bf16.mxu0 0
      %1180 = vmatpush1.bf16.msra.mxu0 0
      %1181 = vmatprep.subr.bf16.mxu0 0
      %1182 = vmatpush1.bf16.msra.mxu0 0
      %1183 = vmatprep.mubr.bf16.mxu0 0
      %1184 = vmatmul.mubr.bf16.gmra.mrb[0].mxu0 %v1146
      %v1185 = vpop.f32.mrb[0].mxu0
      %v1186 = vadd.f32 0.0, %v1185
      %v1187 = vpop.f32.mrb[0].mxu0
      %v1188 = vpop.f32.mrb[0].mxu0
      %v1189 = vpop.f32.mrb[0].mxu0
      %1190 = vdwg.mxu0
      %1192 = vrot.lane.b32.xlu0 %v1094, 32
      %v1193 = vpop.permute.xlu0 %1192
      %1196 = vrot.lane.b32.xlu0 %v1140, 64
      %v1197 = vpop.permute.xlu0 %1196
      %1200 = vrot.lane.b32.xlu0 %v1186, 96
      %v1201 = vpop.permute.xlu0 %1200
      %v1203 = vsel %vm772, %v1048, %v1193
      %vm1204 = vcmask 523264
      %v1205 = vsel %vm1204, %v1203, %v1197
      %vm1206 = vcmask 785408
      %v1207 = vsel %vm1206, %v1205, %v1201
      %v1208 = vpack.c.bf16 %v1207, %v1207
      %v1209 = vld [vmem:[%s4] sm:$0xf]
      %v1210 = vld [vmem:[%s4 + $0x4] sm:$0xf]
      %v1211 = vld [vmem:[%s4 + $0x8] sm:$0xf]
      %v1212 = vld [vmem:[%s4 + $0xc] sm:$0xf]
      %v1213 = vld [vmem:[%s4 + $0x10] sm:$0xf]
      %v1214 = vld [vmem:[%s4 + $0x14] sm:$0xf]
      %v1215 = vld [vmem:[%s4 + $0x18] sm:$0xf]
      %v1216 = vld [vmem:[%s4 + $0x1c] sm:$0xf]
      %v1217 = vld [vmem:[%s4 + $0x20] sm:$0xf]
      %v1218 = vld [vmem:[%s4 + $0x24] sm:$0xf]
      %v1219 = vld [vmem:[%s4 + $0x28] sm:$0xf]
      %v1220 = vld [vmem:[%s4 + $0x2c] sm:$0xf]
      %v1221 = vld [vmem:[%s4 + $0x30] sm:$0xf]
      %v1222 = vld [vmem:[%s4 + $0x34] sm:$0xf]
      %v1223 = vld [vmem:[%s4 + $0x38] sm:$0xf]
      %v1224 = vld [vmem:[%s4 + $0x3c] sm:$0xf]
      %v1225 = vld [vmem:[%s5] sm:$0x1]
      %v1227 = vlaneseq
      %v1228 = vshrl.u32 %v1227, 7
      %v1229 = vsub.s32 0, %v1228
      %v1230 = vrot.slane %v1225, %v1229
      %v1248 = vunpack.c.l.b16 %v1209
      %v1249 = vunpack.c.l.b16 %v1210
      %v1250 = vunpack.c.l.b16 %v1211
      %v1251 = vunpack.c.l.b16 %v1212
      %v1252 = vunpack.c.l.b16 %v1213
      %v1253 = vunpack.c.l.b16 %v1214
      %v1254 = vunpack.c.l.b16 %v1215
      %v1255 = vunpack.c.l.b16 %v1216
      %v1256 = vunpack.c.l.b16 %v1217
      %v1257 = vunpack.c.l.b16 %v1218
      %v1258 = vunpack.c.l.b16 %v1219
      %v1259 = vunpack.c.l.b16 %v1220
      %v1260 = vunpack.c.l.b16 %v1221
      %v1261 = vunpack.c.l.b16 %v1222
      %v1262 = vunpack.c.l.b16 %v1223
      %v1263 = vunpack.c.l.b16 %v1224
      %v1264 = vpack.c.b16 %v1249, %v1248
      %v1265 = vpack.c.b16 %v1251, %v1250
      %v1266 = vpack.c.b16 %v1253, %v1252
      %v1267 = vpack.c.b16 %v1255, %v1254
      %v1268 = vpack.c.b16 %v1257, %v1256
      %v1269 = vpack.c.b16 %v1259, %v1258
      %v1270 = vpack.c.b16 %v1261, %v1260
      %v1271 = vpack.c.b16 %v1263, %v1262
      %1280 = vmatprep.subr.bf16.mxu0 0
      %1281 = vmatpush1.bf16.msra.mxu0 %v1264
      %1282 = vmatprep.subr.bf16.mxu0 0
      %1283 = vmatpush1.bf16.msra.mxu0 %v1265
      %1284 = vmatprep.subr.bf16.mxu0 0
      %1285 = vmatpush1.bf16.msra.mxu0 %v1266
      %1286 = vmatprep.subr.bf16.mxu0 0
      %1287 = vmatpush1.bf16.msra.mxu0 %v1267
      %1288 = vmatprep.subr.bf16.mxu0 0
      %1289 = vmatpush1.bf16.msra.mxu0 %v1268
      %1290 = vmatprep.subr.bf16.mxu0 0
      %1291 = vmatpush1.bf16.msra.mxu0 %v1269
      %1292 = vmatprep.subr.bf16.mxu0 0
      %1293 = vmatpush1.bf16.msra.mxu0 %v1270
      %1294 = vmatprep.subr.bf16.mxu0 0
      %1295 = vmatpush1.bf16.msra.mxu0 %v1271
      %1296 = vmatprep.subr.bf16.mxu0 0
      %1297 = vmatpush1.bf16.msra.mxu0 0
      %1298 = vmatprep.subr.bf16.mxu0 0
      %1299 = vmatpush1.bf16.msra.mxu0 0
      %1300 = vmatprep.subr.bf16.mxu0 0
      %1301 = vmatpush1.bf16.msra.mxu0 0
      %1302 = vmatprep.subr.bf16.mxu0 0
      %1303 = vmatpush1.bf16.msra.mxu0 0
      %1304 = vmatprep.subr.bf16.mxu0 0
      %1305 = vmatpush1.bf16.msra.mxu0 0
      %1306 = vmatprep.subr.bf16.mxu0 0
      %1307 = vmatpush1.bf16.msra.mxu0 0
      %1308 = vmatprep.subr.bf16.mxu0 0
      %1309 = vmatpush1.bf16.msra.mxu0 0
      %1310 = vmatprep.subr.bf16.mxu0 0
      %1311 = vmatpush1.bf16.msra.mxu0 0
      %1312 = vmatprep.mubr.bf16.mxu0 0
      %1313 = vmatmul.mubr.bf16.gmra.mrb[0].mxu0 %v1208
      %v1314 = vpop.f32.mrb[0].mxu0
      %v1315 = vadd.f32 %v1230, %v1314
      %v1316 = vpop.f32.mrb[0].mxu0
      %v1317 = vpop.f32.mrb[0].mxu0
      %v1318 = vpop.f32.mrb[0].mxu0
      %1319 = vdwg.mxu0
      %v1320 = vadd.f32 %v479, %v1315
      %v1321 = vld [vmem:[%s6] sm:$0x1]
      %v1322 = vld [vmem:[%s7] sm:$0x1]
      %1323 = vadd.xlane.f32.xlu0 %v1320
      %v1324 = vpop.xlane.xlu0 %1323
      %v1325 = vrcp.pop 128.0
      %v1326 = vmul.f32 %v1324, %v1325
      %v1327 = vsub.f32 %v1320, %v1326
      %v1328 = vmul.f32 %v1327, %v1327
      %1329 = vadd.xlane.f32.xlu0 %v1328
      %v1330 = vpop.xlane.xlu0 %1329
      %v1331 = vmul.f32 %v1330, %v1325
      %v1332 = vadd.f32 %v1331, 1e-12
      %v1333 = vrsqrt.pop %v1332
      %v1334 = vmul.f32 %v1327, %v1333
      %v1336 = vlaneseq
      %v1337 = vshrl.u32 %v1336, 7
      %v1338 = vsub.s32 0, %v1337
      %v1339 = vrot.slane %v1321, %v1338
      %v1341 = vmul.f32 %v1334, %v1339
      %v1343 = vlaneseq
      %v1344 = vshrl.u32 %v1343, 7
      %v1345 = vsub.s32 0, %v1344
      %v1346 = vrot.slane %v1322, %v1345
      %v1348 = vadd.f32 %v1341, %v1346
      %v1349 = vpack.c.bf16 %v1348, %v1348
      %v1350 = vld [vmem:[%s8] sm:$0xff]
      %v1351 = vld [vmem:[%s8 + $0x8] sm:$0xff]
      %v1352 = vld [vmem:[%s8 + $0x10] sm:$0xff]
      %v1353 = vld [vmem:[%s8 + $0x18] sm:$0xff]
      %v1354 = vld [vmem:[%s8 + $0x20] sm:$0xff]
      %v1355 = vld [vmem:[%s8 + $0x28] sm:$0xff]
      %v1356 = vld [vmem:[%s8 + $0x30] sm:$0xff]
      %v1357 = vld [vmem:[%s8 + $0x38] sm:$0xff]
      %v1358 = vld [vmem:[%s8 + $0x40] sm:$0xff]
      %v1359 = vld [vmem:[%s8 + $0x48] sm:$0xff]
      %v1360 = vld [vmem:[%s8 + $0x50] sm:$0xff]
      %v1361 = vld [vmem:[%s8 + $0x58] sm:$0xff]
      %v1362 = vld [vmem:[%s8 + $0x60] sm:$0xff]
      %v1363 = vld [vmem:[%s8 + $0x68] sm:$0xff]
      %v1364 = vld [vmem:[%s8 + $0x70] sm:$0xff]
      %v1365 = vld [vmem:[%s8 + $0x78] sm:$0xff]
      %v1366 = vld [vmem:[%s9] sm:$0x3]
      %v1368 = vlaneseq
      %v1369 = vshrl.u32 %v1368, 7
      %v1370 = vsub.s32 0, %v1369
      %v1371 = vrot.slane %v1366, %v1370
      %v1372 = vlaneseq
      %v1373 = vshrl.u32 %v1372, 7
      %v1374 = vsub.s32 1, %v1373
      %v1375 = vrot.slane %v1366, %v1374
      %v1394 = vunpack.c.l.b16 %v1350
      %v1395 = vunpack.c.h.b16 %v1350
      %v1396 = vunpack.c.l.b16 %v1351
      %v1397 = vunpack.c.h.b16 %v1351
      %v1398 = vunpack.c.l.b16 %v1352
      %v1399 = vunpack.c.h.b16 %v1352
      %v1400 = vunpack.c.l.b16 %v1353
      %v1401 = vunpack.c.h.b16 %v1353
      %v1402 = vunpack.c.l.b16 %v1354
      %v1403 = vunpack.c.h.b16 %v1354
      %v1404 = vunpack.c.l.b16 %v1355
      %v1405 = vunpack.c.h.b16 %v1355
      %v1406 = vunpack.c.l.b16 %v1356
      %v1407 = vunpack.c.h.b16 %v1356
      %v1408 = vunpack.c.l.b16 %v1357
      %v1409 = vunpack.c.h.b16 %v1357
      %v1410 = vunpack.c.l.b16 %v1358
      %v1411 = vunpack.c.h.b16 %v1358
      %v1412 = vunpack.c.l.b16 %v1359
      %v1413 = vunpack.c.h.b16 %v1359
      %v1414 = vunpack.c.l.b16 %v1360
      %v1415 = vunpack.c.h.b16 %v1360
      %v1416 = vunpack.c.l.b16 %v1361
      %v1417 = vunpack.c.h.b16 %v1361
      %v1418 = vunpack.c.l.b16 %v1362
      %v1419 = vunpack.c.h.b16 %v1362
      %v1420 = vunpack.c.l.b16 %v1363
      %v1421 = vunpack.c.h.b16 %v1363
      %v1422 = vunpack.c.l.b16 %v1364
      %v1423 = vunpack.c.h.b16 %v1364
      %v1424 = vunpack.c.l.b16 %v1365
      %v1425 = vunpack.c.h.b16 %v1365
      %v1426 = vpack.c.b16 %v1396, %v1394
      %v1427 = vpack.c.b16 %v1397, %v1395
      %v1428 = vpack.c.b16 %v1400, %v1398
      %v1429 = vpack.c.b16 %v1401, %v1399
      %v1430 = vpack.c.b16 %v1404, %v1402
      %v1431 = vpack.c.b16 %v1405, %v1403
      %v1432 = vpack.c.b16 %v1408, %v1406
      %v1433 = vpack.c.b16 %v1409, %v1407
      %v1434 = vpack.c.b16 %v1412, %v1410
      %v1435 = vpack.c.b16 %v1413, %v1411
      %v1436 = vpack.c.b16 %v1416, %v1414
      %v1437 = vpack.c.b16 %v1417, %v1415
      %v1438 = vpack.c.b16 %v1420, %v1418
      %v1439 = vpack.c.b16 %v1421, %v1419
      %v1440 = vpack.c.b16 %v1424, %v1422
      %v1441 = vpack.c.b16 %v1425, %v1423
      %1458 = vmatprep.subr.bf16.mxu0 %v1427
      %1459 = vmatpush1.bf16.msra.mxu0 %v1426
      %1460 = vmatprep.subr.bf16.mxu0 %v1429
      %1461 = vmatpush1.bf16.msra.mxu0 %v1428
      %1462 = vmatprep.subr.bf16.mxu0 %v1431
      %1463 = vmatpush1.bf16.msra.mxu0 %v1430
      %1464 = vmatprep.subr.bf16.mxu0 %v1433
      %1465 = vmatpush1.bf16.msra.mxu0 %v1432
      %1466 = vmatprep.subr.bf16.mxu0 %v1435
      %1467 = vmatpush1.bf16.msra.mxu0 %v1434
      %1468 = vmatprep.subr.bf16.mxu0 %v1437
      %1469 = vmatpush1.bf16.msra.mxu0 %v1436
      %1470 = vmatprep.subr.bf16.mxu0 %v1439
      %1471 = vmatpush1.bf16.msra.mxu0 %v1438
      %1472 = vmatprep.subr.bf16.mxu0 %v1441
      %1473 = vmatpush1.bf16.msra.mxu0 %v1440
      %1474 = vmatprep.subr.bf16.mxu0 0
      %1475 = vmatpush1.bf16.msra.mxu0 0
      %1476 = vmatprep.subr.bf16.mxu0 0
      %1477 = vmatpush1.bf16.msra.mxu0 0
      %1478 = vmatprep.subr.bf16.mxu0 0
      %1479 = vmatpush1.bf16.msra.mxu0 0
      %1480 = vmatprep.subr.bf16.mxu0 0
      %1481 = vmatpush1.bf16.msra.mxu0 0
      %1482 = vmatprep.subr.bf16.mxu0 0
      %1483 = vmatpush1.bf16.msra.mxu0 0
      %1484 = vmatprep.subr.bf16.mxu0 0
      %1485 = vmatpush1.bf16.msra.mxu0 0
      %1486 = vmatprep.subr.bf16.mxu0 0
      %1487 = vmatpush1.bf16.msra.mxu0 0
      %1488 = vmatprep.subr.bf16.mxu0 0
      %1489 = vmatpush1.bf16.msra.mxu0 0
      %1490 = vmatprep.mubr.bf16.mxu0 0
      %1491 = vmatmul.mubr.bf16.gmra.mrb[0].mxu0 %v1349
      %v1492 = vpop.f32.mrb[0].mxu0
      %v1493 = vadd.f32 %v1371, %v1492
      %v1494 = vpop.f32.mrb[0].mxu0
      %v1495 = vadd.f32 %v1375, %v1494
      %v1496 = vpop.f32.mrb[0].mxu0
      %v1497 = vpop.f32.mrb[0].mxu0
      %1498 = vdwg.mxu0
      %v1499 = vmul.f32 %v1493, %v1493
      %v1500 = vmul.f32 %v1495, %v1495
      %v1501 = vmul.f32 %v1493, %v1499
      %v1502 = vmul.f32 %v1495, %v1500
      %v1503 = vmul.f32 %v1501, 0.044715
      %v1504 = vmul.f32 %v1502, 0.044715
      %v1505 = vadd.f32 %v1493, %v1503
      %v1506 = vadd.f32 %v1495, %v1504
      %v1507 = vmul.f32 %v1505, 0.7978846
      %v1508 = vmul.f32 %v1506, 0.7978846
      %v1509 = vtanh.pop %v1507
      %v1510 = vtanh.pop %v1508
      %v1511 = vadd.f32 %v1509, 1.0
      %v1512 = vadd.f32 %v1510, 1.0
      %v1513 = vmul.f32 %v1511, 0.5
      %v1514 = vmul.f32 %v1512, 0.5
      %v1515 = vmul.f32 %v1493, %v1513
      %v1516 = vmul.f32 %v1495, %v1514
      %v1517 = vpack.c.bf16 %v1515, %v1515
      %v1518 = vpack.c.bf16 %v1516, %v1516
      %v1519 = vld [vmem:[%s10] sm:$0xf]
      %v1520 = vld [vmem:[%s10 + $0x4] sm:$0xf]
      %v1521 = vld [vmem:[%s10 + $0x8] sm:$0xf]
      %v1522 = vld [vmem:[%s10 + $0xc] sm:$0xf]
      %v1523 = vld [vmem:[%s10 + $0x10] sm:$0xf]
      %v1524 = vld [vmem:[%s10 + $0x14] sm:$0xf]
      %v1525 = vld [vmem:[%s10 + $0x18] sm:$0xf]
      %v1526 = vld [vmem:[%s10 + $0x1c] sm:$0xf]
      %v1527 = vld [vmem:[%s10 + $0x20] sm:$0xf]
      %v1528 = vld [vmem:[%s10 + $0x24] sm:$0xf]
      %v1529 = vld [vmem:[%s10 + $0x28] sm:$0xf]
      %v1530 = vld [vmem:[%s10 + $0x2c] sm:$0xf]
      %v1531 = vld [vmem:[%s10 + $0x30] sm:$0xf]
      %v1532 = vld [vmem:[%s10 + $0x34] sm:$0xf]
      %v1533 = vld [vmem:[%s10 + $0x38] sm:$0xf]
      %v1534 = vld [vmem:[%s10 + $0x3c] sm:$0xf]
      %v1535 = vld [vmem:[%s10 + $0x40] sm:$0xf]
      %v1536 = vld [vmem:[%s10 + $0x44] sm:$0xf]
      %v1537 = vld [vmem:[%s10 + $0x48] sm:$0xf]
      %v1538 = vld [vmem:[%s10 + $0x4c] sm:$0xf]
      %v1539 = vld [vmem:[%s10 + $0x50] sm:$0xf]
      %v1540 = vld [vmem:[%s10 + $0x54] sm:$0xf]
      %v1541 = vld [vmem:[%s10 + $0x58] sm:$0xf]
      %v1542 = vld [vmem:[%s10 + $0x5c] sm:$0xf]
      %v1543 = vld [vmem:[%s10 + $0x60] sm:$0xf]
      %v1544 = vld [vmem:[%s10 + $0x64] sm:$0xf]
      %v1545 = vld [vmem:[%s10 + $0x68] sm:$0xf]
      %v1546 = vld [vmem:[%s10 + $0x6c] sm:$0xf]
      %v1547 = vld [vmem:[%s10 + $0x70] sm:$0xf]
      %v1548 = vld [vmem:[%s10 + $0x74] sm:$0xf]
      %v1549 = vld [vmem:[%s10 + $0x78] sm:$0xf]
      %v1550 = vld [vmem:[%s10 + $0x7c] sm:$0xf]
      %v1551 = vld [vmem:[%s11] sm:$0x1]
      %v1553 = vlaneseq
      %v1554 = vshrl.u32 %v1553, 7
      %v1555 = vsub.s32 0, %v1554
      %v1556 = vrot.slane %v1551, %v1555
      %v1590 = vunpack.c.l.b16 %v1519
      %v1591 = vunpack.c.l.b16 %v1520
      %v1592 = vunpack.c.l.b16 %v1521
      %v1593 = vunpack.c.l.b16 %v1522
      %v1594 = vunpack.c.l.b16 %v1523
      %v1595 = vunpack.c.l.b16 %v1524
      %v1596 = vunpack.c.l.b16 %v1525
      %v1597 = vunpack.c.l.b16 %v1526
      %v1598 = vunpack.c.l.b16 %v1527
      %v1599 = vunpack.c.l.b16 %v1528
      %v1600 = vunpack.c.l.b16 %v1529
      %v1601 = vunpack.c.l.b16 %v1530
      %v1602 = vunpack.c.l.b16 %v1531
      %v1603 = vunpack.c.l.b16 %v1532
      %v1604 = vunpack.c.l.b16 %v1533
      %v1605 = vunpack.c.l.b16 %v1534
      %v1606 = vunpack.c.l.b16 %v1535
      %v1607 = vunpack.c.l.b16 %v1536
      %v1608 = vunpack.c.l.b16 %v1537
      %v1609 = vunpack.c.l.b16 %v1538
      %v1610 = vunpack.c.l.b16 %v1539
      %v1611 = vunpack.c.l.b16 %v1540
      %v1612 = vunpack.c.l.b16 %v1541
      %v1613 = vunpack.c.l.b16 %v1542
      %v1614 = vunpack.c.l.b16 %v1543
      %v1615 = vunpack.c.l.b16 %v1544
      %v1616 = vunpack.c.l.b16 %v1545
      %v1617 = vunpack.c.l.b16 %v1546
      %v1618 = vunpack.c.l.b16 %v1547
      %v1619 = vunpack.c.l.b16 %v1548
      %v1620 = vunpack.c.l.b16 %v1549
      %v1621 = vunpack.c.l.b16 %v1550
      %v1622 = vpack.c.b16 %v1591, %v1590
      %v1623 = vpack.c.b16 %v1593, %v1592
      %v1624 = vpack.c.b16 %v1595, %v1594
      %v1625 = vpack.c.b16 %v1597, %v1596
      %v1626 = vpack.c.b16 %v1599, %v1598
      %v1627 = vpack.c.b16 %v1601, %v1600
      %v1628 = vpack.c.b16 %v1603, %v1602
      %v1629 = vpack.c.b16 %v1605, %v1604
      %v1630 = vpack.c.b16 %v1607, %v1606
      %v1631 = vpack.c.b16 %v1609, %v1608
      %v1632 = vpack.c.b16 %v1611, %v1610
      %v1633 = vpack.c.b16 %v1613, %v1612
      %v1634 = vpack.c.b16 %v1615, %v1614
      %v1635 = vpack.c.b16 %v1617, %v1616
      %v1636 = vpack.c.b16 %v1619, %v1618
      %v1637 = vpack.c.b16 %v1621, %v1620
      %1654 = vmatprep.subr.bf16.mxu0 0
      %1655 = vmatpush1.bf16.msra.mxu0 %v1622
      %1656 = vmatprep.subr.bf16.mxu0 0
      %1657 = vmatpush1.bf16.msra.mxu0 %v1623
      %1658 = vmatprep.subr.bf16.mxu0 0
      %1659 = vmatpush1.bf16.msra.mxu0 %v1624
      %1660 = vmatprep.subr.bf16.mxu0 0
      %1661 = vmatpush1.bf16.msra.mxu0 %v1625
      %1662 = vmatprep.subr.bf16.mxu0 0
      %1663 = vmatpush1.bf16.msra.mxu0 %v1626
      %1664 = vmatprep.subr.bf16.mxu0 0
      %1665 = vmatpush1.bf16.msra.mxu0 %v1627
      %1666 = vmatprep.subr.bf16.mxu0 0
      %1667 = vmatpush1.bf16.msra.mxu0 %v1628
      %1668 = vmatprep.subr.bf16.mxu0 0
      %1669 = vmatpush1.bf16.msra.mxu0 %v1629
      %1670 = vmatprep.subr.bf16.mxu0 0
      %1671 = vmatpush1.bf16.msra.mxu0 %v1630
      %1672 = vmatprep.subr.bf16.mxu0 0
      %1673 = vmatpush1.bf16.msra.mxu0 %v1631
      %1674 = vmatprep.subr.bf16.mxu0 0
      %1675 = vmatpush1.bf16.msra.mxu0 %v1632
      %1676 = vmatprep.subr.bf16.mxu0 0
      %1677 = vmatpush1.bf16.msra.mxu0 %v1633
      %1678 = vmatprep.subr.bf16.mxu0 0
      %1679 = vmatpush1.bf16.msra.mxu0 %v1634
      %1680 = vmatprep.subr.bf16.mxu0 0
      %1681 = vmatpush1.bf16.msra.mxu0 %v1635
      %1682 = vmatprep.subr.bf16.mxu0 0
      %1683 = vmatpush1.bf16.msra.mxu0 %v1636
      %1684 = vmatprep.subr.bf16.mxu0 0
      %1685 = vmatpush1.bf16.msra.mxu0 %v1637
      %1686 = vmatprep.mubr.bf16.mxu0 %v1518
      %1687 = vmatmul.mubr.bf16.gmra.mrb[0].mxu0 %v1517
      %v1688 = vpop.f32.mrb[0].mxu0
      %v1689 = vadd.f32 %v1556, %v1688
      %v1690 = vpop.f32.mrb[0].mxu0
      %v1691 = vpop.f32.mrb[0].mxu0
      %v1692 = vpop.f32.mrb[0].mxu0
      %1693 = vdwg.mxu0
      %v1694 = vadd.f32 %v1348, %v1689
      %v1695 = vld [vmem:[%s12] sm:$0x1]
      %v1696 = vld [vmem:[%s13] sm:$0x1]
      %1697 = vadd.xlane.f32.xlu0 %v1694
      %v1698 = vpop.xlane.xlu0 %1697
      %v1699 = vmul.f32 %v1698, %v1325
      %v1700 = vsub.f32 %v1694, %v1699
      %v1701 = vmul.f32 %v1700, %v1700
      %1702 = vadd.xlane.f32.xlu0 %v1701
      %v1703 = vpop.xlane.xlu0 %1702
      %v1704 = vmul.f32 %v1703, %v1325
      %v1705 = vadd.f32 %v1704, 1e-12
      %v1706 = vrsqrt.pop %v1705
      %v1707 = vmul.f32 %v1700, %v1706
      %v1709 = vlaneseq
      %v1710 = vshrl.u32 %v1709, 7
      %v1711 = vsub.s32 0, %v1710
      %v1712 = vrot.slane %v1695, %v1711
      %v1714 = vmul.f32 %v1707, %v1712
      %v1716 = vlaneseq
      %v1717 = vshrl.u32 %v1716, 7
      %v1718 = vsub.s32 0, %v1717
      %v1719 = vrot.slane %v1696, %v1718
      %v1721 = vadd.f32 %v1714, %v1719
      %v1722 = vpack.c.bf16 %v1721, %v1721
      %1723 = vst [vmem:[%s476] sm:$0xf] %v1722
      %p1724 = scmp.lt.s32.totalorder %s25, 1
      %s1725 = scalar_select %p1724, %s25, 1
      %s1726 = smul.addr %s1725, 4
      %s1727 = scalar_lea.vmem %s14, %s1726
      // Predicated region
      $region77: #{text_embedder_forward.5} parent=75 // pred_check
        %p1728 = pneg %p347
      $region78: #{text_embedder_forward.5} parent=75 // pred_check_branch
        %1730 = sbr.rel (%p1728) target = $region80
      $region79: #{text_embedder_forward.5} parent=75 // pred_region
        _
      $region80: #{text_embedder_forward.5} parent=75 // pred_fallthru
        _
    $region76: #{text_embedder_forward.5} parent=5 // pred_fallthru
      _
    %p1731 = scmp.le.s32.totalorder 2, %s20
    // Predicated region
    $region81: #{text_embedder_forward.5} parent=5 // pred_check
      %p1732 = pneg %p1731
    $region82: #{text_embedder_forward.5} parent=5 // pred_check_branch
      %1734 = sbr.rel (%p1732) target = $region84
    $region83: #{text_embedder_forward.5} parent=5 // pred_region
      %s1735 = ssub.s32 %s20, 2
      // Predicated region
      $region85: #{text_embedder_forward.5} parent=83 // pred_check
        %p1736 = pneg %p353
      $region86: #{text_embedder_forward.5} parent=83 // pred_check_branch
        %1738 = sbr.rel (%p1736) target = $region88
      $region87: #{text_embedder_forward.5} parent=83 // pred_region
        %p1739 = scmp.lt.s32.totalorder %s26, 1
        %s1740 = scalar_select %p1739, %s26, 1
        %s1741 = smul.addr %s1740, 4
        %s1742 = scalar_lea.vmem %s14, %s1741
      $region88: #{text_embedder_forward.5} parent=83 // pred_fallthru
        _
    $region84: #{text_embedder_forward.5} parent=5 // pred_fallthru
      _
  $region6: #{text_embedder_forward.5} parent=0 // loop_footer
    %s24 = sadd.s32 1, %s20
  $region7: #{text_embedder_forward.5} parent=0 // loop_footer_branch
    %19 = sbr.rel target = $region3
  $region8: #{text_embedder_forward.5} parent=0 // loop_exit
    _

// kernel: text_embedder_forward.4
$region0: #{text_embedder_forward.4}
  #allocation0 [shape = 'u32[]', space=smem, size = 0x4, offset = 0x4, fixed_abs, tag = 'smem constant byte address 0x4 - core index']
  #allocation1 [shape = 'u32[144,128]{1,0:T(1,128)}', space=vmem, size = 0x12000, scoped, tag = 'internal scratch']
  %s0 = inlined_call_operand.vmem [shape: bf16[2,8,128], index: 0, kind: input, shape index: {}, may-alias: {0,14}]
  %s1 = inlined_call_operand.vmem [shape: f32[2,1,8], index: 1, kind: input, shape index: {}]
  %s2 = inlined_call_operand.vmem [shape: bf16[128,384], index: 2, kind: input, shape index: {}]
  %s3 = inlined_call_operand.vmem [shape: f32[1,384], index: 3, kind: input, shape index: {}]
  %s4 = inlined_call_operand.hbm [shape: bf16[128,128], index: 4, kind: input, shape index: {}]
  %s5 = inlined_call_operand.vmem [shape: f32[1,128], index: 5, kind: input, shape index: {}]
  %s6 = inlined_call_operand.vmem [shape: f32[1,128], index: 6, kind: input, shape index: {}]
  %s7 = inlined_call_operand.vmem [shape: f32[1,128], index: 7, kind: input, shape index: {}]
  %s8 = inlined_call_operand.vmem [shape: bf16[128,256], index: 8, kind: input, shape index: {}]
  %s9 = inlined_call_operand.vmem [shape: f32[1,256], index: 9, kind: input, shape index: {}]
  %s10 = inlined_call_operand.hbm [shape: bf16[256,128], index: 10, kind: input, shape index: {}]
  %s11 = inlined_call_operand.vmem [shape: f32[1,128], index: 11, kind: input, shape index: {}]
  %s12 = inlined_call_operand.vmem [shape: f32[1,128], index: 12, kind: input, shape index: {}]
  %s13 = inlined_call_operand.vmem [shape: f32[1,128], index: 13, kind: input, shape index: {}]
  %s14 = inlined_call_operand.vmem [shape: bf16[2,8,128], index: 14, kind: output, shape index: {}, may-alias: {0,14}]
  %s15 = sld [smem:[#allocation0]]
  $region97: #{text_embedder_forward.4} parent=0
    _
  %s17 = ssub.s32 1, %s15
  %s18 = scalar_select 0, %s17, %s15
  $region1: #{text_embedder_forward.4} parent=0
    #allocation2 [shape = 'u8[32768]{0}', space=vmem, size = 0x8000, scoped, tag = 'input window, operand 4, single buffered']
    #allocation3 [shape = 's32[2]{0}', space=sflag, size = 0x8, scoped, tag = 'scoped memory for text_embedder_forward.4']
    #allocation4 [shape = 'u8[65536]{0}', space=vmem, size = 0x10000, scoped, tag = 'input window, operand 10, single buffered']
    #allocation5 [shape = 's32[1]{0}', space=sflag, size = 0x4, scoped, tag = 'scoped memory for text_embedder_forward.4']
    %19 = vsyncpa [#allocation3], 0
    %20 = vsyncpa [#allocation5], 0
    loop: start=0, step=1, limit=4
    $region2: #{text_embedder_forward.4} parent=1 // loop_pre_header
      _
    $region3: #{text_embedder_forward.4} parent=1 // loop_header
      %s22 = sphi 0, %s26
      %p23 = scmp.ge.s32.totalorder %s22, 4
      %s32 = sphi 0, %s34
      %s35 = sphi 0, %s32
      %s36 = sphi 0, %s35
      %s52 = sphi 0, %s36
      %s58 = sphi 0, %s60
      %s61 = sphi 0, %s58
      %s62 = sphi 0, %s61
      %s78 = sphi 0, %s62
      %s82 = sphi 0, %s82
      %s84 = sphi 0, %s82
      %s85 = sphi 0, %s84
      %s99 = sphi 0, %s85
      %s103 = sphi 0, %s103
      %s105 = sphi 0, %s103
      %s106 = sphi 0, %s105
      %s120 = sphi 0, %s106
      %s124 = sphi 0, %s124
      %s126 = sphi 0, %s124
      %s127 = sphi 0, %s126
      %s141 = sphi 0, %s127
      %s145 = sphi 0, %s145
      %s147 = sphi 0, %s145
      %s148 = sphi 0, %s147
      %s162 = sphi 0, %s148
      %s166 = sphi 0, %s166
      %s168 = sphi 0, %s166
      %s169 = sphi 0, %s168
      %s183 = sphi 0, %s169
      %s187 = sphi 0, %s187
      %s189 = sphi 0, %s187
      %s190 = sphi 0, %s189
      %s204 = sphi 0, %s190
      %s208 = sphi 0, %s208
      %s210 = sphi 0, %s208
      %s211 = sphi 0, %s210
      %s225 = sphi 0, %s211
      %s229 = sphi 0, %s229
      %s231 = sphi 0, %s229
      %s232 = sphi 0, %s231
      %s246 = sphi 0, %s232
      %s250 = sphi 0, %s250
      %s252 = sphi 0, %s250
      %s253 = sphi 0, %s252
      %s267 = sphi 0, %s253
      %s271 = sphi 0, %s271
      %s273 = sphi 0, %s271
      %s274 = sphi 0, %s273
      %s288 = sphi 0, %s274
      %s292 = sphi 0, %s292
      %s294 = sphi 0, %s292
      %s295 = sphi 0, %s294
      %s309 = sphi 0, %s295
      %s313 = sphi 0, %s313
      %s315 = sphi 0, %s313
      %s316 = sphi 0, %s315
      %s330 = sphi 0, %s316
      %s336 = sphi 0, %s338
      %s339 = sphi 0, %s336
      %s340 = sphi 0, %s339
      %s356 = sphi 0, %s340
    $region4: #{text_embedder_forward.4} parent=1 // loop_header_branch
      %25 = sbr.rel (%p23) target = $region8
    $region5: #{text_embedder_forward.4} parent=1 // loop_body
      %s27 = ssub.s32 %s22, 1
      %s28 = ssub.s32 %s22, 2
      %s29 = sadd.s32 %s22, 1
      %s30 = ssub.s32 %s22, %s29
      %p31 = scmp.eq.s32.totalorder %s30, 0
      %s33 = sadd.s32 %s32, 1
      %s34 = scalar_select %p31, %s32, %s33
      %p37 = pneg %p31
      %p38 = scmp.eq.s32.totalorder %s22, 1
      %p39 = por %p37, %p38
      %p40 = scmp.ne.s32.totalorder %s32, %s35
      %p41 = scmp.eq.s32.totalorder %s22, 0
      %p42 = por %p40, %p41
      %p43 = scmp.ne.s32.totalorder %s32, %s35
      %p44 = scmp.eq.s32.totalorder %s27, 1
      %p45 = por %p43, %p44
      %p46 = scmp.ne.s32.totalorder %s35, %s36
      %p47 = scmp.eq.s32.totalorder %s27, 0
      %p48 = por %p46, %p47
      %p49 = scmp.ne.s32.totalorder %s35, %s36
      %p50 = scmp.eq.s32.totalorder %s28, 1
      %p51 = por %p49, %p50
      %p53 = scmp.ne.s32.totalorder %s36, %s52
      %p54 = scmp.eq.s32.totalorder %s28, 0
      %p55 = por %p53, %p54
      %s56 = ssub.s32 %s22, %s29
      %p57 = scmp.eq.s32.totalorder %s56, 0
      %s59 = sadd.s32 %s58, 1
      %s60 = scalar_select %p57, %s58, %s59
      %p63 = pneg %p57
      %p64 = scmp.eq.s32.totalorder %s22, 1
      %p65 = por %p63, %p64
      %p66 = scmp.ne.s32.totalorder %s58, %s61
      %p67 = scmp.eq.s32.totalorder %s22, 0
      %p68 = por %p66, %p67
      %p69 = scmp.ne.s32.totalorder %s58, %s61
      %p70 = scmp.eq.s32.totalorder %s27, 1
      %p71 = por %p69, %p70
      %p72 = scmp.ne.s32.totalorder %s61, %s62
      %p73 = scmp.eq.s32.totalorder %s27, 0
      %p74 = por %p72, %p73
      %p75 = scmp.ne.s32.totalorder %s61, %s62
      %p76 = scmp.eq.s32.totalorder %s28, 1
      %p77 = por %p75, %p76
      %p79 = scmp.ne.s32.totalorder %s62, %s78
      %p80 = scmp.eq.s32.totalorder %s28, 0
      %p81 = por %p79, %p80
      %s83 = sadd.s32 %s82, 1
      %p86 = scmp.eq.s32.totalorder %s22, 1
      %p87 = scmp.ne.s32.totalorder %s82, %s84
      %p88 = scmp.eq.s32.totalorder %s22, 0
      %p89 = por %p87, %p88
      %p90 = scmp.ne.s32.totalorder %s82, %s84
      %p91 = scmp.eq.s32.totalorder %s27, 1
      %p92 = por %p90, %p91
      %p93 = scmp.ne.s32.totalorder %s84, %s85
      %p94 = scmp.eq.s32.totalorder %s27, 0
      %p95 = por %p93, %p94
      %p96 = scmp.ne.s32.totalorder %s84, %s85
      %p97 = scmp.eq.s32.totalorder %s28, 1
      %p98 = por %p96, %p97
      %p100 = scmp.ne.s32.totalorder %s85, %s99
      %p101 = scmp.eq.s32.totalorder %s28, 0
      %p102 = por %p100, %p101
      %s104 = sadd.s32 %s103, 1
      %p107 = scmp.eq.s32.totalorder %s22, 1
      %p108 = scmp.ne.s32.totalorder %s103, %s105
      %p109 = scmp.eq.s32.totalorder %s22, 0
      %p110 = por %p108, %p109
      %p111 = scmp.ne.s32.totalorder %s103, %s105
      %p112 = scmp.eq.s32.totalorder %s27, 1
      %p113 = por %p111, %p112
      %p114 = scmp.ne.s32.totalorder %s105, %s106
      %p115 = scmp.eq.s32.totalorder %s27, 0
      %p116 = por %p114, %p115
      %p117 = scmp.ne.s32.totalorder %s105, %s106
      %p118 = scmp.eq.s32.totalorder %s28, 1
      %p119 = por %p117, %p118
      %p121 = scmp.ne.s32.totalorder %s106, %s120
      %p122 = scmp.eq.s32.totalorder %s28, 0
      %p123 = por %p121, %p122
      %s125 = sadd.s32 %s124, 1
      %p128 = scmp.eq.s32.totalorder %s22, 1
      %p129 = scmp.ne.s32.totalorder %s124, %s126
      %p130 = scmp.eq.s32.totalorder %s22, 0
      %p131 = por %p129, %p130
      %p132 = scmp.ne.s32.totalorder %s124, %s126
      %p133 = scmp.eq.s32.totalorder %s27, 1
      %p134 = por %p132, %p133
      %p135 = scmp.ne.s32.totalorder %s126, %s127
      %p136 = scmp.eq.s32.totalorder %s27, 0
      %p137 = por %p135, %p136
      %p138 = scmp.ne.s32.totalorder %s126, %s127
      %p139 = scmp.eq.s32.totalorder %s28, 1
      %p140 = por %p138, %p139
      %p142 = scmp.ne.s32.totalorder %s127, %s141
      %p143 = scmp.eq.s32.totalorder %s28, 0
      %p144 = por %p142, %p143
      %s146 = sadd.s32 %s145, 1
      %p149 = scmp.eq.s32.totalorder %s22, 1
      %p150 = scmp.ne.s32.totalorder %s145, %s147
      %p151 = scmp.eq.s32.totalorder %s22, 0
      %p152 = por %p150, %p151
      %p153 = scmp.ne.s32.totalorder %s145, %s147
      %p154 = scmp.eq.s32.totalorder %s27, 1
      %p155 = por %p153, %p154
      %p156 = scmp.ne.s32.totalorder %s147, %s148
      %p157 = scmp.eq.s32.totalorder %s27, 0
      %p158 = por %p156, %p157
      %p159 = scmp.ne.s32.totalorder %s147, %s148
      %p160 = scmp.eq.s32.totalorder %s28, 1
      %p161 = por %p159, %p160
      %p163 = scmp.ne.s32.totalorder %s148, %s162
      %p164 = scmp.eq.s32.totalorder %s28, 0
      %p165 = por %p163, %p164
      %s167 = sadd.s32 %s166, 1
      %p170 = scmp.eq.s32.totalorder %s22, 1
      %p171 = scmp.ne.s32.totalorder %s166, %s168
      %p172 = scmp.eq.s32.totalorder %s22, 0
      %p173 = por %p171, %p172
      %p174 = scmp.ne.s32.totalorder %s166, %s168
      %p175 = scmp.eq.s32.totalorder %s27, 1
      %p176 = por %p174, %p175
      %p177 = scmp.ne.s32.totalorder %s168, %s169
      %p178 = scmp.eq.s32.totalorder %s27, 0
      %p179 = por %p177, %p178
      %p180 = scmp.ne.s32.totalorder %s168, %s169
      %p181 = scmp.eq.s32.totalorder %s28, 1
      %p182 = por %p180, %p181
      %p184 = scmp.ne.s32.totalorder %s169, %s183
      %p185 = scmp.eq.s32.totalorder %s28, 0
      %p186 = por %p184, %p185
      %s188 = sadd.s32 %s187, 1
      %p191 = scmp.eq.s32.totalorder %s22, 1
      %p192 = scmp.ne.s32.totalorder %s187, %s189
      %p193 = scmp.eq.s32.totalorder %s22, 0
      %p194 = por %p192, %p193
      %p195 = scmp.ne.s32.totalorder %s187, %s189
      %p196 = scmp.eq.s32.totalorder %s27, 1
      %p197 = por %p195, %p196
      %p198 = scmp.ne.s32.totalorder %s189, %s190
      %p199 = scmp.eq.s32.totalorder %s27, 0
      %p200 = por %p198, %p199
      %p201 = scmp.ne.s32.totalorder %s189, %s190
      %p202 = scmp.eq.s32.totalorder %s28, 1
      %p203 = por %p201, %p202
      %p205 = scmp.ne.s32.totalorder %s190, %s204
      %p206 = scmp.eq.s32.totalorder %s28, 0
      %p207 = por %p205, %p206
      %s209 = sadd.s32 %s208, 1
      %p212 = scmp.eq.s32.totalorder %s22, 1
      %p213 = scmp.ne.s32.totalorder %s208, %s210
      %p214 = scmp.eq.s32.totalorder %s22, 0
      %p215 = por %p213, %p214
      %p216 = scmp.ne.s32.totalorder %s208, %s210
      %p217 = scmp.eq.s32.totalorder %s27, 1
      %p218 = por %p216, %p217
      %p219 = scmp.ne.s32.totalorder %s210, %s211
      %p220 = scmp.eq.s32.totalorder %s27, 0
      %p221 = por %p219, %p220
      %p222 = scmp.ne.s32.totalorder %s210, %s211
      %p223 = scmp.eq.s32.totalorder %s28, 1
      %p224 = por %p222, %p223
      %p226 = scmp.ne.s32.totalorder %s211, %s225
      %p227 = scmp.eq.s32.totalorder %s28, 0
      %p228 = por %p226, %p227
      %s230 = sadd.s32 %s229, 1
      %p233 = scmp.eq.s32.totalorder %s22, 1
      %p234 = scmp.ne.s32.totalorder %s229, %s231
      %p235 = scmp.eq.s32.totalorder %s22, 0
      %p236 = por %p234, %p235
      %p237 = scmp.ne.s32.totalorder %s229, %s231
      %p238 = scmp.eq.s32.totalorder %s27, 1
      %p239 = por %p237, %p238
      %p240 = scmp.ne.s32.totalorder %s231, %s232
      %p241 = scmp.eq.s32.totalorder %s27, 0
      %p242 = por %p240, %p241
      %p243 = scmp.ne.s32.totalorder %s231, %s232
      %p244 = scmp.eq.s32.totalorder %s28, 1
      %p245 = por %p243, %p244
      %p247 = scmp.ne.s32.totalorder %s232, %s246
      %p248 = scmp.eq.s32.totalorder %s28, 0
      %p249 = por %p247, %p248
      %s251 = sadd.s32 %s250, 1
      %p254 = scmp.eq.s32.totalorder %s22, 1
      %p255 = scmp.ne.s32.totalorder %s250, %s252
      %p256 = scmp.eq.s32.totalorder %s22, 0
      %p257 = por %p255, %p256
      %p258 = scmp.ne.s32.totalorder %s250, %s252
      %p259 = scmp.eq.s32.totalorder %s27, 1
      %p260 = por %p258, %p259
      %p261 = scmp.ne.s32.totalorder %s252, %s253
      %p262 = scmp.eq.s32.totalorder %s27, 0
      %p263 = por %p261, %p262
      %p264 = scmp.ne.s32.totalorder %s252, %s253
      %p265 = scmp.eq.s32.totalorder %s28, 1
      %p266 = por %p264, %p265
      %p268 = scmp.ne.s32.totalorder %s253, %s267
      %p269 = scmp.eq.s32.totalorder %s28, 0
      %p270 = por %p268, %p269
      %s272 = sadd.s32 %s271, 1
      %p275 = scmp.eq.s32.totalorder %s22, 1
      %p276 = scmp.ne.s32.totalorder %s271, %s273
      %p277 = scmp.eq.s32.totalorder %s22, 0
      %p278 = por %p276, %p277
      %p279 = scmp.ne.s32.totalorder %s271, %s273
      %p280 = scmp.eq.s32.totalorder %s27, 1
      %p281 = por %p279, %p280
      %p282 = scmp.ne.s32.totalorder %s273, %s274
      %p283 = scmp.eq.s32.totalorder %s27, 0
      %p284 = por %p282, %p283
      %p285 = scmp.ne.s32.totalorder %s273, %s274
      %p286 = scmp.eq.s32.totalorder %s28, 1
      %p287 = por %p285, %p286
      %p289 = scmp.ne.s32.totalorder %s274, %s288
      %p290 = scmp.eq.s32.totalorder %s28, 0
      %p291 = por %p289, %p290
      %s293 = sadd.s32 %s292, 1
      %p296 = scmp.eq.s32.totalorder %s22, 1
      %p297 = scmp.ne.s32.totalorder %s292, %s294
      %p298 = scmp.eq.s32.totalorder %s22, 0
      %p299 = por %p297, %p298
      %p300 = scmp.ne.s32.totalorder %s292, %s294
      %p301 = scmp.eq.s32.totalorder %s27, 1
      %p302 = por %p300, %p301
      %p303 = scmp.ne.s32.totalorder %s294, %s295
      %p304 = scmp.eq.s32.totalorder %s27, 0
      %p305 = por %p303, %p304
      %p306 = scmp.ne.s32.totalorder %s294, %s295
      %p307 = scmp.eq.s32.totalorder %s28, 1
      %p308 = por %p306, %p307
      %p310 = scmp.ne.s32.totalorder %s295, %s309
      %p311 = scmp.eq.s32.totalorder %s28, 0
      %p312 = por %p310, %p311
      %s314 = sadd.s32 %s313, 1
      %p317 = scmp.eq.s32.totalorder %s22, 1
      %p318 = scmp.ne.s32.totalorder %s313, %s315
      %p319 = scmp.eq.s32.totalorder %s22, 0
      %p320 = por %p318, %p319
      %p321 = scmp.ne.s32.totalorder %s313, %s315
      %p322 = scmp.eq.s32.totalorder %s27, 1
      %p323 = por %p321, %p322
      %p324 = scmp.ne.s32.totalorder %s315, %s316
      %p325 = scmp.eq.s32.totalorder %s27, 0
      %p326 = por %p324, %p325
      %p327 = scmp.ne.s32.totalorder %s315, %s316
      %p328 = scmp.eq.s32.totalorder %s28, 1
      %p329 = por %p327, %p328
      %p331 = scmp.ne.s32.totalorder %s316, %s330
      %p332 = scmp.eq.s32.totalorder %s28, 0
      %p333 = por %p331, %p332
      %s334 = ssub.s32 %s22, %s29
      %p335 = scmp.eq.s32.totalorder %s334, 0
      %s337 = sadd.s32 %s336, 1
      %s338 = scalar_select %p335, %s336, %s337
      %p341 = pneg %p335
      %p342 = scmp.eq.s32.totalorder %s22, 1
      %p343 = por %p341, %p342
      %p344 = scmp.ne.s32.totalorder %s336, %s339
      %p345 = scmp.eq.s32.totalorder %s22, 0
      %p346 = por %p344, %p345
      %p347 = scmp.ne.s32.totalorder %s336, %s339
      %p348 = scmp.eq.s32.totalorder %s27, 1
      %p349 = por %p347, %p348
      %p350 = scmp.ne.s32.totalorder %s339, %s340
      %p351 = scmp.eq.s32.totalorder %s27, 0
      %p352 = por %p350, %p351
      %p353 = scmp.ne.s32.totalorder %s339, %s340
      %p354 = scmp.eq.s32.totalorder %s28, 1
      %p355 = por %p353, %p354
      %p357 = scmp.ne.s32.totalorder %s340, %s356
      %p358 = scmp.eq.s32.totalorder %s28, 0
      %p359 = por %p357, %p358
      %p360 = scmp.le.s32.totalorder 1, %s22
      %p361 = scmp.lt.s32.totalorder %s22, 3
      %p362 = pnand %p360, %p361
      %p363 = pneg %p362
      // Predicated region
      $region9: #{text_embedder_forward.4} parent=5 // pred_check
        _
      $region10: #{text_embedder_forward.4} parent=5 // pred_check_branch
        %365 = sbr.rel (%p362) target = $region12
      $region11: #{text_embedder_forward.4} parent=5 // pred_region
        %s366 = ssub.s32 %s22, 1
        // Predicated region
        $region13: #{text_embedder_forward.4} parent=11 // pred_check
          %p367 = pneg %p95
        $region14: #{text_embedder_forward.4} parent=11 // pred_check_branch
          %369 = sbr.rel (%p367) target = $region16
        $region15: #{text_embedder_forward.4} parent=11 // pred_region
          _
        $region16: #{text_embedder_forward.4} parent=11 // pred_fallthru
          _
        // Predicated region
        $region17: #{text_embedder_forward.4} parent=11 // pred_check
          %p370 = pneg %p116
        $region18: #{text_embedder_forward.4} parent=11 // pred_check_branch
          %372 = sbr.rel (%p370) target = $region20
        $region19: #{text_embedder_forward.4} parent=11 // pred_region
          _
        $region20: #{text_embedder_forward.4} parent=11 // pred_fallthru
          _
        // Predicated region
        $region21: #{text_embedder_forward.4} parent=11 // pred_check
          %p373 = pneg %p137
        $region22: #{text_embedder_forward.4} parent=11 // pred_check_branch
          %375 = sbr.rel (%p373) target = $region24
        $region23: #{text_embedder_forward.4} parent=11 // pred_region
          %s377 = ssub.s32 1024, 1024
          %378 = vsyncadd [#allocation3], %s377
          %s379 = sshll.u32 [#allocation2], 4
          %s380 = int_to_ptr.vmem [resolvable:$true] %s379
          %385 = dma.hbm_to_vmem [thread:$0]  %s4, 1024, %s380, [#allocation3], 64, 64, 4
        $region24: #{text_embedder_forward.4} parent=11 // pred_fallthru
          _
        // Predicated region
        $region25: #{text_embedder_forward.4} parent=11 // pred_check
          %p386 = pneg %p158
        $region26: #{text_embedder_forward.4} parent=11 // pred_check_branch
          %388 = sbr.rel (%p386) target = $region28
        $region27: #{text_embedder_forward.4} parent=11 // pred_region
          _
        $region28: #{text_embedder_forward.4} parent=11 // pred_fallthru
          _
        // Predicated region
        $region29: #{text_embedder_forward.4} parent=11 // pred_check
          %p389 = pneg %p179
        $region30: #{text_embedder_forward.4} parent=11 // pred_check_branch
          %391 = sbr.rel (%p389) target = $region32
        $region31: #{text_embedder_forward.4} parent=11 // pred_region
          _
        $region32: #{text_embedder_forward.4} parent=11 // pred_fallthru
          _
        // Predicated region
        $region33: #{text_embedder_forward.4} parent=11 // pred_check
          %p392 = pneg %p200
        $region34: #{text_embedder_forward.4} parent=11 // pred_check_branch
          %394 = sbr.rel (%p392) target = $region36
        $region35: #{text_embedder_forward.4} parent=11 // pred_region
          _
        $region36: #{text_embedder_forward.4} parent=11 // pred_fallthru
          _
        // Predicated region
        $region37: #{text_embedder_forward.4} parent=11 // pred_check
          %p395 = pneg %p221
        $region38: #{text_embedder_forward.4} parent=11 // pred_check_branch
          %397 = sbr.rel (%p395) target = $region40
        $region39: #{text_embedder_forward.4} parent=11 // pred_region
          _
        $region40: #{text_embedder_forward.4} parent=11 // pred_fallthru
          _
        // Predicated region
        $region41: #{text_embedder_forward.4} parent=11 // pred_check
          %p398 = pneg %p242
        $region42: #{text_embedder_forward.4} parent=11 // pred_check_branch
          %400 = sbr.rel (%p398) target = $region44
        $region43: #{text_embedder_forward.4} parent=11 // pred_region
          _
        $region44: #{text_embedder_forward.4} parent=11 // pred_fallthru
          _
        // Predicated region
        $region45: #{text_embedder_forward.4} parent=11 // pred_check
          %p401 = pneg %p263
        $region46: #{text_embedder_forward.4} parent=11 // pred_check_branch
          %403 = sbr.rel (%p401) target = $region48
        $region47: #{text_embedder_forward.4} parent=11 // pred_region
          %s405 = ssub.s32 2048, 2048
          %406 = vsyncadd [#allocation5], %s405
          %s407 = sshll.u32 [#allocation4], 4
          %s408 = int_to_ptr.vmem [resolvable:$true] %s407
          %413 = dma.hbm_to_vmem [thread:$0]  %s10, 2048, %s408, [#allocation5], 64, 64, 4
        $region48: #{text_embedder_forward.4} parent=11 // pred_fallthru
          _
        // Predicated region
        $region49: #{text_embedder_forward.4} parent=11 // pred_check
          %p414 = pneg %p284
        $region50: #{text_embedder_forward.4} parent=11 // pred_check_branch
          %416 = sbr.rel (%p414) target = $region52
        $region51: #{text_embedder_forward.4} parent=11 // pred_region
          _
        $region52: #{text_embedder_forward.4} parent=11 // pred_fallthru
          _
        // Predicated region
        $region53: #{text_embedder_forward.4} parent=11 // pred_check
          %p417 = pneg %p305
        $region54: #{text_embedder_forward.4} parent=11 // pred_check_branch
          %419 = sbr.rel (%p417) target = $region56
        $region55: #{text_embedder_forward.4} parent=11 // pred_region
          _
        $region56: #{text_embedder_forward.4} parent=11 // pred_fallthru
          _
        // Predicated region
        $region57: #{text_embedder_forward.4} parent=11 // pred_check
          %p420 = pneg %p326
        $region58: #{text_embedder_forward.4} parent=11 // pred_check_branch
          %422 = sbr.rel (%p420) target = $region60
        $region59: #{text_embedder_forward.4} parent=11 // pred_region
          _
        $region60: #{text_embedder_forward.4} parent=11 // pred_fallthru
          _
      $region12: #{text_embedder_forward.4} parent=5 // pred_fallthru
        _
      %p423 = scmp.lt.s32.totalorder %s22, 2
      // Predicated region
      $region61: #{text_embedder_forward.4} parent=5 // pred_check
        %p424 = pneg %p423
      $region62: #{text_embedder_forward.4} parent=5 // pred_check_branch
        %426 = sbr.rel (%p424) target = $region64
      $region63: #{text_embedder_forward.4} parent=5 // pred_region
        // Predicated region
        $region65: #{text_embedder_forward.4} parent=63 // pred_check
          %p427 = pneg %p42
        $region66: #{text_embedder_forward.4} parent=63 // pred_check_branch
          %429 = sbr.rel (%p427) target = $region68
        $region67: #{text_embedder_forward.4} parent=63 // pred_region
          %p430 = scmp.lt.s32.totalorder %s22, 1
          %s431 = scalar_select %p430, %s22, 1
          %s432 = smul.addr %s431, 4
          %s433 = scalar_lea.vmem %s0, %s432
        $region68: #{text_embedder_forward.4} parent=63 // pred_fallthru
          _
        // Predicated region
        $region69: #{text_embedder_forward.4} parent=63 // pred_check
          %p434 = pneg %p68
        $region70: #{text_embedder_forward.4} parent=63 // pred_check_branch
          %436 = sbr.rel (%p434) target = $region72
        $region71: #{text_embedder_forward.4} parent=63 // pred_region
          %p437 = scmp.lt.s32.totalorder %s22, 1
          %s438 = scalar_select %p437, %s22, 1
          %s439 = scalar_lea.vmem %s1, %s438
        $region72: #{text_embedder_forward.4} parent=63 // pred_fallthru
          _
      $region64: #{text_embedder_forward.4} parent=5 // pred_fallthru
        _
      %p440 = scmp.le.s32.totalorder 1, %s22
      %p441 = scmp.lt.s32.totalorder %s22, 3
      %p442 = pnand %p440, %p441
      %p443 = pneg %p442
      // Predicated region
      $region73: #{text_embedder_forward.4} parent=5 // pred_check
        _
      $region74: #{text_embedder_forward.4} parent=5 // pred_check_branch
        %445 = sbr.rel (%p442) target = $region76
      $region75: #{text_embedder_forward.4} parent=5 // pred_region
        %s446 = ssub.s32 %s22, 1
        // Predicated region
        $region77: #{text_embedder_forward.4} parent=75 // pred_check
          %p447 = pneg %p137
        $region78: #{text_embedder_forward.4} parent=75 // pred_check_branch
          %449 = sbr.rel (%p447) target = $region80
        $region79: #{text_embedder_forward.4} parent=75 // pred_region
          %450 = dma.done [#allocation3], 1024
        $region80: #{text_embedder_forward.4} parent=75 // pred_fallthru
          _
        // Predicated region
        $region81: #{text_embedder_forward.4} parent=75 // pred_check
          %p451 = pneg %p263
        $region82: #{text_embedder_forward.4} parent=75 // pred_check_branch
          %453 = sbr.rel (%p451) target = $region84
        $region83: #{text_embedder_forward.4} parent=75 // pred_region
          %454 = dma.done [#allocation5], 2048
        $region84: #{text_embedder_forward.4} parent=75 // pred_fallthru
          _
        %p455 = scmp.lt.s32.totalorder %s27, 1
        %s456 = scalar_select %p455, %s27, 1
        %s457 = smul.addr %s456, 4
        %s458 = scalar_lea.vmem %s0, %s457
        %p459 = pneg %p48
        %p460 = pneg %p45
        %p461 = scmp.lt.s32.totalorder %s27, 1
        %s462 = scalar_select %p461, %s27, 1
        %s463 = scalar_lea.vmem %s1, %s462
        %p464 = pneg %p74
        %p465 = pneg %p71
        %p466 = pneg %p95
        %p467 = pneg %p92
        %p468 = pneg %p116
        %p469 = pneg %p113
        %p470 = pneg %p137
        %p471 = pneg %p134
        %p472 = pneg %p158
        %p473 = pneg %p155
        %p474 = pneg %p179
        %p475 = pneg %p176
        %p476 = pneg %p200
        %p477 = pneg %p197
        %p478 = pneg %p221
        %p479 = pneg %p218
        %p480 = pneg %p242
        %p481 = pneg %p239
        %p482 = pneg %p263
        %p483 = pneg %p260
        %p484 = pneg %p284
        %p485 = pneg %p281
        %p486 = pneg %p305
        %p487 = pneg %p302
        %p488 = pneg %p326
        %p489 = pneg %p323
        %p490 = pneg %p352
        %p491 = pneg %p349
        %p492 = scmp.lt.s32.totalorder %s27, 1
        %s493 = scalar_select %p492, %s27, 1
        %s494 = smul.addr %s493, 4
        %s495 = scalar_lea.vmem %s14, %s494
        %p496 = scmp.lt.s32.totalorder %s27, 1
        %s497 = scalar_select %p496, %s27, 1
        %s498 = smul.addr %s497, 4
        %s499 = scalar_lea.vmem %s0, %s498
        %p500 = scmp.lt.s32.totalorder %s27, 1
        %s501 = scalar_select %p500, %s27, 1
        %s502 = scalar_lea.vmem %s1, %s501
        %p503 = scmp.lt.s32.totalorder %s27, 1
        %s504 = scalar_select %p503, %s27, 1
        %s505 = smul.addr %s504, 4
        %s506 = scalar_lea.vmem %s14, %s505
        %v508 = vld [vmem:[%s499] sm:$0xf]
        %v509 = vunpack.c.l.bf16 %v508
        %v510 = vld [vmem:[%s2] sm:$0xff]
        %v511 = vld [vmem:[%s2 + $0x8] sm:$0xf]
        %v512 = vld [vmem:[%s2 + $0xc] sm:$0xff]
        %v513 = vld [vmem:[%s2 + $0x14] sm:$0xf]
        %v514 = vld [vmem:[%s2 + $0x18] sm:$0xff]
        %v515 = vld [vmem:[%s2 + $0x20] sm:$0xf]
        %v516 = vld [vmem:[%s2 + $0x24] sm:$0xff]
        %v517 = vld [vmem:[%s2 + $0x2c] sm:$0xf]
        %v518 = vld [vmem:[%s2 + $0x30] sm:$0xff]
        %v519 = vld [vmem:[%s2 + $0x38] sm:$0xf]
        %v520 = vld [vmem:[%s2 + $0x3c] sm:$0xff]
        %v521 = vld [vmem:[%s2 + $0x44] sm:$0xf]
        %v522 = vld [vmem:[%s2 + $0x48] sm:$0xff]
        %v523 = vld [vmem:[%s2 + $0x50] sm:$0xf]
        %v524 = vld [vmem:[%s2 + $0x54] sm:$0xff]
        %v525 = vld [vmem:[%s2 + $0x5c] sm:$0xf]
        %v526 = vld [vmem:[%s2 + $0x60] sm:$0xff]
        %v527 = vld [vmem:[%s2 + $0x68] sm:$0xf]
        %v528 = vld [vmem:[%s2 + $0x6c] sm:$0xff]
        %v529 = vld [vmem:[%s2 + $0x74] sm:$0xf]
        %v530 = vld [vmem:[%s2 + $0x78] sm:$0xff]
        %v531 = vld [vmem:[%s2 + $0x80] sm:$0xf]
        %v532 = vld [vmem:[%s2 + $0x84] sm:$0xff]
        %v533 = vld [vmem:[%s2 + $0x8c] sm:$0xf]
        %v534 = vld [vmem:[%s2 + $0x90] sm:$0xff]
        %v535 = vld [vmem:[%s2 + $0x98] sm:$0xf]
        %v536 = vld [vmem:[%s2 + $0x9c] sm:$0xff]
        %v537 = vld [vmem:[%s2 + $0xa4] sm:$0xf]
        %v538 = vld [vmem:[%s2 + $0xa8] sm:$0xff]
        %v539 = vld [vmem:[%s2 + $0xb0] sm:$0xf]
        %v540 = vld [vmem:[%s2 + $0xb4] sm:$0xff]
        %v541 = vld [vmem:[%s2 + $0xbc] sm:$0xf]
        %v542 = vld [vmem:[%s3] sm:$0x7]
        %v544 = vlaneseq
        %v545 = vshrl.u32 %v544, 7
        %v546 = vsub.s32 0, %v545
        %v547 = vrot.slane %v542, %v546
        %v548 = vlaneseq
        %v549 = vshrl.u32 %v548, 7
        %v550 = vsub.s32 1, %v549
        %v551 = vrot.slane %v542, %v550
        %v552 = vlaneseq
        %v553 = vshrl.u32 %v552, 7
        %v554 = vsub.s32 2, %v553
        %v555 = vrot.slane %v542, %v554
        %v591 = vunpack.c.l.b16 %v510
        %v592 = vunpack.c.h.b16 %v510
        %v593 = vunpack.c.l.b16 %v511
        %v594 = vunpack.c.l.b16 %v512
        %v595 = vunpack.c.h.b16 %v512
        %v596 = vunpack.c.l.b16 %v513
        %v597 = vunpack.c.l.b16 %v514
        %v598 = vunpack.c.h.b16 %v514
        %v599 = vunpack.c.l.b16 %v515
        %v600 = vunpack.c.l.b16 %v516
        %v601 = vunpack.c.h.b16 %v516
        %v602 = vunpack.c.l.b16 %v517
        %v603 = vunpack.c.l.b16 %v518
        %v604 = vunpack.c.h.b16 %v518
        %v605 = vunpack.c.l.b16 %v519
        %v606 = vunpack.c.l.b16 %v520
        %v607 = vunpack.c.h.b16 %v520
        %v608 = vunpack.c.l.b16 %v521
        %v609 = vunpack.c.l.b16 %v522
        %v610 = vunpack.c.h.b16 %v522
        %v611 = vunpack.c.l.b16 %v523
        %v612 = vunpack.c.l.b16 %v524
        %v613 = vunpack.c.h.b16 %v524
        %v614 = vunpack.c.l.b16 %v525
        %v615 = vunpack.c.l.b16 %v526
        %v616 = vunpack.c.h.b16 %v526
        %v617 = vunpack.c.l.b16 %v527
        %v618 = vunpack.c.l.b16 %v528
        %v619 = vunpack.c.h.b16 %v528
        %v620 = vunpack.c.l.b16 %v529
        %v621 = vunpack.c.l.b16 %v530
        %v622 = vunpack.c.h.b16 %v530
        %v623 = vunpack.c.l.b16 %v531
        %v624 = vunpack.c.l.b16 %v532
        %v625 = vunpack.c.h.b16 %v532
        %v626 = vunpack.c.l.b16 %v533
        %v627 = vunpack.c.l.b16 %v534
        %v628 = vunpack.c.h.b16 %v534
        %v629 = vunpack.c.l.b16 %v535
        %v630 = vunpack.c.l.b16 %v536
        %v631 = vunpack.c.h.b16 %v536
        %v632 = vunpack.c.l.b16 %v537
        %v633 = vunpack.c.l.b16 %v538
        %v634 = vunpack.c.h.b16 %v538
        %v635 = vunpack.c.l.b16 %v539
        %v636 = vunpack.c.l.b16 %v540
        %v637 = vunpack.c.h.b16 %v540
        %v638 = vunpack.c.l.b16 %v541
        %v639 = vpack.c.b16 %v594, %v591
        %v640 = vpack.c.b16 %v595, %v592
        %v641 = vpack.c.b16 %v596, %v593
        %v642 = vpack.c.b16 %v600, %v597
        %v643 = vpack.c.b16 %v601, %v598
        %v644 = vpack.c.b16 %v602, %v599
        %v645 = vpack.c.b16 %v606, %v603
        %v646 = vpack.c.b16 %v607, %v604
        %v647 = vpack.c.b16 %v608, %v605
        %v648 = vpack.c.b16 %v612, %v609
        %v649 = vpack.c.b16 %v613, %v610
        %v650 = vpack.c.b16 %v614, %v611
        %v651 = vpack.c.b16 %v618, %v615
        %v652 = vpack.c.b16 %v619, %v616
        %v653 = vpack.c.b16 %v620, %v617
        %v654 = vpack.c.b16 %v624, %v621
        %v655 = vpack.c.b16 %v625, %v622
        %v656 = vpack.c.b16 %v626, %v623
        %v657 = vpack.c.b16 %v630, %v627
        %v658 = vpack.c.b16 %v631, %v628
        %v659 = vpack.c.b16 %v632, %v629
        %v660 = vpack.c.b16 %v636, %v633
        %v661 = vpack.c.b16 %v637, %v634
        %v662 = vpack.c.b16 %v638, %v635
        %687 = vmatprep.subr.bf16.mxu0 %v640
        %688 = vmatpush1.bf16.msra.mxu0 %v639
        %689 = vmatprep.subr.bf16.mxu0 %v643
        %690 = vmatpush1.bf16.msra.mxu0 %v642
        %691 = vmatprep.subr.bf16.mxu0 %v646
        %692 = vmatpush1.bf16.msra.mxu0 %v645
        %693 = vmatprep.subr.bf16.mxu0 %v649
        %694 = vmatpush1.bf16.msra.mxu0 %v648
        %695 = vmatprep.subr.bf16.mxu0 %v652
        %696 = vmatpush1.bf16.msra.mxu0 %v651
        %697 = vmatprep.subr.bf16.mxu0 %v655
        %698 = vmatpush1.bf16.msra.mxu0 %v654
        %699 = vmatprep.subr.bf16.mxu0 %v658
        %700 = vmatpush1.bf16.msra.mxu0 %v657
        %701 = vmatprep.subr.bf16.mxu0 %v661
        %702 = vmatpush1.bf16.msra.mxu0 %v660
        %703 = vmatprep.subr.bf16.mxu0 0
        %704 = vmatpush1.bf16.msra.mxu0 0
        %705 = vmatprep.subr.bf16.mxu0 0
        %706 = vmatpush1.bf16.msra.mxu0 0
        %707 = vmatprep.subr.bf16.mxu0 0
        %708 = vmatpush1.bf16.msra.mxu0 0
        %709 = vmatprep.subr.bf16.mxu0 0
        %710 = vmatpush1.bf16.msra.mxu0 0
        %711 = vmatprep.subr.bf16.mxu0 0
        %712 = vmatpush1.bf16.msra.mxu0 0
        %713 = vmatprep.subr.bf16.mxu0 0
        %714 = vmatpush1.bf16.msra.mxu0 0
        %715 = vmatprep.subr.bf16.mxu0 0
        %716 = vmatpush1.bf16.msra.mxu0 0
        %717 = vmatprep.subr.bf16.mxu0 0
        %718 = vmatpush1.bf16.msra.mxu0 0
        %719 = vmatprep.mubr.bf16.mxu0 0
        %720 = vmatmul.mubr.bf16.gmra.mrb[0].mxu0 %v508
        %v721 = vpop.f32.mrb[0].mxu0
        %v722 = vadd.f32 %v547, %v721
        %v723 = vpop.f32.mrb[0].mxu0
        %v724 = vadd.f32 %v551, %v723
        %v725 = vpop.f32.mrb[0].mxu0
        %v726 = vpop.f32.mrb[0].mxu0
        %727 = vdwg.mxu0
        %728 = vmatprep.subr.bf16.mxu0 0
        %729 = vmatpush1.bf16.msra.mxu0 %v641
        %730 = vmatprep.subr.bf16.mxu0 0
        %731 = vmatpush1.bf16.msra.mxu0 %v644
        %732 = vmatprep.subr.bf16.mxu0 0
        %733 = vmatpush1.bf16.msra.mxu0 %v647
        %734 = vmatprep.subr.bf16.mxu0 0
        %735 = vmatpush1.bf16.msra.mxu0 %v650
        %736 = vmatprep.subr.bf16.mxu0 0
        %737 = vmatpush1.bf16.msra.mxu0 %v653
        %738 = vmatprep.subr.bf16.mxu0 0
        %739 = vmatpush1.bf16.msra.mxu0 %v656
        %740 = vmatprep.subr.bf16.mxu0 0
        %741 = vmatpush1.bf16.msra.mxu0 %v659
        %742 = vmatprep.subr.bf16.mxu0 0
        %743 = vmatpush1.bf16.msra.mxu0 %v662
        %744 = vmatprep.subr.bf16.mxu0 0
        %745 = vmatpush1.bf16.msra.mxu0 0
        %746 = vmatprep.subr.bf16.mxu0 0
        %747 = vmatpush1.bf16.msra.mxu0 0
        %748 = vmatprep.subr.bf16.mxu0 0
        %749 = vmatpush1.bf16.msra.mxu0 0
        %750 = vmatprep.subr.bf16.mxu0 0
        %751 = vmatpush1.bf16.msra.mxu0 0
        %752 = vmatprep.subr.bf16.mxu0 0
        %753 = vmatpush1.bf16.msra.mxu0 0
        %754 = vmatprep.subr.bf16.mxu0 0
        %755 = vmatpush1.bf16.msra.mxu0 0
        %756 = vmatprep.subr.bf16.mxu0 0
        %757 = vmatpush1.bf16.msra.mxu0 0
        %758 = vmatprep.subr.bf16.mxu0 0
        %759 = vmatpush1.bf16.msra.mxu0 0
        %760 = vmatprep.mubr.bf16.mxu0 0
        %761 = vmatmul.mubr.bf16.gmra.mrb[0].mxu0 %v508
        %v762 = vpop.f32.mrb[0].mxu0
        %v763 = vadd.f32 %v555, %v762
        %v764 = vpop.f32.mrb[0].mxu0
        %v765 = vpop.f32.mrb[0].mxu0
        %v766 = vpop.f32.mrb[0].mxu0
        %767 = vdwg.mxu0
        %v768 = vmul.f32 %v722, 0.17677669
        %v769 = vpack.c.bf16 %v768, %v768
        %771 = vrot.lane.b32.xlu0 %v769, 96
        %v772 = vpop.permute.xlu0 %771
        %773 = vrot.lane.b32.xlu0 %v769, 64
        %v774 = vpop.permute.xlu0 %773
        %775 = vrot.lane.b32.xlu0 %v769, 32
        %v776 = vpop.permute.xlu0 %775
        %v777 = vpack.c.bf16 %v724, %v724
        %779 = vrot.lane.b32.xlu0 %v777, 96
        %v780 = vpop.permute.xlu0 %779
        %781 = vrot.lane.b32.xlu0 %v777, 64
        %v782 = vpop.permute.xlu0 %781
        %783 = vrot.lane.b32.xlu0 %v777, 32
        %v784 = vpop.permute.xlu0 %783
        %v785 = vpack.c.bf16 %v763, %v763
        %787 = vrot.lane.b32.xlu0 %v785, 96
        %v788 = vpop.permute.xlu0 %787
        %789 = vrot.lane.b32.xlu0 %v785, 64
        %v790 = vpop.permute.xlu0 %789
        %791 = vrot.lane.b32.xlu0 %v785, 32
        %v792 = vpop.permute.xlu0 %791
        %v793 = vld [vmem:[%s502] sm:$0x1]
        %v794 = vsub.f32 %v793, 1.0
        %v795 = vmul.f32 %v794, 1e+09
        %v797 = vlaneseq
        %v798 = vshrl.u32 %v797, 7
        %v799 = vsub.s32 0, %v798
        %v800 = vrot.slane %v795, %v799
        %vm802 = vcmask 261120
        %v804 = vsel %vm802, %v769, 0
        %v807 = vsel %vm802, %v777, 0
        %809 = vmatprep.subr.bf16.mxu0 0
        %810 = vmatpush1.bf16.xpose.msra.mxu0 %v807
        %811 = vmatprep.subr.bf16.mxu0 0
        %812 = vmatpush1.bf16.xpose.msra.mxu0 0
        %813 = vmatprep.subr.bf16.mxu0 0
        %814 = vmatpush1.bf16.xpose.msra.mxu0 0
        %815 = vmatprep.subr.bf16.mxu0 0
        %816 = vmatpush1.bf16.xpose.msra.mxu0 0
        %817 = vmatprep.subr.bf16.mxu0 0
        %818 = vmatpush1.bf16.xpose.msra.mxu0 0
        %819 = vmatprep.subr.bf16.mxu0 0
        %820 = vmatpush1.bf16.xpose.msra.mxu0 0
        %821 = vmatprep.subr.bf16.mxu0 0
        %822 = vmatpush1.bf16.xpose.msra.mxu0 0
        %823 = vmatprep.subr.bf16.mxu0 0
        %824 = vmatpush1.bf16.xpose.msra.mxu0 0
        %825 = vmatprep.subr.bf16.mxu0 0
        %826 = vmatpush1.bf16.xpose.msra.mxu0 0
        %827 = vmatprep.subr.bf16.mxu0 0
        %828 = vmatpush1.bf16.xpose.msra.mxu0 0
        %829 = vmatprep.subr.bf16.mxu0 0
        %830 = vmatpush1.bf16.xpose.msra.mxu0 0
        %831 = vmatprep.subr.bf16.mxu0 0
        %832 = vmatpush1.bf16.xpose.msra.mxu0 0
        %833 = vmatprep.subr.bf16.mxu0 0
        %834 = vmatpush1.bf16.xpose.msra.mxu0 0
        %835 = vmatprep.subr.bf16.mxu0 0
        %836 = vmatpush1.bf16.xpose.msra.mxu0 0
        %837 = vmatprep.subr.bf16.mxu0 0
        %838 = vmatpush1.bf16.xpose.msra.mxu0 0
        %839 = vmatprep.subr.bf16.mxu0 0
        %840 = vmatpush1.bf16.xpose.msra.mxu0 0
        %841 = vmatprep.mubr.bf16.mxu0 0
        %842 = vmatmul.mubr.bf16.gmra.mrb[0].mxu0 %v804
        %v843 = vpop.f32.mrb[0].mxu0
        %v844 = vadd.f32 %v800, %v843
        %v845 = vpop.f32.mrb[0].mxu0
        %v846 = vpop.f32.mrb[0].mxu0
        %v847 = vpop.f32.mrb[0].mxu0
        %848 = vdwg.mxu0
        %v850 = vsel %vm802, %v772, 0
        %v853 = vsel %vm802, %v780, 0
        %855 = vmatprep.subr.bf16.mxu0 0
        %856 = vmatpush1.bf16.xpose.msra.mxu0 %v853
        %857 = vmatprep.subr.bf16.mxu0 0
        %858 = vmatpush1.bf16.xpose.msra.mxu0 0
        %859 = vmatprep.subr.bf16.mxu0 0
        %860 = vmatpush1.bf16.xpose.msra.mxu0 0
        %861 = vmatprep.subr.bf16.mxu0 0
        %862 = vmatpush1.bf16.xpose.msra.mxu0 0
        %863 = vmatprep.subr.bf16.mxu0 0
        %864 = vmatpush1.bf16.xpose.msra.mxu0 0
        %865 = vmatprep.subr.bf16.mxu0 0
        %866 = vmatpush1.bf16.xpose.msra.mxu0 0
        %867 = vmatprep.subr.bf16.mxu0 0
        %868 = vmatpush1.bf16.xpose.msra.mxu0 0
        %869 = vmatprep.subr.bf16.mxu0 0
        %870 = vmatpush1.bf16.xpose.msra.mxu0 0
        %871 = vmatprep.subr.bf16.mxu0 0
        %872 = vmatpush1.bf16.xpose.msra.mxu0 0
        %873 = vmatprep.subr.bf16.mxu0 0
        %874 = vmatpush1.bf16.xpose.msra.mxu0 0
        %875 = vmatprep.subr.bf16.mxu0 0
        %876 = vmatpush1.bf16.xpose.msra.mxu0 0
        %877 = vmatprep.subr.bf16.mxu0 0
        %878 = vmatpush1.bf16.xpose.msra.mxu0 0
        %879 = vmatprep.subr.bf16.mxu0 0
        %880 = vmatpush1.bf16.xpose.msra.mxu0 0
        %881 = vmatprep.subr.bf16.mxu0 0
        %882 = vmatpush1.bf16.xpose.msra.mxu0 0
        %883 = vmatprep.subr.bf16.mxu0 0
        %884 = vmatpush1.bf16.xpose.msra.mxu0 0
        %885 = vmatprep.subr.bf16.mxu0 0
        %886 = vmatpush1.bf16.xpose.msra.mxu0 0
        %887 = vmatprep.mubr.bf16.mxu0 0
        %888 = vmatmul.mubr.bf16.gmra.mrb[0].mxu0 %v850
        %v889 = vpop.f32.mrb[0].mxu0
        %v890 = vadd.f32 %v800, %v889
        %v891 = vpop.f32.mrb[0].mxu0
        %v892 = vpop.f32.mrb[0].mxu0
        %v893 = vpop.f32.mrb[0].mxu0
        %894 = vdwg.mxu0
        %v896 = vsel %vm802, %v774, 0
        %v899 = vsel %vm802, %v782, 0
        %901 = vmatprep.subr.bf16.mxu0 0
        %902 = vmatpush1.bf16.xpose.msra.mxu0 %v899
        %903 = vmatprep.subr.bf16.mxu0 0
        %904 = vmatpush1.bf16.xpose.msra.mxu0 0
        %905 = vmatprep.subr.bf16.mxu0 0
        %906 = vmatpush1.bf16.xpose.msra.mxu0 0
        %907 = vmatprep.subr.bf16.mxu0 0
        %908 = vmatpush1.bf16.xpose.msra.mxu0 0
        %909 = vmatprep.subr.bf16.mxu0 0
        %910 = vmatpush1.bf16.xpose.msra.mxu0 0
        %911 = vmatprep.subr.bf16.mxu0 0
        %912 = vmatpush1.bf16.xpose.msra.mxu0 0
        %913 = vmatprep.subr.bf16.mxu0 0
        %914 = vmatpush1.bf16.xpose.msra.mxu0 0
        %915 = vmatprep.subr.bf16.mxu0 0
        %916 = vmatpush1.bf16.xpose.msra.mxu0 0
        %917 = vmatprep.subr.bf16.mxu0 0
        %918 = vmatpush1.bf16.xpose.msra.mxu0 0
        %919 = vmatprep.subr.bf16.mxu0 0
        %920 = vmatpush1.bf16.xpose.msra.mxu0 0
        %921 = vmatprep.subr.bf16.mxu0 0
        %922 = vmatpush1.bf16.xpose.msra.mxu0 0
        %923 = vmatprep.subr.bf16.mxu0 0
        %924 = vmatpush1.bf16.xpose.msra.mxu0 0
        %925 = vmatprep.subr.bf16.mxu0 0
        %926 = vmatpush1.bf16.xpose.msra.mxu0 0
        %927 = vmatprep.subr.bf16.mxu0 0
        %928 = vmatpush1.bf16.xpose.msra.mxu0 0
        %929 = vmatprep.subr.bf16.mxu0 0
        %930 = vmatpush1.bf16.xpose.msra.mxu0 0
        %931 = vmatprep.subr.bf16.mxu0 0
        %932 = vmatpush1.bf16.xpose.msra.mxu0 0
        %933 = vmatprep.mubr.bf16.mxu0 0
        %934 = vmatmul.mubr.bf16.gmra.mrb[0].mxu0 %v896
        %v935 = vpop.f32.mrb[0].mxu0
        %v936 = vadd.f32 %v800, %v935
        %v937 = vpop.f32.mrb[0].mxu0
        %v938 = vpop.f32.mrb[0].mxu0
        %v939 = vpop.f32.mrb[0].mxu0
        %940 = vdwg.mxu0
        %v942 = vsel %vm802, %v776, 0
        %v945 = vsel %vm802, %v784, 0
        %947 = vmatprep.subr.bf16.mxu0 0
        %948 = vmatpush1.bf16.xpose.msra.mxu0 %v945
        %949 = vmatprep.subr.bf16.mxu0 0
        %950 = vmatpush1.bf16.xpose.msra.mxu0 0
        %951 = vmatprep.subr.bf16.mxu0 0
        %952 = vmatpush1.bf16.xpose.msra.mxu0 0
        %953 = vmatprep.subr.bf16.mxu0 0
        %954 = vmatpush1.bf16.xpose.msra.mxu0 0
        %955 = vmatprep.subr.bf16.mxu0 0
        %956 = vmatpush1.bf16.xpose.msra.mxu0 0
        %957 = vmatprep.subr.bf16.mxu0 0
        %958 = vmatpush1.bf16.xpose.msra.mxu0 0
        %959 = vmatprep.subr.bf16.mxu0 0
        %960 = vmatpush1.bf16.xpose.msra.mxu0 0
        %961 = vmatprep.subr.bf16.mxu0 0
        %962 = vmatpush1.bf16.xpose.msra.mxu0 0
        %963 = vmatprep.subr.bf16.mxu0 0
        %964 = vmatpush1.bf16.xpose.msra.mxu0 0
        %965 = vmatprep.subr.bf16.mxu0 0
        %966 = vmatpush1.bf16.xpose.msra.mxu0 0
        %967 = vmatprep.subr.bf16.mxu0 0
        %968 = vmatpush1.bf16.xpose.msra.mxu0 0
        %969 = vmatprep.subr.bf16.mxu0 0
        %970 = vmatpush1.bf16.xpose.msra.mxu0 0
        %971 = vmatprep.subr.bf16.mxu0 0
        %972 = vmatpush1.bf16.xpose.msra.mxu0 0
        %973 = vmatprep.subr.bf16.mxu0 0
        %974 = vmatpush1.bf16.xpose.msra.mxu0 0
        %975 = vmatprep.subr.bf16.mxu0 0
        %976 = vmatpush1.bf16.xpose.msra.mxu0 0
        %977 = vmatprep.subr.bf16.mxu0 0
        %978 = vmatpush1.bf16.xpose.msra.mxu0 0
        %979 = vmatprep.mubr.bf16.mxu0 0
        %980 = vmatmul.mubr.bf16.gmra.mrb[0].mxu0 %v942
        %v981 = vpop.f32.mrb[0].mxu0
        %v982 = vadd.f32 %v800, %v981
        %v983 = vpop.f32.mrb[0].mxu0
        %v984 = vpop.f32.mrb[0].mxu0
        %v985 = vpop.f32.mrb[0].mxu0
        %986 = vdwg.mxu0
        %vm987 = vcmask 64512
        %v988 = vsel %vm987, %v844, -inf
        %989 = vmax.xlane.f32.xlu0 %v988
        %v990 = vpop.xlane.xlu0 %989
        %v991 = vsel %vm987, %v890, -inf
        %992 = vmax.xlane.f32.xlu0 %v991
        %v993 = vpop.xlane.xlu0 %992
        %v994 = vsel %vm987, %v936, -inf
        %995 = vmax.xlane.f32.xlu0 %v994
        %v996 = vpop.xlane.xlu0 %995
        %v997 = vsel %vm987, %v982, -inf
        %998 = vmax.xlane.f32.xlu0 %v997
        %v999 = vpop.xlane.xlu0 %998
        %v1000 = vsub.f32 %v844, %v990
        %v1001 = vsub.f32 %v890, %v993
        %v1002 = vsub.f32 %v936, %v996
        %v1003 = vsub.f32 %v982, %v999
        %v1004 = vmul.f32 %v1000, 1.442695
        %v1005 = vpow.pop %v1004
        %v1006 = vmul.f32 %v1001, 1.442695
        %v1007 = vpow.pop %v1006
        %v1008 = vmul.f32 %v1002, 1.442695
        %v1009 = vpow.pop %v1008
        %v1010 = vmul.f32 %v1003, 1.442695
        %v1011 = vpow.pop %v1010
        %v1012 = vsel %vm987, %v1005, 0.0
        %1013 = vadd.xlane.f32.xlu0 %v1012
        %v1014 = vpop.xlane.xlu0 %1013
        %v1015 = vsel %vm987, %v1007, 0.0
        %1016 = vadd.xlane.f32.xlu0 %v1015
        %v1017 = vpop.xlane.xlu0 %1016
        %v1018 = vsel %vm987, %v1009, 0.0
        %1019 = vadd.xlane.f32.xlu0 %v1018
        %v1020 = vpop.xlane.xlu0 %1019
        %v1021 = vsel %vm987, %v1011, 0.0
        %1022 = vadd.xlane.f32.xlu0 %v1021
        %v1023 = vpop.xlane.xlu0 %1022
        %v1024 = vrcp.pop %v1014
        %v1025 = vrcp.pop %v1017
        %v1026 = vrcp.pop %v1020
        %v1027 = vrcp.pop %v1023
        %v1028 = vmul.f32 %v1005, %v1024
        %v1029 = vmul.f32 %v1007, %v1025
        %v1030 = vmul.f32 %v1009, %v1026
        %v1031 = vmul.f32 %v1011, %v1027
        %v1032 = vpack.c.bf16 %v1028, %v1028
        %v1033 = vpack.c.bf16 %v1029, %v1029
        %v1034 = vpack.c.bf16 %v1030, %v1030
        %v1035 = vpack.c.bf16 %v1031, %v1031
        %v1037 = vsel %vm987, %v1032, 0
        %vm1039 = vcmask 1043456
        %v1041 = vsel %vm1039, %v785, 0
        %1043 = vmatprep.subr.bf16.mxu0 0
        %1044 = vmatpush1.bf16.msra.mxu0 %v1041
        %1045 = vmatprep.subr.bf16.mxu0 0
        %1046 = vmatpush1.bf16.msra.mxu0 0
        %1047 = vmatprep.subr.bf16.mxu0 0
        %1048 = vmatpush1.bf16.msra.mxu0 0
        %1049 = vmatprep.subr.bf16.mxu0 0
        %1050 = vmatpush1.bf16.msra.mxu0 0
        %1051 = vmatprep.subr.bf16.mxu0 0
        %1052 = vmatpush1.bf16.msra.mxu0 0
        %1053 = vmatprep.subr.bf16.mxu0 0
        %1054 = vmatpush1.bf16.msra.mxu0 0
        %1055 = vmatprep.subr.bf16.mxu0 0
        %1056 = vmatpush1.bf16.msra.mxu0 0
        %1057 = vmatprep.subr.bf16.mxu0 0
        %1058 = vmatpush1.bf16.msra.mxu0 0
        %1059 = vmatprep.subr.bf16.mxu0 0
        %1060 = vmatpush1.bf16.msra.mxu0 0
        %1061 = vmatprep.subr.bf16.mxu0 0
        %1062 = vmatpush1.bf16.msra.mxu0 0
        %1063 = vmatprep.subr.bf16.mxu0 0
        %1064 = vmatpush1.bf16.msra.mxu0 0
        %1065 = vmatprep.subr.bf16.mxu0 0
        %1066 = vmatpush1.bf16.msra.mxu0 0
        %1067 = vmatprep.subr.bf16.mxu0 0
        %1068 = vmatpush1.bf16.msra.mxu0 0
        %1069 = vmatprep.subr.bf16.mxu0 0
        %1070 = vmatpush1.bf16.msra.mxu0 0
        %1071 = vmatprep.subr.bf16.mxu0 0
        %1072 = vmatpush1.bf16.msra.mxu0 0
        %1073 = vmatprep.subr.bf16.mxu0 0
        %1074 = vmatpush1.bf16.msra.mxu0 0
        %1075 = vmatprep.mubr.bf16.mxu0 0
        %1076 = vmatmul.mubr.bf16.gmra.mrb[0].mxu0 %v1037
        %v1077 = vpop.f32.mrb[0].mxu0
        %v1078 = vadd.f32 0.0, %v1077
        %v1079 = vpop.f32.mrb[0].mxu0
        %v1080 = vpop.f32.mrb[0].mxu0
        %v1081 = vpop.f32.mrb[0].mxu0
        %1082 = vdwg.mxu0
        %v1084 = vsel %vm987, %v1033, 0
        %v1087 = vsel %vm1039, %v788, 0
        %1089 = vmatprep.subr.bf16.mxu0 0
        %1090 = vmatpush1.bf16.msra.mxu0 %v1087
        %1091 = vmatprep.subr.bf16.mxu0 0
        %1092 = vmatpush1.bf16.msra.mxu0 0
        %1093 = vmatprep.subr.bf16.mxu0 0
        %1094 = vmatpush1.bf16.msra.mxu0 0
        %1095 = vmatprep.subr.bf16.mxu0 0
        %1096 = vmatpush1.bf16.msra.mxu0 0
        %1097 = vmatprep.subr.bf16.mxu0 0
        %1098 = vmatpush1.bf16.msra.mxu0 0
        %1099 = vmatprep.subr.bf16.mxu0 0
        %1100 = vmatpush1.bf16.msra.mxu0 0
        %1101 = vmatprep.subr.bf16.mxu0 0
        %1102 = vmatpush1.bf16.msra.mxu0 0
        %1103 = vmatprep.subr.bf16.mxu0 0
        %1104 = vmatpush1.bf16.msra.mxu0 0
        %1105 = vmatprep.subr.bf16.mxu0 0
        %1106 = vmatpush1.bf16.msra.mxu0 0
        %1107 = vmatprep.subr.bf16.mxu0 0
        %1108 = vmatpush1.bf16.msra.mxu0 0
        %1109 = vmatprep.subr.bf16.mxu0 0
        %1110 = vmatpush1.bf16.msra.mxu0 0
        %1111 = vmatprep.subr.bf16.mxu0 0
        %1112 = vmatpush1.bf16.msra.mxu0 0
        %1113 = vmatprep.subr.bf16.mxu0 0
        %1114 = vmatpush1.bf16.msra.mxu0 0
        %1115 = vmatprep.subr.bf16.mxu0 0
        %1116 = vmatpush1.bf16.msra.mxu0 0
        %1117 = vmatprep.subr.bf16.mxu0 0
        %1118 = vmatpush1.bf16.msra.mxu0 0
        %1119 = vmatprep.subr.bf16.mxu0 0
        %1120 = vmatpush1.bf16.msra.mxu0 0
        %1121 = vmatprep.mubr.bf16.mxu0 0
        %1122 = vmatmul.mubr.bf16.gmra.mrb[0].mxu0 %v1084
        %v1123 = vpop.f32.mrb[0].mxu0
        %v1124 = vadd.f32 0.0, %v1123
        %v1125 = vpop.f32.mrb[0].mxu0
        %v1126 = vpop.f32.mrb[0].mxu0
        %v1127 = vpop.f32.mrb[0].mxu0
        %1128 = vdwg.mxu0
        %v1130 = vsel %vm987, %v1034, 0
        %v1133 = vsel %vm1039, %v790, 0
        %1135 = vmatprep.subr.bf16.mxu0 0
        %1136 = vmatpush1.bf16.msra.mxu0 %v1133
        %1137 = vmatprep.subr.bf16.mxu0 0
        %1138 = vmatpush1.bf16.msra.mxu0 0
        %1139 = vmatprep.subr.bf16.mxu0 0
        %1140 = vmatpush1.bf16.msra.mxu0 0
        %1141 = vmatprep.subr.bf16.mxu0 0
        %1142 = vmatpush1.bf16.msra.mxu0 0
        %1143 = vmatprep.subr.bf16.mxu0 0
        %1144 = vmatpush1.bf16.msra.mxu0 0
        %1145 = vmatprep.subr.bf16.mxu0 0
        %1146 = vmatpush1.bf16.msra.mxu0 0
        %1147 = vmatprep.subr.bf16.mxu0 0
        %1148 = vmatpush1.bf16.msra.mxu0 0
        %1149 = vmatprep.subr.bf16.mxu0 0
        %1150 = vmatpush1.bf16.msra.mxu0 0
        %1151 = vmatprep.subr.bf16.mxu0 0
        %1152 = vmatpush1.bf16.msra.mxu0 0
        %1153 = vmatprep.subr.bf16.mxu0 0
        %1154 = vmatpush1.bf16.msra.mxu0 0
        %1155 = vmatprep.subr.bf16.mxu0 0
        %1156 = vmatpush1.bf16.msra.mxu0 0
        %1157 = vmatprep.subr.bf16.mxu0 0
        %1158 = vmatpush1.bf16.msra.mxu0 0
        %1159 = vmatprep.subr.bf16.mxu0 0
        %1160 = vmatpush1.bf16.msra.mxu0 0
        %1161 = vmatprep.subr.bf16.mxu0 0
        %1162 = vmatpush1.bf16.msra.mxu0 0
        %1163 = vmatprep.subr.bf16.mxu0 0
        %1164 = vmatpush1.bf16.msra.mxu0 0
        %1165 = vmatprep.subr.bf16.mxu0 0
        %1166 = vmatpush1.bf16.msra.mxu0 0
        %1167 = vmatprep.mubr.bf16.mxu0 0
        %1168 = vmatmul.mubr.bf16.gmra.mrb[0].mxu0 %v1130
        %v1169 = vpop.f32.mrb[0].mxu0
        %v1170 = vadd.f32 0.0, %v1169
        %v1171 = vpop.f32.mrb[0].mxu0
        %v1172 = vpop.f32.mrb[0].mxu0
        %v1173 = vpop.f32.mrb[0].mxu0
        %1174 = vdwg.mxu0
        %v1176 = vsel %vm987, %v1035, 0
        %v1179 = vsel %vm1039, %v792, 0
        %1181 = vmatprep.subr.bf16.mxu0 0
        %1182 = vmatpush1.bf16.msra.mxu0 %v1179
        %1183 = vmatprep.subr.bf16.mxu0 0
        %1184 = vmatpush1.bf16.msra.mxu0 0
        %1185 = vmatprep.subr.bf16.mxu0 0
        %1186 = vmatpush1.bf16.msra.mxu0 0
        %1187 = vmatprep.subr.bf16.mxu0 0
        %1188 = vmatpush1.bf16.msra.mxu0 0
        %1189 = vmatprep.subr.bf16.mxu0 0
        %1190 = vmatpush1.bf16.msra.mxu0 0
        %1191 = vmatprep.subr.bf16.mxu0 0
        %1192 = vmatpush1.bf16.msra.mxu0 0
        %1193 = vmatprep.subr.bf16.mxu0 0
        %1194 = vmatpush1.bf16.msra.mxu0 0
        %1195 = vmatprep.subr.bf16.mxu0 0
        %1196 = vmatpush1.bf16.msra.mxu0 0
        %1197 = vmatprep.subr.bf16.mxu0 0
        %1198 = vmatpush1.bf16.msra.mxu0 0
        %1199 = vmatprep.subr.bf16.mxu0 0
        %1200 = vmatpush1.bf16.msra.mxu0 0
        %1201 = vmatprep.subr.bf16.mxu0 0
        %1202 = vmatpush1.bf16.msra.mxu0 0
        %1203 = vmatprep.subr.bf16.mxu0 0
        %1204 = vmatpush1.bf16.msra.mxu0 0
        %1205 = vmatprep.subr.bf16.mxu0 0
        %1206 = vmatpush1.bf16.msra.mxu0 0
        %1207 = vmatprep.subr.bf16.mxu0 0
        %1208 = vmatpush1.bf16.msra.mxu0 0
        %1209 = vmatprep.subr.bf16.mxu0 0
        %1210 = vmatpush1.bf16.msra.mxu0 0
        %1211 = vmatprep.subr.bf16.mxu0 0
        %1212 = vmatpush1.bf16.msra.mxu0 0
        %1213 = vmatprep.mubr.bf16.mxu0 0
        %1214 = vmatmul.mubr.bf16.gmra.mrb[0].mxu0 %v1176
        %v1215 = vpop.f32.mrb[0].mxu0
        %v1216 = vadd.f32 0.0, %v1215
        %v1217 = vpop.f32.mrb[0].mxu0
        %v1218 = vpop.f32.mrb[0].mxu0
        %v1219 = vpop.f32.mrb[0].mxu0
        %1220 = vdwg.mxu0
        %1222 = vrot.lane.b32.xlu0 %v1124, 32
        %v1223 = vpop.permute.xlu0 %1222
        %1226 = vrot.lane.b32.xlu0 %v1170, 64
        %v1227 = vpop.permute.xlu0 %1226
        %1230 = vrot.lane.b32.xlu0 %v1216, 96
        %v1231 = vpop.permute.xlu0 %1230
        %v1233 = vsel %vm802, %v1078, %v1223
        %vm1234 = vcmask 523264
        %v1235 = vsel %vm1234, %v1233, %v1227
        %vm1236 = vcmask 785408
        %v1237 = vsel %vm1236, %v1235, %v1231
        %v1238 = vpack.c.bf16 %v1237, %v1237
        %v1239 = vld [vmem:[#allocation2] sm:$0xf]
        %v1240 = vld [vmem:[#allocation2 + $0x4] sm:$0xf]
        %v1241 = vld [vmem:[#allocation2 + $0x8] sm:$0xf]
        %v1242 = vld [vmem:[#allocation2 + $0xc] sm:$0xf]
        %v1243 = vld [vmem:[#allocation2 + $0x10] sm:$0xf]
        %v1244 = vld [vmem:[#allocation2 + $0x14] sm:$0xf]
        %v1245 = vld [vmem:[#allocation2 + $0x18] sm:$0xf]
        %v1246 = vld [vmem:[#allocation2 + $0x1c] sm:$0xf]
        %v1247 = vld [vmem:[#allocation2 + $0x20] sm:$0xf]
        %v1248 = vld [vmem:[#allocation2 + $0x24] sm:$0xf]
        %v1249 = vld [vmem:[#allocation2 + $0x28] sm:$0xf]
        %v1250 = vld [vmem:[#allocation2 + $0x2c] sm:$0xf]
        %v1251 = vld [vmem:[#allocation2 + $0x30] sm:$0xf]
        %v1252 = vld [vmem:[#allocation2 + $0x34] sm:$0xf]
        %v1253 = vld [vmem:[#allocation2 + $0x38] sm:$0xf]
        %v1254 = vld [vmem:[#allocation2 + $0x3c] sm:$0xf]
        %v1255 = vld [vmem:[%s5] sm:$0x1]
        %v1257 = vlaneseq
        %v1258 = vshrl.u32 %v1257, 7
        %v1259 = vsub.s32 0, %v1258
        %v1260 = vrot.slane %v1255, %v1259
        %v1278 = vunpack.c.l.b16 %v1239
        %v1279 = vunpack.c.l.b16 %v1240
        %v1280 = vunpack.c.l.b16 %v1241
        %v1281 = vunpack.c.l.b16 %v1242
        %v1282 = vunpack.c.l.b16 %v1243
        %v1283 = vunpack.c.l.b16 %v1244
        %v1284 = vunpack.c.l.b16 %v1245
        %v1285 = vunpack.c.l.b16 %v1246
        %v1286 = vunpack.c.l.b16 %v1247
        %v1287 = vunpack.c.l.b16 %v1248
        %v1288 = vunpack.c.l.b16 %v1249
        %v1289 = vunpack.c.l.b16 %v1250
        %v1290 = vunpack.c.l.b16 %v1251
        %v1291 = vunpack.c.l.b16 %v1252
        %v1292 = vunpack.c.l.b16 %v1253
        %v1293 = vunpack.c.l.b16 %v1254
        %v1294 = vpack.c.b16 %v1279, %v1278
        %v1295 = vpack.c.b16 %v1281, %v1280
        %v1296 = vpack.c.b16 %v1283, %v1282
        %v1297 = vpack.c.b16 %v1285, %v1284
        %v1298 = vpack.c.b16 %v1287, %v1286
        %v1299 = vpack.c.b16 %v1289, %v1288
        %v1300 = vpack.c.b16 %v1291, %v1290
        %v1301 = vpack.c.b16 %v1293, %v1292
        %1310 = vmatprep.subr.bf16.mxu0 0
        %1311 = vmatpush1.bf16.msra.mxu0 %v1294
        %1312 = vmatprep.subr.bf16.mxu0 0
        %1313 = vmatpush1.bf16.msra.mxu0 %v1295
        %1314 = vmatprep.subr.bf16.mxu0 0
        %1315 = vmatpush1.bf16.msra.mxu0 %v1296
        %1316 = vmatprep.subr.bf16.mxu0 0
        %1317 = vmatpush1.bf16.msra.mxu0 %v1297
        %1318 = vmatprep.subr.bf16.mxu0 0
        %1319 = vmatpush1.bf16.msra.mxu0 %v1298
        %1320 = vmatprep.subr.bf16.mxu0 0
        %1321 = vmatpush1.bf16.msra.mxu0 %v1299
        %1322 = vmatprep.subr.bf16.mxu0 0
        %1323 = vmatpush1.bf16.msra.mxu0 %v1300
        %1324 = vmatprep.subr.bf16.mxu0 0
        %1325 = vmatpush1.bf16.msra.mxu0 %v1301
        %1326 = vmatprep.subr.bf16.mxu0 0
        %1327 = vmatpush1.bf16.msra.mxu0 0
        %1328 = vmatprep.subr.bf16.mxu0 0
        %1329 = vmatpush1.bf16.msra.mxu0 0
        %1330 = vmatprep.subr.bf16.mxu0 0
        %1331 = vmatpush1.bf16.msra.mxu0 0
        %1332 = vmatprep.subr.bf16.mxu0 0
        %1333 = vmatpush1.bf16.msra.mxu0 0
        %1334 = vmatprep.subr.bf16.mxu0 0
        %1335 = vmatpush1.bf16.msra.mxu0 0
        %1336 = vmatprep.subr.bf16.mxu0 0
        %1337 = vmatpush1.bf16.msra.mxu0 0
        %1338 = vmatprep.subr.bf16.mxu0 0
        %1339 = vmatpush1.bf16.msra.mxu0 0
        %1340 = vmatprep.subr.bf16.mxu0 0
        %1341 = vmatpush1.bf16.msra.mxu0 0
        %1342 = vmatprep.mubr.bf16.mxu0 0
        %1343 = vmatmul.mubr.bf16.gmra.mrb[0].mxu0 %v1238
        %v1344 = vpop.f32.mrb[0].mxu0
        %v1345 = vadd.f32 %v1260, %v1344
        %v1346 = vpop.f32.mrb[0].mxu0
        %v1347 = vpop.f32.mrb[0].mxu0
        %v1348 = vpop.f32.mrb[0].mxu0
        %1349 = vdwg.mxu0
        %v1350 = vadd.f32 %v509, %v1345
        %v1351 = vld [vmem:[%s6] sm:$0x1]
        %v1352 = vld [vmem:[%s7] sm:$0x1]
        %1353 = vadd.xlane.f32.xlu0 %v1350
        %v1354 = vpop.xlane.xlu0 %1353
        %v1355 = vrcp.pop 128.0
        %v1356 = vmul.f32 %v1354, %v1355
        %v1357 = vsub.f32 %v1350, %v1356
        %v1358 = vmul.f32 %v1357, %v1357
        %1359 = vadd.xlane.f32.xlu0 %v1358
        %v1360 = vpop.xlane.xlu0 %1359
        %v1361 = vmul.f32 %v1360, %v1355
        %v1362 = vadd.f32 %v1361, 1e-12
        %v1363 = vrsqrt.pop %v1362
        %v1364 = vmul.f32 %v1357, %v1363
        %v1366 = vlaneseq
        %v1367 = vshrl.u32 %v1366, 7
        %v1368 = vsub.s32 0, %v1367
        %v1369 = vrot.slane %v1351, %v1368
        %v1371 = vmul.f32 %v1364, %v1369
        %v1373 = vlaneseq
        %v1374 = vshrl.u32 %v1373, 7
        %v1375 = vsub.s32 0, %v1374
        %v1376 = vrot.slane %v1352, %v1375
        %v1378 = vadd.f32 %v1371, %v1376
        %v1379 = vpack.c.bf16 %v1378, %v1378
        %v1380 = vld [vmem:[%s8] sm:$0xff]
        %v1381 = vld [vmem:[%s8 + $0x8] sm:$0xff]
        %v1382 = vld [vmem:[%s8 + $0x10] sm:$0xff]
        %v1383 = vld [vmem:[%s8 + $0x18] sm:$0xff]
        %v1384 = vld [vmem:[%s8 + $0x20] sm:$0xff]
        %v1385 = vld [vmem:[%s8 + $0x28] sm:$0xff]
        %v1386 = vld [vmem:[%s8 + $0x30] sm:$0xff]
        %v1387 = vld [vmem:[%s8 + $0x38] sm:$0xff]
        %v1388 = vld [vmem:[%s8 + $0x40] sm:$0xff]
        %v1389 = vld [vmem:[%s8 + $0x48] sm:$0xff]
        %v1390 = vld [vmem:[%s8 + $0x50] sm:$0xff]
        %v1391 = vld [vmem:[%s8 + $0x58] sm:$0xff]
        %v1392 = vld [vmem:[%s8 + $0x60] sm:$0xff]
        %v1393 = vld [vmem:[%s8 + $0x68] sm:$0xff]
        %v1394 = vld [vmem:[%s8 + $0x70] sm:$0xff]
        %v1395 = vld [vmem:[%s8 + $0x78] sm:$0xff]
        %v1396 = vld [vmem:[%s9] sm:$0x3]
        %v1398 = vlaneseq
        %v1399 = vshrl.u32 %v1398, 7
        %v1400 = vsub.s32 0, %v1399
        %v1401 = vrot.slane %v1396, %v1400
        %v1402 = vlaneseq
        %v1403 = vshrl.u32 %v1402, 7
        %v1404 = vsub.s32 1, %v1403
        %v1405 = vrot.slane %v1396, %v1404
        %v1424 = vunpack.c.l.b16 %v1380
        %v1425 = vunpack.c.h.b16 %v1380
        %v1426 = vunpack.c.l.b16 %v1381
        %v1427 = vunpack.c.h.b16 %v1381
        %v1428 = vunpack.c.l.b16 %v1382
        %v1429 = vunpack.c.h.b16 %v1382
        %v1430 = vunpack.c.l.b16 %v1383
        %v1431 = vunpack.c.h.b16 %v1383
        %v1432 = vunpack.c.l.b16 %v1384
        %v1433 = vunpack.c.h.b16 %v1384
        %v1434 = vunpack.c.l.b16 %v1385
        %v1435 = vunpack.c.h.b16 %v1385
        %v1436 = vunpack.c.l.b16 %v1386
        %v1437 = vunpack.c.h.b16 %v1386
        %v1438 = vunpack.c.l.b16 %v1387
        %v1439 = vunpack.c.h.b16 %v1387
        %v1440 = vunpack.c.l.b16 %v1388
        %v1441 = vunpack.c.h.b16 %v1388
        %v1442 = vunpack.c.l.b16 %v1389
        %v1443 = vunpack.c.h.b16 %v1389
        %v1444 = vunpack.c.l.b16 %v1390
        %v1445 = vunpack.c.h.b16 %v1390
        %v1446 = vunpack.c.l.b16 %v1391
        %v1447 = vunpack.c.h.b16 %v1391
        %v1448 = vunpack.c.l.b16 %v1392
        %v1449 = vunpack.c.h.b16 %v1392
        %v1450 = vunpack.c.l.b16 %v1393
        %v1451 = vunpack.c.h.b16 %v1393
        %v1452 = vunpack.c.l.b16 %v1394
        %v1453 = vunpack.c.h.b16 %v1394
        %v1454 = vunpack.c.l.b16 %v1395
        %v1455 = vunpack.c.h.b16 %v1395
        %v1456 = vpack.c.b16 %v1426, %v1424
        %v1457 = vpack.c.b16 %v1427, %v1425
        %v1458 = vpack.c.b16 %v1430, %v1428
        %v1459 = vpack.c.b16 %v1431, %v1429
        %v1460 = vpack.c.b16 %v1434, %v1432
        %v1461 = vpack.c.b16 %v1435, %v1433
        %v1462 = vpack.c.b16 %v1438, %v1436
        %v1463 = vpack.c.b16 %v1439, %v1437
        %v1464 = vpack.c.b16 %v1442, %v1440
        %v1465 = vpack.c.b16 %v1443, %v1441
        %v1466 = vpack.c.b16 %v1446, %v1444
        %v1467 = vpack.c.b16 %v1447, %v1445
        %v1468 = vpack.c.b16 %v1450, %v1448
        %v1469 = vpack.c.b16 %v1451, %v1449
        %v1470 = vpack.c.b16 %v1454, %v1452
        %v1471 = vpack.c.b16 %v1455, %v1453
        %1488 = vmatprep.subr.bf16.mxu0 %v1457
        %1489 = vmatpush1.bf16.msra.mxu0 %v1456
        %1490 = vmatprep.subr.bf16.mxu0 %v1459
        %1491 = vmatpush1.bf16.msra.mxu0 %v1458
        %1492 = vmatprep.subr.bf16.mxu0 %v1461
        %1493 = vmatpush1.bf16.msra.mxu0 %v1460
        %1494 = vmatprep.subr.bf16.mxu0 %v1463
        %1495 = vmatpush1.bf16.msra.mxu0 %v1462
        %1496 = vmatprep.subr.bf16.mxu0 %v1465
        %1497 = vmatpush1.bf16.msra.mxu0 %v1464
        %1498 = vmatprep.subr.bf16.mxu0 %v1467
        %1499 = vmatpush1.bf16.msra.mxu0 %v1466
        %1500 = vmatprep.subr.bf16.mxu0 %v1469
        %1501 = vmatpush1.bf16.msra.mxu0 %v1468
        %1502 = vmatprep.subr.bf16.mxu0 %v1471
        %1503 = vmatpush1.bf16.msra.mxu0 %v1470
        %1504 = vmatprep.subr.bf16.mxu0 0
        %1505 = vmatpush1.bf16.msra.mxu0 0
        %1506 = vmatprep.subr.bf16.mxu0 0
        %1507 = vmatpush1.bf16.msra.mxu0 0
        %1508 = vmatprep.subr.bf16.mxu0 0
        %1509 = vmatpush1.bf16.msra.mxu0 0
        %1510 = vmatprep.subr.bf16.mxu0 0
        %1511 = vmatpush1.bf16.msra.mxu0 0
        %1512 = vmatprep.subr.bf16.mxu0 0
        %1513 = vmatpush1.bf16.msra.mxu0 0
        %1514 = vmatprep.subr.bf16.mxu0 0
        %1515 = vmatpush1.bf16.msra.mxu0 0
        %1516 = vmatprep.subr.bf16.mxu0 0
        %1517 = vmatpush1.bf16.msra.mxu0 0
        %1518 = vmatprep.subr.bf16.mxu0 0
        %1519 = vmatpush1.bf16.msra.mxu0 0
        %1520 = vmatprep.mubr.bf16.mxu0 0
        %1521 = vmatmul.mubr.bf16.gmra.mrb[0].mxu0 %v1379
        %v1522 = vpop.f32.mrb[0].mxu0
        %v1523 = vadd.f32 %v1401, %v1522
        %v1524 = vpop.f32.mrb[0].mxu0
        %v1525 = vadd.f32 %v1405, %v1524
        %v1526 = vpop.f32.mrb[0].mxu0
        %v1527 = vpop.f32.mrb[0].mxu0
        %1528 = vdwg.mxu0
        %v1529 = vmul.f32 %v1523, %v1523
        %v1530 = vmul.f32 %v1525, %v1525
        %v1531 = vmul.f32 %v1523, %v1529
        %v1532 = vmul.f32 %v1525, %v1530
        %v1533 = vmul.f32 %v1531, 0.044715
        %v1534 = vmul.f32 %v1532, 0.044715
        %v1535 = vadd.f32 %v1523, %v1533
        %v1536 = vadd.f32 %v1525, %v1534
        %v1537 = vmul.f32 %v1535, 0.7978846
        %v1538 = vmul.f32 %v1536, 0.7978846
        %v1539 = vtanh.pop %v1537
        %v1540 = vtanh.pop %v1538
        %v1541 = vadd.f32 %v1539, 1.0
        %v1542 = vadd.f32 %v1540, 1.0
        %v1543 = vmul.f32 %v1541, 0.5
        %v1544 = vmul.f32 %v1542, 0.5
        %v1545 = vmul.f32 %v1523, %v1543
        %v1546 = vmul.f32 %v1525, %v1544
        %v1547 = vpack.c.bf16 %v1545, %v1545
        %v1548 = vpack.c.bf16 %v1546, %v1546
        %v1549 = vld [vmem:[#allocation4] sm:$0xf]
        %v1550 = vld [vmem:[#allocation4 + $0x4] sm:$0xf]
        %v1551 = vld [vmem:[#allocation4 + $0x8] sm:$0xf]
        %v1552 = vld [vmem:[#allocation4 + $0xc] sm:$0xf]
        %v1553 = vld [vmem:[#allocation4 + $0x10] sm:$0xf]
        %v1554 = vld [vmem:[#allocation4 + $0x14] sm:$0xf]
        %v1555 = vld [vmem:[#allocation4 + $0x18] sm:$0xf]
        %v1556 = vld [vmem:[#allocation4 + $0x1c] sm:$0xf]
        %v1557 = vld [vmem:[#allocation4 + $0x20] sm:$0xf]
        %v1558 = vld [vmem:[#allocation4 + $0x24] sm:$0xf]
        %v1559 = vld [vmem:[#allocation4 + $0x28] sm:$0xf]
        %v1560 = vld [vmem:[#allocation4 + $0x2c] sm:$0xf]
        %v1561 = vld [vmem:[#allocation4 + $0x30] sm:$0xf]
        %v1562 = vld [vmem:[#allocation4 + $0x34] sm:$0xf]
        %v1563 = vld [vmem:[#allocation4 + $0x38] sm:$0xf]
        %v1564 = vld [vmem:[#allocation4 + $0x3c] sm:$0xf]
        %v1565 = vld [vmem:[#allocation4 + $0x40] sm:$0xf]
        %v1566 = vld [vmem:[#allocation4 + $0x44] sm:$0xf]
        %v1567 = vld [vmem:[#allocation4 + $0x48] sm:$0xf]
        %v1568 = vld [vmem:[#allocation4 + $0x4c] sm:$0xf]
        %v1569 = vld [vmem:[#allocation4 + $0x50] sm:$0xf]
        %v1570 = vld [vmem:[#allocation4 + $0x54] sm:$0xf]
        %v1571 = vld [vmem:[#allocation4 + $0x58] sm:$0xf]
        %v1572 = vld [vmem:[#allocation4 + $0x5c] sm:$0xf]
        %v1573 = vld [vmem:[#allocation4 + $0x60] sm:$0xf]
        %v1574 = vld [vmem:[#allocation4 + $0x64] sm:$0xf]
        %v1575 = vld [vmem:[#allocation4 + $0x68] sm:$0xf]
        %v1576 = vld [vmem:[#allocation4 + $0x6c] sm:$0xf]
        %v1577 = vld [vmem:[#allocation4 + $0x70] sm:$0xf]
        %v1578 = vld [vmem:[#allocation4 + $0x74] sm:$0xf]
        %v1579 = vld [vmem:[#allocation4 + $0x78] sm:$0xf]
        %v1580 = vld [vmem:[#allocation4 + $0x7c] sm:$0xf]
        %v1581 = vld [vmem:[%s11] sm:$0x1]
        %v1583 = vlaneseq
        %v1584 = vshrl.u32 %v1583, 7
        %v1585 = vsub.s32 0, %v1584
        %v1586 = vrot.slane %v1581, %v1585
        %v1620 = vunpack.c.l.b16 %v1549
        %v1621 = vunpack.c.l.b16 %v1550
        %v1622 = vunpack.c.l.b16 %v1551
        %v1623 = vunpack.c.l.b16 %v1552
        %v1624 = vunpack.c.l.b16 %v1553
        %v1625 = vunpack.c.l.b16 %v1554
        %v1626 = vunpack.c.l.b16 %v1555
        %v1627 = vunpack.c.l.b16 %v1556
        %v1628 = vunpack.c.l.b16 %v1557
        %v1629 = vunpack.c.l.b16 %v1558
        %v1630 = vunpack.c.l.b16 %v1559
        %v1631 = vunpack.c.l.b16 %v1560
        %v1632 = vunpack.c.l.b16 %v1561
        %v1633 = vunpack.c.l.b16 %v1562
        %v1634 = vunpack.c.l.b16 %v1563
        %v1635 = vunpack.c.l.b16 %v1564
        %v1636 = vunpack.c.l.b16 %v1565
        %v1637 = vunpack.c.l.b16 %v1566
        %v1638 = vunpack.c.l.b16 %v1567
        %v1639 = vunpack.c.l.b16 %v1568
        %v1640 = vunpack.c.l.b16 %v1569
        %v1641 = vunpack.c.l.b16 %v1570
        %v1642 = vunpack.c.l.b16 %v1571
        %v1643 = vunpack.c.l.b16 %v1572
        %v1644 = vunpack.c.l.b16 %v1573
        %v1645 = vunpack.c.l.b16 %v1574
        %v1646 = vunpack.c.l.b16 %v1575
        %v1647 = vunpack.c.l.b16 %v1576
        %v1648 = vunpack.c.l.b16 %v1577
        %v1649 = vunpack.c.l.b16 %v1578
        %v1650 = vunpack.c.l.b16 %v1579
        %v1651 = vunpack.c.l.b16 %v1580
        %v1652 = vpack.c.b16 %v1621, %v1620
        %v1653 = vpack.c.b16 %v1623, %v1622
        %v1654 = vpack.c.b16 %v1625, %v1624
        %v1655 = vpack.c.b16 %v1627, %v1626
        %v1656 = vpack.c.b16 %v1629, %v1628
        %v1657 = vpack.c.b16 %v1631, %v1630
        %v1658 = vpack.c.b16 %v1633, %v1632
        %v1659 = vpack.c.b16 %v1635, %v1634
        %v1660 = vpack.c.b16 %v1637, %v1636
        %v1661 = vpack.c.b16 %v1639, %v1638
        %v1662 = vpack.c.b16 %v1641, %v1640
        %v1663 = vpack.c.b16 %v1643, %v1642
        %v1664 = vpack.c.b16 %v1645, %v1644
        %v1665 = vpack.c.b16 %v1647, %v1646
        %v1666 = vpack.c.b16 %v1649, %v1648
        %v1667 = vpack.c.b16 %v1651, %v1650
        %1684 = vmatprep.subr.bf16.mxu0 0
        %1685 = vmatpush1.bf16.msra.mxu0 %v1652
        %1686 = vmatprep.subr.bf16.mxu0 0
        %1687 = vmatpush1.bf16.msra.mxu0 %v1653
        %1688 = vmatprep.subr.bf16.mxu0 0
        %1689 = vmatpush1.bf16.msra.mxu0 %v1654
        %1690 = vmatprep.subr.bf16.mxu0 0
        %1691 = vmatpush1.bf16.msra.mxu0 %v1655
        %1692 = vmatprep.subr.bf16.mxu0 0
        %1693 = vmatpush1.bf16.msra.mxu0 %v1656
        %1694 = vmatprep.subr.bf16.mxu0 0
        %1695 = vmatpush1.bf16.msra.mxu0 %v1657
        %1696 = vmatprep.subr.bf16.mxu0 0
        %1697 = vmatpush1.bf16.msra.mxu0 %v1658
        %1698 = vmatprep.subr.bf16.mxu0 0
        %1699 = vmatpush1.bf16.msra.mxu0 %v1659
        %1700 = vmatprep.subr.bf16.mxu0 0
        %1701 = vmatpush1.bf16.msra.mxu0 %v1660
        %1702 = vmatprep.subr.bf16.mxu0 0
        %1703 = vmatpush1.bf16.msra.mxu0 %v1661
        %1704 = vmatprep.subr.bf16.mxu0 0
        %1705 = vmatpush1.bf16.msra.mxu0 %v1662
        %1706 = vmatprep.subr.bf16.mxu0 0
        %1707 = vmatpush1.bf16.msra.mxu0 %v1663
        %1708 = vmatprep.subr.bf16.mxu0 0
        %1709 = vmatpush1.bf16.msra.mxu0 %v1664
        %1710 = vmatprep.subr.bf16.mxu0 0
        %1711 = vmatpush1.bf16.msra.mxu0 %v1665
        %1712 = vmatprep.subr.bf16.mxu0 0
        %1713 = vmatpush1.bf16.msra.mxu0 %v1666
        %1714 = vmatprep.subr.bf16.mxu0 0
        %1715 = vmatpush1.bf16.msra.mxu0 %v1667
        %1716 = vmatprep.mubr.bf16.mxu0 %v1548
        %1717 = vmatmul.mubr.bf16.gmra.mrb[0].mxu0 %v1547
        %v1718 = vpop.f32.mrb[0].mxu0
        %v1719 = vadd.f32 %v1586, %v1718
        %v1720 = vpop.f32.mrb[0].mxu0
        %v1721 = vpop.f32.mrb[0].mxu0
        %v1722 = vpop.f32.mrb[0].mxu0
        %1723 = vdwg.mxu0
        %v1724 = vadd.f32 %v1378, %v1719
        %v1725 = vld [vmem:[%s12] sm:$0x1]
        %v1726 = vld [vmem:[%s13] sm:$0x1]
        %1727 = vadd.xlane.f32.xlu0 %v1724
        %v1728 = vpop.xlane.xlu0 %1727
        %v1729 = vmul.f32 %v1728, %v1355
        %v1730 = vsub.f32 %v1724, %v1729
        %v1731 = vmul.f32 %v1730, %v1730
        %1732 = vadd.xlane.f32.xlu0 %v1731
        %v1733 = vpop.xlane.xlu0 %1732
        %v1734 = vmul.f32 %v1733, %v1355
        %v1735 = vadd.f32 %v1734, 1e-12
        %v1736 = vrsqrt.pop %v1735
        %v1737 = vmul.f32 %v1730, %v1736
        %v1739 = vlaneseq
        %v1740 = vshrl.u32 %v1739, 7
        %v1741 = vsub.s32 0, %v1740
        %v1742 = vrot.slane %v1725, %v1741
        %v1744 = vmul.f32 %v1737, %v1742
        %v1746 = vlaneseq
        %v1747 = vshrl.u32 %v1746, 7
        %v1748 = vsub.s32 0, %v1747
        %v1749 = vrot.slane %v1726, %v1748
        %v1751 = vadd.f32 %v1744, %v1749
        %v1752 = vpack.c.bf16 %v1751, %v1751
        %1753 = vst [vmem:[%s506] sm:$0xf] %v1752
        %p1754 = scmp.lt.s32.totalorder %s27, 1
        %s1755 = scalar_select %p1754, %s27, 1
        %s1756 = smul.addr %s1755, 4
        %s1757 = scalar_lea.vmem %s14, %s1756
        // Predicated region
        $region85: #{text_embedder_forward.4} parent=75 // pred_check
          %p1758 = pneg %p349
        $region86: #{text_embedder_forward.4} parent=75 // pred_check_branch
          %1760 = sbr.rel (%p1758) target = $region88
        $region87: #{text_embedder_forward.4} parent=75 // pred_region
          _
        $region88: #{text_embedder_forward.4} parent=75 // pred_fallthru
          _
      $region76: #{text_embedder_forward.4} parent=5 // pred_fallthru
        _
      %p1761 = scmp.le.s32.totalorder 2, %s22
      // Predicated region
      $region89: #{text_embedder_forward.4} parent=5 // pred_check
        %p1762 = pneg %p1761
      $region90: #{text_embedder_forward.4} parent=5 // pred_check_branch
        %1764 = sbr.rel (%p1762) target = $region92
      $region91: #{text_embedder_forward.4} parent=5 // pred_region
        %s1765 = ssub.s32 %s22, 2
        // Predicated region
        $region93: #{text_embedder_forward.4} parent=91 // pred_check
          %p1766 = pneg %p355
        $region94: #{text_embedder_forward.4} parent=91 // pred_check_branch
          %1768 = sbr.rel (%p1766) target = $region96
        $region95: #{text_embedder_forward.4} parent=91 // pred_region
          %p1769 = scmp.lt.s32.totalorder %s28, 1
          %s1770 = scalar_select %p1769, %s28, 1
          %s1771 = smul.addr %s1770, 4
          %s1772 = scalar_lea.vmem %s14, %s1771
        $region96: #{text_embedder_forward.4} parent=91 // pred_fallthru
          _
      $region92: #{text_embedder_forward.4} parent=5 // pred_fallthru
        _
    $region6: #{text_embedder_forward.4} parent=1 // loop_footer
      %s26 = sadd.s32 1, %s22
    $region7: #{text_embedder_forward.4} parent=1 // loop_footer_branch
      %21 = sbr.rel target = $region3
    $region8: #{text_embedder_forward.4} parent=1 // loop_exit
      _
    %1773 = vsyncpa [#allocation3], 1
    %s1774 = scalar_lea.sflag [#allocation3], 1
    %1775 = vsyncpa %s1774, 1
    %1776 = vsyncpa [#allocation5], 1

</llo_original>
